<compile_context>
chip_gen: v5e
topology: v5e:2x2
jax: 0.10.0
libtpu: 0.0.40
codegen_flags: <defaults>
</compile_context>

<pallas_src>
import functools

import numpy as np
import jax
import jax.numpy as jnp
from jax.experimental import pallas as pl
from jax.experimental.pallas import tpu as pltpu

EPS = 1e-5
KSIZE = 4
NPAD = 128                       # lane-dense padded output-channel width


# ----------------------------- Pallas kernels ------------------------------

def _phase_mm_bn_relu_kernel(patches_ref, w_ref, gamma_ref, beta_ref, out_ref):
    """patches: (P, M, K) bf16, w: (P, K, 128) bf16, gamma/beta: (1, 128) f32.

    For each phase p: acc_p = patches[p] @ w[p] (f32).  BatchNorm statistics
    are taken over all P*M rows (== all B*Ho*Wo output positions) per channel
    using the single-pass sum / sum-of-squares formulation, then scale/shift +
    ReLU are applied in place.  out: (P, M, 128) f32.
    """
    P, M, _ = patches_ref.shape
    inv_n = 1.0 / float(P * M)
    s = jnp.zeros((1, NPAD), jnp.float32)
    ss = jnp.zeros((1, NPAD), jnp.float32)
    for p in range(P):                                   # static unroll, tiny P
        acc = jnp.dot(patches_ref[p], w_ref[p],
                      preferred_element_type=jnp.float32)
        out_ref[p] = acc                                 # stash raw matmul
        s = s + jnp.sum(acc, axis=0, keepdims=True)
        ss = ss + jnp.sum(acc * acc, axis=0, keepdims=True)
    mean = s * inv_n
    var = jnp.maximum(ss * inv_n - mean * mean, 0.0)     # guard cancellation
    scale = gamma_ref[...] * jax.lax.rsqrt(var + EPS)
    shift = beta_ref[...] - mean * scale
    for p in range(P):
        out_ref[p] = jnp.maximum(out_ref[p] * scale + shift, 0.0)


def _phase_mm_act_kernel(patches_ref, w_ref, out_ref, *, normalize):
    """One phase per grid step: out = tanh/sigmoid(patches @ w)."""
    acc = jnp.dot(patches_ref[0], w_ref[0], preferred_element_type=jnp.float32)
    out_ref[0] = jnp.tanh(acc) if normalize else jax.nn.sigmoid(acc)


def convt_bn_relu(patches, w_ph, gamma, beta):
    P, M, K = patches.shape
    return pl.pallas_call(
        _phase_mm_bn_relu_kernel,
        out_shape=jax.ShapeDtypeStruct((P, M, NPAD), jnp.float32),
        grid=(1,),
        in_specs=[pl.BlockSpec((P, M, K), lambda i: (0, 0, 0)),
                  pl.BlockSpec((P, K, NPAD), lambda i: (0, 0, 0)),
                  pl.BlockSpec((1, NPAD), lambda i: (0, 0)),
                  pl.BlockSpec((1, NPAD), lambda i: (0, 0))],
        out_specs=pl.BlockSpec((P, M, NPAD), lambda i: (0, 0, 0)),
        compiler_params=pltpu.CompilerParams(
            dimension_semantics=("arbitrary",)),
    )(patches, w_ph, gamma, beta)


def convt_act(patches, w_ph, normalize):
    P, M, K = patches.shape
    return pl.pallas_call(
        functools.partial(_phase_mm_act_kernel, normalize=normalize),
        out_shape=jax.ShapeDtypeStruct((P, M, NPAD), jnp.float32),
        grid=(P,),
        in_specs=[pl.BlockSpec((1, M, K), lambda p: (p, 0, 0)),
                  pl.BlockSpec((1, K, NPAD), lambda p: (p, 0, 0))],
        out_specs=pl.BlockSpec((1, M, NPAD), lambda p: (p, 0, 0)),
        compiler_params=pltpu.CompilerParams(
            dimension_semantics=("parallel",)),          # 2 TCs on v7x
    )(patches, w_ph)


# --------------------- phase-decomposition glue (XLA) -----------------------
# ConvTranspose2d(k=4, s=2, p=1): output pixel (2m+py, 2n+px) is a dense 2x2
# correlation of the 1-padded input at rows {m+py, m+py+1}, cols {n+px, n+px+1}
# with kernel taps (ky, kx) = (3+py-2a, 3+px-2b).

def phase_patches(h, cin):
    """h: (B, Hi, Wi, >=cin) NHWC -> dense per-phase patches (4, B*Hi*Wi, 4*cin)."""
    B, Hi, Wi = h.shape[0], h.shape[1], h.shape[2]
    hp = jnp.pad(h[..., :cin], ((0, 0), (1, 1), (1, 1), (0, 0)))
    phases = []
    for py in (0, 1):
        for px in (0, 1):
            taps = [hp[:, a:a + Hi, b:b + Wi, :]
                    for a in (py, py + 1) for b in (px, px + 1)]
            phases.append(
                jnp.concatenate(taps, axis=-1).reshape(B * Hi * Wi, 4 * cin))
    return jnp.stack(phases, axis=0)


def interleave_phases(out, B, Hi, Wi):
    """(4, B*Hi*Wi, C) phase-blocked -> (B, 2*Hi, 2*Wi, C) NHWC."""
    C = out.shape[-1]
    h = out.reshape(2, 2, B, Hi, Wi, C)          # (py, px, b, m, n, c)
    h = jnp.transpose(h, (2, 3, 0, 4, 1, 5))     # (b, m, py, n, px, c)
    return h.reshape(B, 2 * Hi, 2 * Wi, C)


def _pad_cols(a, n):
    return jnp.pad(a, ((0, 0), (0, n - a.shape[1])))


def layer0_weight_blocks(w):
    """(nz, Cout, 4, 4) -> (16, nz, 128) bf16; phase s=i*4+j uses tap (i, j)."""
    blocks = [_pad_cols(w[:, :, i, j], NPAD)
              for i in range(KSIZE) for j in range(KSIZE)]
    return jnp.stack(blocks, axis=0).astype(jnp.bfloat16)


def phase_weight_blocks(w):
    """(Cin, Cout, 4, 4) -> (4, 4*Cin, 128) bf16 for the s=2, p=1 layers."""
    blocks = []
    for py in (0, 1):
        for px in (0, 1):
            taps = [w[:, :, 3 + py - 2 * a, 3 + px - 2 * b]
                    for a in (py, py + 1) for b in (px, px + 1)]
            blocks.append(_pad_cols(jnp.concatenate(taps, axis=0), NPAD))
    return jnp.stack(blocks, axis=0).astype(jnp.bfloat16)


# ------------------------------ forward pass --------------------------------

def dc_generator_forward(x, params, normalize=True):
    """x: (B, nz) or (B, nz, 1, 1).  Returns NCHW (B, 3, 32, 32), float32."""
    B = x.shape[0]
    nz = params["w_ph"][0].shape[1]
    xb = x.reshape(B, -1).astype(jnp.bfloat16)                  # (B, nz)

    # Layer 0: ConvTranspose2d(nz, ngf*8, 4, 1, 0) on 1x1 input -> 16 "phases"
    # (one per output pixel), all sharing the latent as their patch row.
    p0 = jnp.broadcast_to(xb[None, :, :], (KSIZE * KSIZE, B, nz))
    o0 = convt_bn_relu(p0, params["w_ph"][0],
                       params["gamma"][0], params["beta"][0])   # (16, B, 128)
    h = o0.reshape(KSIZE, KSIZE, B, NPAD).transpose(2, 0, 1, 3)  # (B,4,4,128)

    # Layers 1, 2: ConvTranspose2d(k=4, s=2, p=1) + BN + ReLU (phase-fused).
    for li in (1, 2):
        cin = params["w_ph"][li].shape[1] // 4
        Hi, Wi = h.shape[1], h.shape[2]
        pats = phase_patches(h, cin).astype(jnp.bfloat16)
        o = convt_bn_relu(pats, params["w_ph"][li],
                          params["gamma"][li], params["beta"][li])
        h = interleave_phases(o, B, Hi, Wi)

    # Layer 3: ConvTranspose2d(ngf*2, 3, 4, 2, 1) + tanh / sigmoid.
    cin = params["w_ph"][3].shape[1] // 4
    Hi, Wi = h.shape[1], h.shape[2]
    pats = phase_patches(h, cin).astype(jnp.bfloat16)
    o = convt_act(pats, params["w_ph"][3], normalize)
    img = interleave_phases(o, B, Hi, Wi)[..., :3]              # (B,32,32,3)
    return jnp.transpose(img, (0, 3, 1, 2))                     # NCHW


def init_params(key, nz, ngf):
    """Deterministic synthetic DCGAN-style parameters."""
    chans = [nz, ngf * 8, ngf * 4, ngf * 2, 3]
    params = {"w": [], "w_ph": [], "gamma": [], "beta": []}
    for li in range(4):
        cin, cout = chans[li], chans[li + 1]
        key, kw, kg, kb = jax.random.split(key, 4)
        w = 0.02 * jax.random.normal(kw, (cin, cout, KSIZE, KSIZE), jnp.float32)
        params["w"].append(w)
        params["w_ph"].append(layer0_weight_blocks(w) if li == 0
                              else phase_weight_blocks(w))
        if li < 3:
            gamma = 1.0 + 0.1 * jax.random.normal(kg, (cout,), jnp.float32)
            beta = 0.1 * jax.random.normal(kb, (cout,), jnp.float32)
            params["gamma"].append(
                jnp.pad(gamma, (0, NPAD - cout)).reshape(1, NPAD))
            params["beta"].append(
                jnp.pad(beta, (0, NPAD - cout)).reshape(1, NPAD))
    return params


# --------------------------- pure-JAX reference -----------------------------

_LAYER_STRIDE_PAD = ((1, 0), (2, 1), (2, 1), (2, 1))


def _ref_conv_transpose_nchw(x, w, s, p):
    B, cin, H, W = x.shape
    cout, k = w.shape[1], w.shape[2]
    Hf, Wf = (H - 1) * s + k, (W - 1) * s + k
    out = jnp.zeros((B, cout, Hf, Wf), jnp.float32)
    for ih in range(H):
        for iw in range(W):
            contrib = jnp.einsum("bc,cokl->bokl", x[:, :, ih, iw], w)
            out = out.at[:, :, ih * s:ih * s + k, iw * s:iw * s + k].add(contrib)
    if p > 0:
        out = out[:, :, p:-p, p:-p]
    return out


def ref_forward(x, params, normalize=True):
    h = x.reshape(x.shape[0], x.shape[1], 1, 1)
    for li in range(4):
        s, p = _LAYER_STRIDE_PAD[li]
        h = _ref_conv_transpose_nchw(h, params["w"][li], s, p)
        if li < 3:
            c = h.shape[1]
            mean = h.mean(axis=(0, 2, 3), keepdims=True)
            var = jnp.square(h - mean).mean(axis=(0, 2, 3), keepdims=True)
            g = params["gamma"][li][0, :c].reshape(1, -1, 1, 1)
            b = params["beta"][li][0, :c].reshape(1, -1, 1, 1)
            h = (h - mean) * jax.lax.rsqrt(var + EPS) * g + b
            h = jnp.maximum(h, 0.0)
    return jnp.tanh(h) if normalize else jax.nn.sigmoid(h)


# --------------------------------- main --------------------------------------

if __name__ == "__main__":
    B, NZ, NGF = 2, 16, 8                     # small shapes; output (2, 3, 32, 32)
    key = jax.random.PRNGKey(0)
    kparam, kx = jax.random.split(key)
    params = init_params(kparam, NZ, NGF)
    x = jax.random.normal(kx, (B, NZ, 1, 1), jnp.float32)

    fwd = jax.jit(functools.partial(dc_generator_forward, normalize=True))
    out = jax.block_until_ready(fwd(x, params))

    assert out.shape == (B, 3, 32, 32), out.shape
    assert out.dtype == jnp.float32

    # Validate against a pure-f32 scatter-based ConvTranspose2d reference.
    # The kernels run their matmuls in bf16 on the MXU (BN/activations in f32),
    # so tolerances are set for bf16-vs-f32 comparison.
    ref = jax.block_until_ready(
        jax.jit(functools.partial(ref_forward, normalize=True))(x, params))
    np.testing.assert_allclose(np.asarray(out), np.asarray(ref),
                               rtol=5e-2, atol=2e-2)

    print("KERNEL_OK")
</pallas_src>

<mosaic_0001>
module attributes {stable_mosaic.version = 11 : i64} {
  func.func @_phase_mm_bn_relu_kernel(%arg0: i32, %arg1: memref<16x2x16xbf16, #tpu.memory_space<vmem>>, %arg2: memref<16x16x128xbf16, #tpu.memory_space<vmem>>, %arg3: memref<1x128xf32, #tpu.memory_space<vmem>>, %arg4: memref<1x128xf32, #tpu.memory_space<vmem>>, %arg5: memref<16x2x128xf32, #tpu.memory_space<vmem>>) attributes {dimension_semantics = [#tpu.dimension_semantics<arbitrary>], iteration_bounds = array<i64: 1>, scalar_prefetch = 0 : i64, scratch_operands = 0 : i64, tpu.core_type = #tpu.core_type<tc>, window_params = [{pipeline_mode = #tpu.pipeline_mode<synchronous>, transform_indices = @transform_0, window_bounds = array<i64: 16, 2, 16>}, {pipeline_mode = #tpu.pipeline_mode<synchronous>, transform_indices = @transform_1, window_bounds = array<i64: 16, 16, 128>}, {pipeline_mode = #tpu.pipeline_mode<synchronous>, transform_indices = @transform_2, window_bounds = array<i64: 1, 128>}, {pipeline_mode = #tpu.pipeline_mode<synchronous>, transform_indices = @transform_3, window_bounds = array<i64: 1, 128>}, {pipeline_mode = #tpu.pipeline_mode<synchronous>, transform_indices = @transform_4, window_bounds = array<i64: 16, 2, 128>}]} {
    %cst = arith.constant 0.000000e+00 : f32
    %0 = vector.broadcast %cst : f32 to vector<1x128xf32>
    %cst_0 = arith.constant 0.000000e+00 : f32
    %1 = vector.broadcast %cst_0 : f32 to vector<1x128xf32>
    %c0 = arith.constant 0 : index
    %c0_1 = arith.constant 0 : index
    %c0_2 = arith.constant 0 : index
    %2 = vector.load %arg1[%c0, %c0_1, %c0_2] : memref<16x2x16xbf16, #tpu.memory_space<vmem>>, vector<1x2x16xbf16>
    %3 = vector.shape_cast %2 : vector<1x2x16xbf16> to vector<2x16xbf16>
    %c0_3 = arith.constant 0 : index
    %c0_4 = arith.constant 0 : index
    %c0_5 = arith.constant 0 : index
    %4 = vector.load %arg2[%c0_3, %c0_4, %c0_5] : memref<16x16x128xbf16, #tpu.memory_space<vmem>>, vector<1x16x128xbf16>
    %5 = vector.shape_cast %4 : vector<1x16x128xbf16> to vector<16x128xbf16>
    %cst_6 = arith.constant dense<0.000000e+00> : vector<2x128xf32>
    %6 = tpu.matmul %3, %5, %cst_6 {dimension_numbers = #tpu.dot_dimension_numbers<[1], [0], [0], [1], [0, 0, 1, 1], [], []>} : vector<2x16xbf16>, vector<16x128xbf16>, vector<2x128xf32> -> vector<2x128xf32>
    %c0_7 = arith.constant 0 : index
    %c0_8 = arith.constant 0 : index
    %c0_9 = arith.constant 0 : index
    %7 = vector.load %arg5[%c0_7, %c0_8, %c0_9] : memref<16x2x128xf32, #tpu.memory_space<vmem>>, vector<1x2x128xf32>
    %8 = vector.shape_cast %7 : vector<1x2x128xf32> to vector<2x128xf32>
    %9 = vector.shape_cast %6 : vector<2x128xf32> to vector<1x2x128xf32>
    tpu.vector_store %arg5[%c0_7, %c0_8, %c0_9], %9 {strides = array<i32>} : memref<16x2x128xf32, #tpu.memory_space<vmem>>, vector<1x2x128xf32>,
    %cst_10 = arith.constant dense<0.000000e+00> : vector<128xf32>
    %10 = vector.multi_reduction <add>, %6, %cst_10 [0] : vector<2x128xf32> to vector<128xf32>
    %11 = vector.shape_cast %10 : vector<128xf32> to vector<1x128xf32>
    %12 = arith.addf %0, %11 : vector<1x128xf32>
    %13 = arith.mulf %6, %6 : vector<2x128xf32>
    %cst_11 = arith.constant dense<0.000000e+00> : vector<128xf32>
    %14 = vector.multi_reduction <add>, %13, %cst_11 [0] : vector<2x128xf32> to vector<128xf32>
    %15 = vector.shape_cast %14 : vector<128xf32> to vector<1x128xf32>
    %16 = arith.addf %1, %15 : vector<1x128xf32>
    %c1 = arith.constant 1 : index
    %c0_12 = arith.constant 0 : index
    %c0_13 = arith.constant 0 : index
    %17 = vector.load %arg1[%c1, %c0_12, %c0_13] : memref<16x2x16xbf16, #tpu.memory_space<vmem>>, vector<1x2x16xbf16>
    %18 = vector.shape_cast %17 : vector<1x2x16xbf16> to vector<2x16xbf16>
    %c1_14 = arith.constant 1 : index
    %c0_15 = arith.constant 0 : index
    %c0_16 = arith.constant 0 : index
    %19 = vector.load %arg2[%c1_14, %c0_15, %c0_16] : memref<16x16x128xbf16, #tpu.memory_space<vmem>>, vector<1x16x128xbf16>
    %20 = vector.shape_cast %19 : vector<1x16x128xbf16> to vector<16x128xbf16>
    %cst_17 = arith.constant dense<0.000000e+00> : vector<2x128xf32>
    %21 = tpu.matmul %18, %20, %cst_17 {dimension_numbers = #tpu.dot_dimension_numbers<[1], [0], [0], [1], [0, 0, 1, 1], [], []>} : vector<2x16xbf16>, vector<16x128xbf16>, vector<2x128xf32> -> vector<2x128xf32>
    %c1_18 = arith.constant 1 : index
    %c0_19 = arith.constant 0 : index
    %c0_20 = arith.constant 0 : index
    %22 = vector.load %arg5[%c1_18, %c0_19, %c0_20] : memref<16x2x128xf32, #tpu.memory_space<vmem>>, vector<1x2x128xf32>
    %23 = vector.shape_cast %22 : vector<1x2x128xf32> to vector<2x128xf32>
    %24 = vector.shape_cast %21 : vector<2x128xf32> to vector<1x2x128xf32>
    tpu.vector_store %arg5[%c1_18, %c0_19, %c0_20], %24 {strides = array<i32>} : memref<16x2x128xf32, #tpu.memory_space<vmem>>, vector<1x2x128xf32>,
    %cst_21 = arith.constant dense<0.000000e+00> : vector<128xf32>
    %25 = vector.multi_reduction <add>, %21, %cst_21 [0] : vector<2x128xf32> to vector<128xf32>
    %26 = vector.shape_cast %25 : vector<128xf32> to vector<1x128xf32>
    %27 = arith.addf %12, %26 : vector<1x128xf32>
    %28 = arith.mulf %21, %21 : vector<2x128xf32>
    %cst_22 = arith.constant dense<0.000000e+00> : vector<128xf32>
    %29 = vector.multi_reduction <add>, %28, %cst_22 [0] : vector<2x128xf32> to vector<128xf32>
    %30 = vector.shape_cast %29 : vector<128xf32> to vector<1x128xf32>
    %31 = arith.addf %16, %30 : vector<1x128xf32>
    %c2 = arith.constant 2 : index
    %c0_23 = arith.constant 0 : index
    %c0_24 = arith.constant 0 : index
    %32 = vector.load %arg1[%c2, %c0_23, %c0_24] : memref<16x2x16xbf16, #tpu.memory_space<vmem>>, vector<1x2x16xbf16>
    %33 = vector.shape_cast %32 : vector<1x2x16xbf16> to vector<2x16xbf16>
    %c2_25 = arith.constant 2 : index
    %c0_26 = arith.constant 0 : index
    %c0_27 = arith.constant 0 : index
    %34 = vector.load %arg2[%c2_25, %c0_26, %c0_27] : memref<16x16x128xbf16, #tpu.memory_space<vmem>>, vector<1x16x128xbf16>
    %35 = vector.shape_cast %34 : vector<1x16x128xbf16> to vector<16x128xbf16>
    %cst_28 = arith.constant dense<0.000000e+00> : vector<2x128xf32>
    %36 = tpu.matmul %33, %35, %cst_28 {dimension_numbers = #tpu.dot_dimension_numbers<[1], [0], [0], [1], [0, 0, 1, 1], [], []>} : vector<2x16xbf16>, vector<16x128xbf16>, vector<2x128xf32> -> vector<2x128xf32>
    %c2_29 = arith.constant 2 : index
    %c0_30 = arith.constant 0 : index
    %c0_31 = arith.constant 0 : index
    %37 = vector.load %arg5[%c2_29, %c0_30, %c0_31] : memref<16x2x128xf32, #tpu.memory_space<vmem>>, vector<1x2x128xf32>
    %38 = vector.shape_cast %37 : vector<1x2x128xf32> to vector<2x128xf32>
    %39 = vector.shape_cast %36 : vector<2x128xf32> to vector<1x2x128xf32>
    tpu.vector_store %arg5[%c2_29, %c0_30, %c0_31], %39 {strides = array<i32>} : memref<16x2x128xf32, #tpu.memory_space<vmem>>, vector<1x2x128xf32>,
    %cst_32 = arith.constant dense<0.000000e+00> : vector<128xf32>
    %40 = vector.multi_reduction <add>, %36, %cst_32 [0] : vector<2x128xf32> to vector<128xf32>
    %41 = vector.shape_cast %40 : vector<128xf32> to vector<1x128xf32>
    %42 = arith.addf %27, %41 : vector<1x128xf32>
    %43 = arith.mulf %36, %36 : vector<2x128xf32>
    %cst_33 = arith.constant dense<0.000000e+00> : vector<128xf32>
    %44 = vector.multi_reduction <add>, %43, %cst_33 [0] : vector<2x128xf32> to vector<128xf32>
    %45 = vector.shape_cast %44 : vector<128xf32> to vector<1x128xf32>
    %46 = arith.addf %31, %45 : vector<1x128xf32>
    %c3 = arith.constant 3 : index
    %c0_34 = arith.constant 0 : index
    %c0_35 = arith.constant 0 : index
    %47 = vector.load %arg1[%c3, %c0_34, %c0_35] : memref<16x2x16xbf16, #tpu.memory_space<vmem>>, vector<1x2x16xbf16>
    %48 = vector.shape_cast %47 : vector<1x2x16xbf16> to vector<2x16xbf16>
    %c3_36 = arith.constant 3 : index
    %c0_37 = arith.constant 0 : index
    %c0_38 = arith.constant 0 : index
    %49 = vector.load %arg2[%c3_36, %c0_37, %c0_38] : memref<16x16x128xbf16, #tpu.memory_space<vmem>>, vector<1x16x128xbf16>
    %50 = vector.shape_cast %49 : vector<1x16x128xbf16> to vector<16x128xbf16>
    %cst_39 = arith.constant dense<0.000000e+00> : vector<2x128xf32>
    %51 = tpu.matmul %48, %50, %cst_39 {dimension_numbers = #tpu.dot_dimension_numbers<[1], [0], [0], [1], [0, 0, 1, 1], [], []>} : vector<2x16xbf16>, vector<16x128xbf16>, vector<2x128xf32> -> vector<2x128xf32>
    %c3_40 = arith.constant 3 : index
    %c0_41 = arith.constant 0 : index
    %c0_42 = arith.constant 0 : index
    %52 = vector.load %arg5[%c3_40, %c0_41, %c0_42] : memref<16x2x128xf32, #tpu.memory_space<vmem>>, vector<1x2x128xf32>
    %53 = vector.shape_cast %52 : vector<1x2x128xf32> to vector<2x128xf32>
    %54 = vector.shape_cast %51 : vector<2x128xf32> to vector<1x2x128xf32>
    tpu.vector_store %arg5[%c3_40, %c0_41, %c0_42], %54 {strides = array<i32>} : memref<16x2x128xf32, #tpu.memory_space<vmem>>, vector<1x2x128xf32>,
    %cst_43 = arith.constant dense<0.000000e+00> : vector<128xf32>
    %55 = vector.multi_reduction <add>, %51, %cst_43 [0] : vector<2x128xf32> to vector<128xf32>
    %56 = vector.shape_cast %55 : vector<128xf32> to vector<1x128xf32>
    %57 = arith.addf %42, %56 : vector<1x128xf32>
    %58 = arith.mulf %51, %51 : vector<2x128xf32>
    %cst_44 = arith.constant dense<0.000000e+00> : vector<128xf32>
    %59 = vector.multi_reduction <add>, %58, %cst_44 [0] : vector<2x128xf32> to vector<128xf32>
    %60 = vector.shape_cast %59 : vector<128xf32> to vector<1x128xf32>
    %61 = arith.addf %46, %60 : vector<1x128xf32>
    %c4 = arith.constant 4 : index
    %c0_45 = arith.constant 0 : index
    %c0_46 = arith.constant 0 : index
    %62 = vector.load %arg1[%c4, %c0_45, %c0_46] : memref<16x2x16xbf16, #tpu.memory_space<vmem>>, vector<1x2x16xbf16>
    %63 = vector.shape_cast %62 : vector<1x2x16xbf16> to vector<2x16xbf16>
    %c4_47 = arith.constant 4 : index
    %c0_48 = arith.constant 0 : index
    %c0_49 = arith.constant 0 : index
    %64 = vector.load %arg2[%c4_47, %c0_48, %c0_49] : memref<16x16x128xbf16, #tpu.memory_space<vmem>>, vector<1x16x128xbf16>
    %65 = vector.shape_cast %64 : vector<1x16x128xbf16> to vector<16x128xbf16>
    %cst_50 = arith.constant dense<0.000000e+00> : vector<2x128xf32>
    %66 = tpu.matmul %63, %65, %cst_50 {dimension_numbers = #tpu.dot_dimension_numbers<[1], [0], [0], [1], [0, 0, 1, 1], [], []>} : vector<2x16xbf16>, vector<16x128xbf16>, vector<2x128xf32> -> vector<2x128xf32>
    %c4_51 = arith.constant 4 : index
    %c0_52 = arith.constant 0 : index
    %c0_53 = arith.constant 0 : index
    %67 = vector.load %arg5[%c4_51, %c0_52, %c0_53] : memref<16x2x128xf32, #tpu.memory_space<vmem>>, vector<1x2x128xf32>
    %68 = vector.shape_cast %67 : vector<1x2x128xf32> to vector<2x128xf32>
    %69 = vector.shape_cast %66 : vector<2x128xf32> to vector<1x2x128xf32>
    tpu.vector_store %arg5[%c4_51, %c0_52, %c0_53], %69 {strides = array<i32>} : memref<16x2x128xf32, #tpu.memory_space<vmem>>, vector<1x2x128xf32>,
    %cst_54 = arith.constant dense<0.000000e+00> : vector<128xf32>
    %70 = vector.multi_reduction <add>, %66, %cst_54 [0] : vector<2x128xf32> to vector<128xf32>
    %71 = vector.shape_cast %70 : vector<128xf32> to vector<1x128xf32>
    %72 = arith.addf %57, %71 : vector<1x128xf32>
    %73 = arith.mulf %66, %66 : vector<2x128xf32>
    %cst_55 = arith.constant dense<0.000000e+00> : vector<128xf32>
    %74 = vector.multi_reduction <add>, %73, %cst_55 [0] : vector<2x128xf32> to vector<128xf32>
    %75 = vector.shape_cast %74 : vector<128xf32> to vector<1x128xf32>
    %76 = arith.addf %61, %75 : vector<1x128xf32>
    %c5 = arith.constant 5 : index
    %c0_56 = arith.constant 0 : index
    %c0_57 = arith.constant 0 : index
    %77 = vector.load %arg1[%c5, %c0_56, %c0_57] : memref<16x2x16xbf16, #tpu.memory_space<vmem>>, vector<1x2x16xbf16>
    %78 = vector.shape_cast %77 : vector<1x2x16xbf16> to vector<2x16xbf16>
    %c5_58 = arith.constant 5 : index
    %c0_59 = arith.constant 0 : index
    %c0_60 = arith.constant 0 : index
    %79 = vector.load %arg2[%c5_58, %c0_59, %c0_60] : memref<16x16x128xbf16, #tpu.memory_space<vmem>>, vector<1x16x128xbf16>
    %80 = vector.shape_cast %79 : vector<1x16x128xbf16> to vector<16x128xbf16>
    %cst_61 = arith.constant dense<0.000000e+00> : vector<2x128xf32>
    %81 = tpu.matmul %78, %80, %cst_61 {dimension_numbers = #tpu.dot_dimension_numbers<[1], [0], [0], [1], [0, 0, 1, 1], [], []>} : vector<2x16xbf16>, vector<16x128xbf16>, vector<2x128xf32> -> vector<2x128xf32>
    %c5_62 = arith.constant 5 : index
    %c0_63 = arith.constant 0 : index
    %c0_64 = arith.constant 0 : index
    %82 = vector.load %arg5[%c5_62, %c0_63, %c0_64] : memref<16x2x128xf32, #tpu.memory_space<vmem>>, vector<1x2x128xf32>
    %83 = vector.shape_cast %82 : vector<1x2x128xf32> to vector<2x128xf32>
    %84 = vector.shape_cast %81 : vector<2x128xf32> to vector<1x2x128xf32>
    tpu.vector_store %arg5[%c5_62, %c0_63, %c0_64], %84 {strides = array<i32>} : memref<16x2x128xf32, #tpu.memory_space<vmem>>, vector<1x2x128xf32>,
    %cst_65 = arith.constant dense<0.000000e+00> : vector<128xf32>
    %85 = vector.multi_reduction <add>, %81, %cst_65 [0] : vector<2x128xf32> to vector<128xf32>
    %86 = vector.shape_cast %85 : vector<128xf32> to vector<1x128xf32>
    %87 = arith.addf %72, %86 : vector<1x128xf32>
    %88 = arith.mulf %81, %81 : vector<2x128xf32>
    %cst_66 = arith.constant dense<0.000000e+00> : vector<128xf32>
    %89 = vector.multi_reduction <add>, %88, %cst_66 [0] : vector<2x128xf32> to vector<128xf32>
    %90 = vector.shape_cast %89 : vector<128xf32> to vector<1x128xf32>
    %91 = arith.addf %76, %90 : vector<1x128xf32>
    %c6 = arith.constant 6 : index
    %c0_67 = arith.constant 0 : index
    %c0_68 = arith.constant 0 : index
    %92 = vector.load %arg1[%c6, %c0_67, %c0_68] : memref<16x2x16xbf16, #tpu.memory_space<vmem>>, vector<1x2x16xbf16>
    %93 = vector.shape_cast %92 : vector<1x2x16xbf16> to vector<2x16xbf16>
    %c6_69 = arith.constant 6 : index
    %c0_70 = arith.constant 0 : index
    %c0_71 = arith.constant 0 : index
    %94 = vector.load %arg2[%c6_69, %c0_70, %c0_71] : memref<16x16x128xbf16, #tpu.memory_space<vmem>>, vector<1x16x128xbf16>
    %95 = vector.shape_cast %94 : vector<1x16x128xbf16> to vector<16x128xbf16>
    %cst_72 = arith.constant dense<0.000000e+00> : vector<2x128xf32>
    %96 = tpu.matmul %93, %95, %cst_72 {dimension_numbers = #tpu.dot_dimension_numbers<[1], [0], [0], [1], [0, 0, 1, 1], [], []>} : vector<2x16xbf16>, vector<16x128xbf16>, vector<2x128xf32> -> vector<2x128xf32>
    %c6_73 = arith.constant 6 : index
    %c0_74 = arith.constant 0 : index
    %c0_75 = arith.constant 0 : index
    %97 = vector.load %arg5[%c6_73, %c0_74, %c0_75] : memref<16x2x128xf32, #tpu.memory_space<vmem>>, vector<1x2x128xf32>
    %98 = vector.shape_cast %97 : vector<1x2x128xf32> to vector<2x128xf32>
    %99 = vector.shape_cast %96 : vector<2x128xf32> to vector<1x2x128xf32>
    tpu.vector_store %arg5[%c6_73, %c0_74, %c0_75], %99 {strides = array<i32>} : memref<16x2x128xf32, #tpu.memory_space<vmem>>, vector<1x2x128xf32>,
    %cst_76 = arith.constant dense<0.000000e+00> : vector<128xf32>
    %100 = vector.multi_reduction <add>, %96, %cst_76 [0] : vector<2x128xf32> to vector<128xf32>
    %101 = vector.shape_cast %100 : vector<128xf32> to vector<1x128xf32>
    %102 = arith.addf %87, %101 : vector<1x128xf32>
    %103 = arith.mulf %96, %96 : vector<2x128xf32>
    %cst_77 = arith.constant dense<0.000000e+00> : vector<128xf32>
    %104 = vector.multi_reduction <add>, %103, %cst_77 [0] : vector<2x128xf32> to vector<128xf32>
    %105 = vector.shape_cast %104 : vector<128xf32> to vector<1x128xf32>
    %106 = arith.addf %91, %105 : vector<1x128xf32>
    %c7 = arith.constant 7 : index
    %c0_78 = arith.constant 0 : index
    %c0_79 = arith.constant 0 : index
    %107 = vector.load %arg1[%c7, %c0_78, %c0_79] : memref<16x2x16xbf16, #tpu.memory_space<vmem>>, vector<1x2x16xbf16>
    %108 = vector.shape_cast %107 : vector<1x2x16xbf16> to vector<2x16xbf16>
    %c7_80 = arith.constant 7 : index
    %c0_81 = arith.constant 0 : index
    %c0_82 = arith.constant 0 : index
    %109 = vector.load %arg2[%c7_80, %c0_81, %c0_82] : memref<16x16x128xbf16, #tpu.memory_space<vmem>>, vector<1x16x128xbf16>
    %110 = vector.shape_cast %109 : vector<1x16x128xbf16> to vector<16x128xbf16>
    %cst_83 = arith.constant dense<0.000000e+00> : vector<2x128xf32>
    %111 = tpu.matmul %108, %110, %cst_83 {dimension_numbers = #tpu.dot_dimension_numbers<[1], [0], [0], [1], [0, 0, 1, 1], [], []>} : vector<2x16xbf16>, vector<16x128xbf16>, vector<2x128xf32> -> vector<2x128xf32>
    %c7_84 = arith.constant 7 : index
    %c0_85 = arith.constant 0 : index
    %c0_86 = arith.constant 0 : index
    %112 = vector.load %arg5[%c7_84, %c0_85, %c0_86] : memref<16x2x128xf32, #tpu.memory_space<vmem>>, vector<1x2x128xf32>
    %113 = vector.shape_cast %112 : vector<1x2x128xf32> to vector<2x128xf32>
    %114 = vector.shape_cast %111 : vector<2x128xf32> to vector<1x2x128xf32>
    tpu.vector_store %arg5[%c7_84, %c0_85, %c0_86], %114 {strides = array<i32>} : memref<16x2x128xf32, #tpu.memory_space<vmem>>, vector<1x2x128xf32>,
    %cst_87 = arith.constant dense<0.000000e+00> : vector<128xf32>
    %115 = vector.multi_reduction <add>, %111, %cst_87 [0] : vector<2x128xf32> to vector<128xf32>
    %116 = vector.shape_cast %115 : vector<128xf32> to vector<1x128xf32>
    %117 = arith.addf %102, %116 : vector<1x128xf32>
    %118 = arith.mulf %111, %111 : vector<2x128xf32>
    %cst_88 = arith.constant dense<0.000000e+00> : vector<128xf32>
    %119 = vector.multi_reduction <add>, %118, %cst_88 [0] : vector<2x128xf32> to vector<128xf32>
    %120 = vector.shape_cast %119 : vector<128xf32> to vector<1x128xf32>
    %121 = arith.addf %106, %120 : vector<1x128xf32>
    %c8 = arith.constant 8 : index
    %c0_89 = arith.constant 0 : index
    %c0_90 = arith.constant 0 : index
    %122 = vector.load %arg1[%c8, %c0_89, %c0_90] : memref<16x2x16xbf16, #tpu.memory_space<vmem>>, vector<1x2x16xbf16>
    %123 = vector.shape_cast %122 : vector<1x2x16xbf16> to vector<2x16xbf16>
    %c8_91 = arith.constant 8 : index
    %c0_92 = arith.constant 0 : index
    %c0_93 = arith.constant 0 : index
    %124 = vector.load %arg2[%c8_91, %c0_92, %c0_93] : memref<16x16x128xbf16, #tpu.memory_space<vmem>>, vector<1x16x128xbf16>
    %125 = vector.shape_cast %124 : vector<1x16x128xbf16> to vector<16x128xbf16>
    %cst_94 = arith.constant dense<0.000000e+00> : vector<2x128xf32>
    %126 = tpu.matmul %123, %125, %cst_94 {dimension_numbers = #tpu.dot_dimension_numbers<[1], [0], [0], [1], [0, 0, 1, 1], [], []>} : vector<2x16xbf16>, vector<16x128xbf16>, vector<2x128xf32> -> vector<2x128xf32>
    %c8_95 = arith.constant 8 : index
    %c0_96 = arith.constant 0 : index
    %c0_97 = arith.constant 0 : index
    %127 = vector.load %arg5[%c8_95, %c0_96, %c0_97] : memref<16x2x128xf32, #tpu.memory_space<vmem>>, vector<1x2x128xf32>
    %128 = vector.shape_cast %127 : vector<1x2x128xf32> to vector<2x128xf32>
    %129 = vector.shape_cast %126 : vector<2x128xf32> to vector<1x2x128xf32>
    tpu.vector_store %arg5[%c8_95, %c0_96, %c0_97], %129 {strides = array<i32>} : memref<16x2x128xf32, #tpu.memory_space<vmem>>, vector<1x2x128xf32>,
    %cst_98 = arith.constant dense<0.000000e+00> : vector<128xf32>
    %130 = vector.multi_reduction <add>, %126, %cst_98 [0] : vector<2x128xf32> to vector<128xf32>
    %131 = vector.shape_cast %130 : vector<128xf32> to vector<1x128xf32>
    %132 = arith.addf %117, %131 : vector<1x128xf32>
    %133 = arith.mulf %126, %126 : vector<2x128xf32>
    %cst_99 = arith.constant dense<0.000000e+00> : vector<128xf32>
    %134 = vector.multi_reduction <add>, %133, %cst_99 [0] : vector<2x128xf32> to vector<128xf32>
    %135 = vector.shape_cast %134 : vector<128xf32> to vector<1x128xf32>
    %136 = arith.addf %121, %135 : vector<1x128xf32>
    %c9 = arith.constant 9 : index
    %c0_100 = arith.constant 0 : index
    %c0_101 = arith.constant 0 : index
    %137 = vector.load %arg1[%c9, %c0_100, %c0_101] : memref<16x2x16xbf16, #tpu.memory_space<vmem>>, vector<1x2x16xbf16>
    %138 = vector.shape_cast %137 : vector<1x2x16xbf16> to vector<2x16xbf16>
    %c9_102 = arith.constant 9 : index
    %c0_103 = arith.constant 0 : index
    %c0_104 = arith.constant 0 : index
    %139 = vector.load %arg2[%c9_102, %c0_103, %c0_104] : memref<16x16x128xbf16, #tpu.memory_space<vmem>>, vector<1x16x128xbf16>
    %140 = vector.shape_cast %139 : vector<1x16x128xbf16> to vector<16x128xbf16>
    %cst_105 = arith.constant dense<0.000000e+00> : vector<2x128xf32>
    %141 = tpu.matmul %138, %140, %cst_105 {dimension_numbers = #tpu.dot_dimension_numbers<[1], [0], [0], [1], [0, 0, 1, 1], [], []>} : vector<2x16xbf16>, vector<16x128xbf16>, vector<2x128xf32> -> vector<2x128xf32>
    %c9_106 = arith.constant 9 : index
    %c0_107 = arith.constant 0 : index
    %c0_108 = arith.constant 0 : index
    %142 = vector.load %arg5[%c9_106, %c0_107, %c0_108] : memref<16x2x128xf32, #tpu.memory_space<vmem>>, vector<1x2x128xf32>
    %143 = vector.shape_cast %142 : vector<1x2x128xf32> to vector<2x128xf32>
    %144 = vector.shape_cast %141 : vector<2x128xf32> to vector<1x2x128xf32>
    tpu.vector_store %arg5[%c9_106, %c0_107, %c0_108], %144 {strides = array<i32>} : memref<16x2x128xf32, #tpu.memory_space<vmem>>, vector<1x2x128xf32>,
    %cst_109 = arith.constant dense<0.000000e+00> : vector<128xf32>
    %145 = vector.multi_reduction <add>, %141, %cst_109 [0] : vector<2x128xf32> to vector<128xf32>
    %146 = vector.shape_cast %145 : vector<128xf32> to vector<1x128xf32>
    %147 = arith.addf %132, %146 : vector<1x128xf32>
    %148 = arith.mulf %141, %141 : vector<2x128xf32>
    %cst_110 = arith.constant dense<0.000000e+00> : vector<128xf32>
    %149 = vector.multi_reduction <add>, %148, %cst_110 [0] : vector<2x128xf32> to vector<128xf32>
    %150 = vector.shape_cast %149 : vector<128xf32> to vector<1x128xf32>
    %151 = arith.addf %136, %150 : vector<1x128xf32>
    %c10 = arith.constant 10 : index
    %c0_111 = arith.constant 0 : index
    %c0_112 = arith.constant 0 : index
    %152 = vector.load %arg1[%c10, %c0_111, %c0_112] : memref<16x2x16xbf16, #tpu.memory_space<vmem>>, vector<1x2x16xbf16>
    %153 = vector.shape_cast %152 : vector<1x2x16xbf16> to vector<2x16xbf16>
    %c10_113 = arith.constant 10 : index
    %c0_114 = arith.constant 0 : index
    %c0_115 = arith.constant 0 : index
    %154 = vector.load %arg2[%c10_113, %c0_114, %c0_115] : memref<16x16x128xbf16, #tpu.memory_space<vmem>>, vector<1x16x128xbf16>
    %155 = vector.shape_cast %154 : vector<1x16x128xbf16> to vector<16x128xbf16>
    %cst_116 = arith.constant dense<0.000000e+00> : vector<2x128xf32>
    %156 = tpu.matmul %153, %155, %cst_116 {dimension_numbers = #tpu.dot_dimension_numbers<[1], [0], [0], [1], [0, 0, 1, 1], [], []>} : vector<2x16xbf16>, vector<16x128xbf16>, vector<2x128xf32> -> vector<2x128xf32>
    %c10_117 = arith.constant 10 : index
    %c0_118 = arith.constant 0 : index
    %c0_119 = arith.constant 0 : index
    %157 = vector.load %arg5[%c10_117, %c0_118, %c0_119] : memref<16x2x128xf32, #tpu.memory_space<vmem>>, vector<1x2x128xf32>
    %158 = vector.shape_cast %157 : vector<1x2x128xf32> to vector<2x128xf32>
    %159 = vector.shape_cast %156 : vector<2x128xf32> to vector<1x2x128xf32>
    tpu.vector_store %arg5[%c10_117, %c0_118, %c0_119], %159 {strides = array<i32>} : memref<16x2x128xf32, #tpu.memory_space<vmem>>, vector<1x2x128xf32>,
    %cst_120 = arith.constant dense<0.000000e+00> : vector<128xf32>
    %160 = vector.multi_reduction <add>, %156, %cst_120 [0] : vector<2x128xf32> to vector<128xf32>
    %161 = vector.shape_cast %160 : vector<128xf32> to vector<1x128xf32>
    %162 = arith.addf %147, %161 : vector<1x128xf32>
    %163 = arith.mulf %156, %156 : vector<2x128xf32>
    %cst_121 = arith.constant dense<0.000000e+00> : vector<128xf32>
    %164 = vector.multi_reduction <add>, %163, %cst_121 [0] : vector<2x128xf32> to vector<128xf32>
    %165 = vector.shape_cast %164 : vector<128xf32> to vector<1x128xf32>
    %166 = arith.addf %151, %165 : vector<1x128xf32>
    %c11 = arith.constant 11 : index
    %c0_122 = arith.constant 0 : index
    %c0_123 = arith.constant 0 : index
    %167 = vector.load %arg1[%c11, %c0_122, %c0_123] : memref<16x2x16xbf16, #tpu.memory_space<vmem>>, vector<1x2x16xbf16>
    %168 = vector.shape_cast %167 : vector<1x2x16xbf16> to vector<2x16xbf16>
    %c11_124 = arith.constant 11 : index
    %c0_125 = arith.constant 0 : index
    %c0_126 = arith.constant 0 : index
    %169 = vector.load %arg2[%c11_124, %c0_125, %c0_126] : memref<16x16x128xbf16, #tpu.memory_space<vmem>>, vector<1x16x128xbf16>
    %170 = vector.shape_cast %169 : vector<1x16x128xbf16> to vector<16x128xbf16>
    %cst_127 = arith.constant dense<0.000000e+00> : vector<2x128xf32>
    %171 = tpu.matmul %168, %170, %cst_127 {dimension_numbers = #tpu.dot_dimension_numbers<[1], [0], [0], [1], [0, 0, 1, 1], [], []>} : vector<2x16xbf16>, vector<16x128xbf16>, vector<2x128xf32> -> vector<2x128xf32>
    %c11_128 = arith.constant 11 : index
    %c0_129 = arith.constant 0 : index
    %c0_130 = arith.constant 0 : index
    %172 = vector.load %arg5[%c11_128, %c0_129, %c0_130] : memref<16x2x128xf32, #tpu.memory_space<vmem>>, vector<1x2x128xf32>
    %173 = vector.shape_cast %172 : vector<1x2x128xf32> to vector<2x128xf32>
    %174 = vector.shape_cast %171 : vector<2x128xf32> to vector<1x2x128xf32>
    tpu.vector_store %arg5[%c11_128, %c0_129, %c0_130], %174 {strides = array<i32>} : memref<16x2x128xf32, #tpu.memory_space<vmem>>, vector<1x2x128xf32>,
    %cst_131 = arith.constant dense<0.000000e+00> : vector<128xf32>
    %175 = vector.multi_reduction <add>, %171, %cst_131 [0] : vector<2x128xf32> to vector<128xf32>
    %176 = vector.shape_cast %175 : vector<128xf32> to vector<1x128xf32>
    %177 = arith.addf %162, %176 : vector<1x128xf32>
    %178 = arith.mulf %171, %171 : vector<2x128xf32>
    %cst_132 = arith.constant dense<0.000000e+00> : vector<128xf32>
    %179 = vector.multi_reduction <add>, %178, %cst_132 [0] : vector<2x128xf32> to vector<128xf32>
    %180 = vector.shape_cast %179 : vector<128xf32> to vector<1x128xf32>
    %181 = arith.addf %166, %180 : vector<1x128xf32>
    %c12 = arith.constant 12 : index
    %c0_133 = arith.constant 0 : index
    %c0_134 = arith.constant 0 : index
    %182 = vector.load %arg1[%c12, %c0_133, %c0_134] : memref<16x2x16xbf16, #tpu.memory_space<vmem>>, vector<1x2x16xbf16>
    %183 = vector.shape_cast %182 : vector<1x2x16xbf16> to vector<2x16xbf16>
    %c12_135 = arith.constant 12 : index
    %c0_136 = arith.constant 0 : index
    %c0_137 = arith.constant 0 : index
    %184 = vector.load %arg2[%c12_135, %c0_136, %c0_137] : memref<16x16x128xbf16, #tpu.memory_space<vmem>>, vector<1x16x128xbf16>
    %185 = vector.shape_cast %184 : vector<1x16x128xbf16> to vector<16x128xbf16>
    %cst_138 = arith.constant dense<0.000000e+00> : vector<2x128xf32>
    %186 = tpu.matmul %183, %185, %cst_138 {dimension_numbers = #tpu.dot_dimension_numbers<[1], [0], [0], [1], [0, 0, 1, 1], [], []>} : vector<2x16xbf16>, vector<16x128xbf16>, vector<2x128xf32> -> vector<2x128xf32>
    %c12_139 = arith.constant 12 : index
    %c0_140 = arith.constant 0 : index
    %c0_141 = arith.constant 0 : index
    %187 = vector.load %arg5[%c12_139, %c0_140, %c0_141] : memref<16x2x128xf32, #tpu.memory_space<vmem>>, vector<1x2x128xf32>
    %188 = vector.shape_cast %187 : vector<1x2x128xf32> to vector<2x128xf32>
    %189 = vector.shape_cast %186 : vector<2x128xf32> to vector<1x2x128xf32>
    tpu.vector_store %arg5[%c12_139, %c0_140, %c0_141], %189 {strides = array<i32>} : memref<16x2x128xf32, #tpu.memory_space<vmem>>, vector<1x2x128xf32>,
    %cst_142 = arith.constant dense<0.000000e+00> : vector<128xf32>
    %190 = vector.multi_reduction <add>, %186, %cst_142 [0] : vector<2x128xf32> to vector<128xf32>
    %191 = vector.shape_cast %190 : vector<128xf32> to vector<1x128xf32>
    %192 = arith.addf %177, %191 : vector<1x128xf32>
    %193 = arith.mulf %186, %186 : vector<2x128xf32>
    %cst_143 = arith.constant dense<0.000000e+00> : vector<128xf32>
    %194 = vector.multi_reduction <add>, %193, %cst_143 [0] : vector<2x128xf32> to vector<128xf32>
    %195 = vector.shape_cast %194 : vector<128xf32> to vector<1x128xf32>
    %196 = arith.addf %181, %195 : vector<1x128xf32>
    %c13 = arith.constant 13 : index
    %c0_144 = arith.constant 0 : index
    %c0_145 = arith.constant 0 : index
    %197 = vector.load %arg1[%c13, %c0_144, %c0_145] : memref<16x2x16xbf16, #tpu.memory_space<vmem>>, vector<1x2x16xbf16>
    %198 = vector.shape_cast %197 : vector<1x2x16xbf16> to vector<2x16xbf16>
    %c13_146 = arith.constant 13 : index
    %c0_147 = arith.constant 0 : index
    %c0_148 = arith.constant 0 : index
    %199 = vector.load %arg2[%c13_146, %c0_147, %c0_148] : memref<16x16x128xbf16, #tpu.memory_space<vmem>>, vector<1x16x128xbf16>
    %200 = vector.shape_cast %199 : vector<1x16x128xbf16> to vector<16x128xbf16>
    %cst_149 = arith.constant dense<0.000000e+00> : vector<2x128xf32>
    %201 = tpu.matmul %198, %200, %cst_149 {dimension_numbers = #tpu.dot_dimension_numbers<[1], [0], [0], [1], [0, 0, 1, 1], [], []>} : vector<2x16xbf16>, vector<16x128xbf16>, vector<2x128xf32> -> vector<2x128xf32>
    %c13_150 = arith.constant 13 : index
    %c0_151 = arith.constant 0 : index
    %c0_152 = arith.constant 0 : index
    %202 = vector.load %arg5[%c13_150, %c0_151, %c0_152] : memref<16x2x128xf32, #tpu.memory_space<vmem>>, vector<1x2x128xf32>
    %203 = vector.shape_cast %202 : vector<1x2x128xf32> to vector<2x128xf32>
    %204 = vector.shape_cast %201 : vector<2x128xf32> to vector<1x2x128xf32>
    tpu.vector_store %arg5[%c13_150, %c0_151, %c0_152], %204 {strides = array<i32>} : memref<16x2x128xf32, #tpu.memory_space<vmem>>, vector<1x2x128xf32>,
    %cst_153 = arith.constant dense<0.000000e+00> : vector<128xf32>
    %205 = vector.multi_reduction <add>, %201, %cst_153 [0] : vector<2x128xf32> to vector<128xf32>
    %206 = vector.shape_cast %205 : vector<128xf32> to vector<1x128xf32>
    %207 = arith.addf %192, %206 : vector<1x128xf32>
    %208 = arith.mulf %201, %201 : vector<2x128xf32>
    %cst_154 = arith.constant dense<0.000000e+00> : vector<128xf32>
    %209 = vector.multi_reduction <add>, %208, %cst_154 [0] : vector<2x128xf32> to vector<128xf32>
    %210 = vector.shape_cast %209 : vector<128xf32> to vector<1x128xf32>
    %211 = arith.addf %196, %210 : vector<1x128xf32>
    %c14 = arith.constant 14 : index
    %c0_155 = arith.constant 0 : index
    %c0_156 = arith.constant 0 : index
    %212 = vector.load %arg1[%c14, %c0_155, %c0_156] : memref<16x2x16xbf16, #tpu.memory_space<vmem>>, vector<1x2x16xbf16>
    %213 = vector.shape_cast %212 : vector<1x2x16xbf16> to vector<2x16xbf16>
    %c14_157 = arith.constant 14 : index
    %c0_158 = arith.constant 0 : index
    %c0_159 = arith.constant 0 : index
    %214 = vector.load %arg2[%c14_157, %c0_158, %c0_159] : memref<16x16x128xbf16, #tpu.memory_space<vmem>>, vector<1x16x128xbf16>
    %215 = vector.shape_cast %214 : vector<1x16x128xbf16> to vector<16x128xbf16>
    %cst_160 = arith.constant dense<0.000000e+00> : vector<2x128xf32>
    %216 = tpu.matmul %213, %215, %cst_160 {dimension_numbers = #tpu.dot_dimension_numbers<[1], [0], [0], [1], [0, 0, 1, 1], [], []>} : vector<2x16xbf16>, vector<16x128xbf16>, vector<2x128xf32> -> vector<2x128xf32>
    %c14_161 = arith.constant 14 : index
    %c0_162 = arith.constant 0 : index
    %c0_163 = arith.constant 0 : index
    %217 = vector.load %arg5[%c14_161, %c0_162, %c0_163] : memref<16x2x128xf32, #tpu.memory_space<vmem>>, vector<1x2x128xf32>
    %218 = vector.shape_cast %217 : vector<1x2x128xf32> to vector<2x128xf32>
    %219 = vector.shape_cast %216 : vector<2x128xf32> to vector<1x2x128xf32>
    tpu.vector_store %arg5[%c14_161, %c0_162, %c0_163], %219 {strides = array<i32>} : memref<16x2x128xf32, #tpu.memory_space<vmem>>, vector<1x2x128xf32>,
    %cst_164 = arith.constant dense<0.000000e+00> : vector<128xf32>
    %220 = vector.multi_reduction <add>, %216, %cst_164 [0] : vector<2x128xf32> to vector<128xf32>
    %221 = vector.shape_cast %220 : vector<128xf32> to vector<1x128xf32>
    %222 = arith.addf %207, %221 : vector<1x128xf32>
    %223 = arith.mulf %216, %216 : vector<2x128xf32>
    %cst_165 = arith.constant dense<0.000000e+00> : vector<128xf32>
    %224 = vector.multi_reduction <add>, %223, %cst_165 [0] : vector<2x128xf32> to vector<128xf32>
    %225 = vector.shape_cast %224 : vector<128xf32> to vector<1x128xf32>
    %226 = arith.addf %211, %225 : vector<1x128xf32>
    %c15 = arith.constant 15 : index
    %c0_166 = arith.constant 0 : index
    %c0_167 = arith.constant 0 : index
    %227 = vector.load %arg1[%c15, %c0_166, %c0_167] : memref<16x2x16xbf16, #tpu.memory_space<vmem>>, vector<1x2x16xbf16>
    %228 = vector.shape_cast %227 : vector<1x2x16xbf16> to vector<2x16xbf16>
    %c15_168 = arith.constant 15 : index
    %c0_169 = arith.constant 0 : index
    %c0_170 = arith.constant 0 : index
    %229 = vector.load %arg2[%c15_168, %c0_169, %c0_170] : memref<16x16x128xbf16, #tpu.memory_space<vmem>>, vector<1x16x128xbf16>
    %230 = vector.shape_cast %229 : vector<1x16x128xbf16> to vector<16x128xbf16>
    %cst_171 = arith.constant dense<0.000000e+00> : vector<2x128xf32>
    %231 = tpu.matmul %228, %230, %cst_171 {dimension_numbers = #tpu.dot_dimension_numbers<[1], [0], [0], [1], [0, 0, 1, 1], [], []>} : vector<2x16xbf16>, vector<16x128xbf16>, vector<2x128xf32> -> vector<2x128xf32>
    %c15_172 = arith.constant 15 : index
    %c0_173 = arith.constant 0 : index
    %c0_174 = arith.constant 0 : index
    %232 = vector.load %arg5[%c15_172, %c0_173, %c0_174] : memref<16x2x128xf32, #tpu.memory_space<vmem>>, vector<1x2x128xf32>
    %233 = vector.shape_cast %232 : vector<1x2x128xf32> to vector<2x128xf32>
    %234 = vector.shape_cast %231 : vector<2x128xf32> to vector<1x2x128xf32>
    tpu.vector_store %arg5[%c15_172, %c0_173, %c0_174], %234 {strides = array<i32>} : memref<16x2x128xf32, #tpu.memory_space<vmem>>, vector<1x2x128xf32>,
    %cst_175 = arith.constant dense<0.000000e+00> : vector<128xf32>
    %235 = vector.multi_reduction <add>, %231, %cst_175 [0] : vector<2x128xf32> to vector<128xf32>
    %236 = vector.shape_cast %235 : vector<128xf32> to vector<1x128xf32>
    %237 = arith.addf %222, %236 : vector<1x128xf32>
    %238 = arith.mulf %231, %231 : vector<2x128xf32>
    %cst_176 = arith.constant dense<0.000000e+00> : vector<128xf32>
    %239 = vector.multi_reduction <add>, %238, %cst_176 [0] : vector<2x128xf32> to vector<128xf32>
    %240 = vector.shape_cast %239 : vector<128xf32> to vector<1x128xf32>
    %241 = arith.addf %226, %240 : vector<1x128xf32>
    %cst_177 = arith.constant 3.125000e-02 : f32
    %242 = vector.broadcast %cst_177 : f32 to vector<1x128xf32>
    %243 = arith.mulf %237, %242 : vector<1x128xf32>
    %cst_178 = arith.constant 3.125000e-02 : f32
    %244 = vector.broadcast %cst_178 : f32 to vector<1x128xf32>
    %245 = arith.mulf %241, %244 : vector<1x128xf32>
    %246 = arith.mulf %243, %243 : vector<1x128xf32>
    %247 = arith.subf %245, %246 : vector<1x128xf32>
    %cst_179 = arith.constant 0.000000e+00 : f32
    %248 = vector.broadcast %cst_179 : f32 to vector<1x128xf32>
    %249 = arith.maximumf %247, %248 : vector<1x128xf32>
    %c0_180 = arith.constant 0 : index
    %c0_181 = arith.constant 0 : index
    %250 = vector.load %arg3[%c0_180, %c0_181] : memref<1x128xf32, #tpu.memory_space<vmem>>, vector<1x128xf32>
    %cst_182 = arith.constant 9.99999974E-6 : f32
    %251 = vector.broadcast %cst_182 : f32 to vector<1x128xf32>
    %252 = arith.addf %249, %251 : vector<1x128xf32>
    %253 = math.rsqrt %252 : vector<1x128xf32>
    %254 = arith.mulf %250, %253 : vector<1x128xf32>
    %c0_183 = arith.constant 0 : index
    %c0_184 = arith.constant 0 : index
    %255 = vector.load %arg4[%c0_183, %c0_184] : memref<1x128xf32, #tpu.memory_space<vmem>>, vector<1x128xf32>
    %256 = arith.mulf %243, %254 : vector<1x128xf32>
    %257 = arith.subf %255, %256 : vector<1x128xf32>
    %c0_185 = arith.constant 0 : index
    %c0_186 = arith.constant 0 : index
    %c0_187 = arith.constant 0 : index
    %258 = vector.load %arg5[%c0_185, %c0_186, %c0_187] : memref<16x2x128xf32, #tpu.memory_space<vmem>>, vector<1x2x128xf32>
    %259 = vector.shape_cast %258 : vector<1x2x128xf32> to vector<2x128xf32>
    %260 = vector.broadcast %254 : vector<1x128xf32> to vector<2x128xf32>
    %261 = arith.mulf %259, %260 : vector<2x128xf32>
    %262 = vector.broadcast %257 : vector<1x128xf32> to vector<2x128xf32>
    %263 = arith.addf %261, %262 : vector<2x128xf32>
    %cst_188 = arith.constant 0.000000e+00 : f32
    %264 = vector.broadcast %cst_188 : f32 to vector<2x128xf32>
    %265 = arith.maximumf %263, %264 : vector<2x128xf32>
    %c0_189 = arith.constant 0 : index
    %c0_190 = arith.constant 0 : index
    %c0_191 = arith.constant 0 : index
    %266 = vector.load %arg5[%c0_189, %c0_190, %c0_191] : memref<16x2x128xf32, #tpu.memory_space<vmem>>, vector<1x2x128xf32>
    %267 = vector.shape_cast %266 : vector<1x2x128xf32> to vector<2x128xf32>
    %268 = vector.shape_cast %265 : vector<2x128xf32> to vector<1x2x128xf32>
    tpu.vector_store %arg5[%c0_189, %c0_190, %c0_191], %268 {strides = array<i32>} : memref<16x2x128xf32, #tpu.memory_space<vmem>>, vector<1x2x128xf32>,
    %c1_192 = arith.constant 1 : index
    %c0_193 = arith.constant 0 : index
    %c0_194 = arith.constant 0 : index
    %269 = vector.load %arg5[%c1_192, %c0_193, %c0_194] : memref<16x2x128xf32, #tpu.memory_space<vmem>>, vector<1x2x128xf32>
    %270 = vector.shape_cast %269 : vector<1x2x128xf32> to vector<2x128xf32>
    %271 = vector.broadcast %254 : vector<1x128xf32> to vector<2x128xf32>
    %272 = arith.mulf %270, %271 : vector<2x128xf32>
    %273 = vector.broadcast %257 : vector<1x128xf32> to vector<2x128xf32>
    %274 = arith.addf %272, %273 : vector<2x128xf32>
    %cst_195 = arith.constant 0.000000e+00 : f32
    %275 = vector.broadcast %cst_195 : f32 to vector<2x128xf32>
    %276 = arith.maximumf %274, %275 : vector<2x128xf32>
    %c1_196 = arith.constant 1 : index
    %c0_197 = arith.constant 0 : index
    %c0_198 = arith.constant 0 : index
    %277 = vector.load %arg5[%c1_196, %c0_197, %c0_198] : memref<16x2x128xf32, #tpu.memory_space<vmem>>, vector<1x2x128xf32>
    %278 = vector.shape_cast %277 : vector<1x2x128xf32> to vector<2x128xf32>
    %279 = vector.shape_cast %276 : vector<2x128xf32> to vector<1x2x128xf32>
    tpu.vector_store %arg5[%c1_196, %c0_197, %c0_198], %279 {strides = array<i32>} : memref<16x2x128xf32, #tpu.memory_space<vmem>>, vector<1x2x128xf32>,
    %c2_199 = arith.constant 2 : index
    %c0_200 = arith.constant 0 : index
    %c0_201 = arith.constant 0 : index
    %280 = vector.load %arg5[%c2_199, %c0_200, %c0_201] : memref<16x2x128xf32, #tpu.memory_space<vmem>>, vector<1x2x128xf32>
    %281 = vector.shape_cast %280 : vector<1x2x128xf32> to vector<2x128xf32>
    %282 = vector.broadcast %254 : vector<1x128xf32> to vector<2x128xf32>
    %283 = arith.mulf %281, %282 : vector<2x128xf32>
    %284 = vector.broadcast %257 : vector<1x128xf32> to vector<2x128xf32>
    %285 = arith.addf %283, %284 : vector<2x128xf32>
    %cst_202 = arith.constant 0.000000e+00 : f32
    %286 = vector.broadcast %cst_202 : f32 to vector<2x128xf32>
    %287 = arith.maximumf %285, %286 : vector<2x128xf32>
    %c2_203 = arith.constant 2 : index
    %c0_204 = arith.constant 0 : index
    %c0_205 = arith.constant 0 : index
    %288 = vector.load %arg5[%c2_203, %c0_204, %c0_205] : memref<16x2x128xf32, #tpu.memory_space<vmem>>, vector<1x2x128xf32>
    %289 = vector.shape_cast %288 : vector<1x2x128xf32> to vector<2x128xf32>
    %290 = vector.shape_cast %287 : vector<2x128xf32> to vector<1x2x128xf32>
    tpu.vector_store %arg5[%c2_203, %c0_204, %c0_205], %290 {strides = array<i32>} : memref<16x2x128xf32, #tpu.memory_space<vmem>>, vector<1x2x128xf32>,
    %c3_206 = arith.constant 3 : index
    %c0_207 = arith.constant 0 : index
    %c0_208 = arith.constant 0 : index
    %291 = vector.load %arg5[%c3_206, %c0_207, %c0_208] : memref<16x2x128xf32, #tpu.memory_space<vmem>>, vector<1x2x128xf32>
    %292 = vector.shape_cast %291 : vector<1x2x128xf32> to vector<2x128xf32>
    %293 = vector.broadcast %254 : vector<1x128xf32> to vector<2x128xf32>
    %294 = arith.mulf %292, %293 : vector<2x128xf32>
    %295 = vector.broadcast %257 : vector<1x128xf32> to vector<2x128xf32>
    %296 = arith.addf %294, %295 : vector<2x128xf32>
    %cst_209 = arith.constant 0.000000e+00 : f32
    %297 = vector.broadcast %cst_209 : f32 to vector<2x128xf32>
    %298 = arith.maximumf %296, %297 : vector<2x128xf32>
    %c3_210 = arith.constant 3 : index
    %c0_211 = arith.constant 0 : index
    %c0_212 = arith.constant 0 : index
    %299 = vector.load %arg5[%c3_210, %c0_211, %c0_212] : memref<16x2x128xf32, #tpu.memory_space<vmem>>, vector<1x2x128xf32>
    %300 = vector.shape_cast %299 : vector<1x2x128xf32> to vector<2x128xf32>
    %301 = vector.shape_cast %298 : vector<2x128xf32> to vector<1x2x128xf32>
    tpu.vector_store %arg5[%c3_210, %c0_211, %c0_212], %301 {strides = array<i32>} : memref<16x2x128xf32, #tpu.memory_space<vmem>>, vector<1x2x128xf32>,
    %c4_213 = arith.constant 4 : index
    %c0_214 = arith.constant 0 : index
    %c0_215 = arith.constant 0 : index
    %302 = vector.load %arg5[%c4_213, %c0_214, %c0_215] : memref<16x2x128xf32, #tpu.memory_space<vmem>>, vector<1x2x128xf32>
    %303 = vector.shape_cast %302 : vector<1x2x128xf32> to vector<2x128xf32>
    %304 = vector.broadcast %254 : vector<1x128xf32> to vector<2x128xf32>
    %305 = arith.mulf %303, %304 : vector<2x128xf32>
    %306 = vector.broadcast %257 : vector<1x128xf32> to vector<2x128xf32>
    %307 = arith.addf %305, %306 : vector<2x128xf32>
    %cst_216 = arith.constant 0.000000e+00 : f32
    %308 = vector.broadcast %cst_216 : f32 to vector<2x128xf32>
    %309 = arith.maximumf %307, %308 : vector<2x128xf32>
    %c4_217 = arith.constant 4 : index
    %c0_218 = arith.constant 0 : index
    %c0_219 = arith.constant 0 : index
    %310 = vector.load %arg5[%c4_217, %c0_218, %c0_219] : memref<16x2x128xf32, #tpu.memory_space<vmem>>, vector<1x2x128xf32>
    %311 = vector.shape_cast %310 : vector<1x2x128xf32> to vector<2x128xf32>
    %312 = vector.shape_cast %309 : vector<2x128xf32> to vector<1x2x128xf32>
    tpu.vector_store %arg5[%c4_217, %c0_218, %c0_219], %312 {strides = array<i32>} : memref<16x2x128xf32, #tpu.memory_space<vmem>>, vector<1x2x128xf32>,
    %c5_220 = arith.constant 5 : index
    %c0_221 = arith.constant 0 : index
    %c0_222 = arith.constant 0 : index
    %313 = vector.load %arg5[%c5_220, %c0_221, %c0_222] : memref<16x2x128xf32, #tpu.memory_space<vmem>>, vector<1x2x128xf32>
    %314 = vector.shape_cast %313 : vector<1x2x128xf32> to vector<2x128xf32>
    %315 = vector.broadcast %254 : vector<1x128xf32> to vector<2x128xf32>
    %316 = arith.mulf %314, %315 : vector<2x128xf32>
    %317 = vector.broadcast %257 : vector<1x128xf32> to vector<2x128xf32>
    %318 = arith.addf %316, %317 : vector<2x128xf32>
    %cst_223 = arith.constant 0.000000e+00 : f32
    %319 = vector.broadcast %cst_223 : f32 to vector<2x128xf32>
    %320 = arith.maximumf %318, %319 : vector<2x128xf32>
    %c5_224 = arith.constant 5 : index
    %c0_225 = arith.constant 0 : index
    %c0_226 = arith.constant 0 : index
    %321 = vector.load %arg5[%c5_224, %c0_225, %c0_226] : memref<16x2x128xf32, #tpu.memory_space<vmem>>, vector<1x2x128xf32>
    %322 = vector.shape_cast %321 : vector<1x2x128xf32> to vector<2x128xf32>
    %323 = vector.shape_cast %320 : vector<2x128xf32> to vector<1x2x128xf32>
    tpu.vector_store %arg5[%c5_224, %c0_225, %c0_226], %323 {strides = array<i32>} : memref<16x2x128xf32, #tpu.memory_space<vmem>>, vector<1x2x128xf32>,
    %c6_227 = arith.constant 6 : index
    %c0_228 = arith.constant 0 : index
    %c0_229 = arith.constant 0 : index
    %324 = vector.load %arg5[%c6_227, %c0_228, %c0_229] : memref<16x2x128xf32, #tpu.memory_space<vmem>>, vector<1x2x128xf32>
    %325 = vector.shape_cast %324 : vector<1x2x128xf32> to vector<2x128xf32>
    %326 = vector.broadcast %254 : vector<1x128xf32> to vector<2x128xf32>
    %327 = arith.mulf %325, %326 : vector<2x128xf32>
    %328 = vector.broadcast %257 : vector<1x128xf32> to vector<2x128xf32>
    %329 = arith.addf %327, %328 : vector<2x128xf32>
    %cst_230 = arith.constant 0.000000e+00 : f32
    %330 = vector.broadcast %cst_230 : f32 to vector<2x128xf32>
    %331 = arith.maximumf %329, %330 : vector<2x128xf32>
    %c6_231 = arith.constant 6 : index
    %c0_232 = arith.constant 0 : index
    %c0_233 = arith.constant 0 : index
    %332 = vector.load %arg5[%c6_231, %c0_232, %c0_233] : memref<16x2x128xf32, #tpu.memory_space<vmem>>, vector<1x2x128xf32>
    %333 = vector.shape_cast %332 : vector<1x2x128xf32> to vector<2x128xf32>
    %334 = vector.shape_cast %331 : vector<2x128xf32> to vector<1x2x128xf32>
    tpu.vector_store %arg5[%c6_231, %c0_232, %c0_233], %334 {strides = array<i32>} : memref<16x2x128xf32, #tpu.memory_space<vmem>>, vector<1x2x128xf32>,
    %c7_234 = arith.constant 7 : index
    %c0_235 = arith.constant 0 : index
    %c0_236 = arith.constant 0 : index
    %335 = vector.load %arg5[%c7_234, %c0_235, %c0_236] : memref<16x2x128xf32, #tpu.memory_space<vmem>>, vector<1x2x128xf32>
    %336 = vector.shape_cast %335 : vector<1x2x128xf32> to vector<2x128xf32>
    %337 = vector.broadcast %254 : vector<1x128xf32> to vector<2x128xf32>
    %338 = arith.mulf %336, %337 : vector<2x128xf32>
    %339 = vector.broadcast %257 : vector<1x128xf32> to vector<2x128xf32>
    %340 = arith.addf %338, %339 : vector<2x128xf32>
    %cst_237 = arith.constant 0.000000e+00 : f32
    %341 = vector.broadcast %cst_237 : f32 to vector<2x128xf32>
    %342 = arith.maximumf %340, %341 : vector<2x128xf32>
    %c7_238 = arith.constant 7 : index
    %c0_239 = arith.constant 0 : index
    %c0_240 = arith.constant 0 : index
    %343 = vector.load %arg5[%c7_238, %c0_239, %c0_240] : memref<16x2x128xf32, #tpu.memory_space<vmem>>, vector<1x2x128xf32>
    %344 = vector.shape_cast %343 : vector<1x2x128xf32> to vector<2x128xf32>
    %345 = vector.shape_cast %342 : vector<2x128xf32> to vector<1x2x128xf32>
    tpu.vector_store %arg5[%c7_238, %c0_239, %c0_240], %345 {strides = array<i32>} : memref<16x2x128xf32, #tpu.memory_space<vmem>>, vector<1x2x128xf32>,
    %c8_241 = arith.constant 8 : index
    %c0_242 = arith.constant 0 : index
    %c0_243 = arith.constant 0 : index
    %346 = vector.load %arg5[%c8_241, %c0_242, %c0_243] : memref<16x2x128xf32, #tpu.memory_space<vmem>>, vector<1x2x128xf32>
    %347 = vector.shape_cast %346 : vector<1x2x128xf32> to vector<2x128xf32>
    %348 = vector.broadcast %254 : vector<1x128xf32> to vector<2x128xf32>
    %349 = arith.mulf %347, %348 : vector<2x128xf32>
    %350 = vector.broadcast %257 : vector<1x128xf32> to vector<2x128xf32>
    %351 = arith.addf %349, %350 : vector<2x128xf32>
    %cst_244 = arith.constant 0.000000e+00 : f32
    %352 = vector.broadcast %cst_244 : f32 to vector<2x128xf32>
    %353 = arith.maximumf %351, %352 : vector<2x128xf32>
    %c8_245 = arith.constant 8 : index
    %c0_246 = arith.constant 0 : index
    %c0_247 = arith.constant 0 : index
    %354 = vector.load %arg5[%c8_245, %c0_246, %c0_247] : memref<16x2x128xf32, #tpu.memory_space<vmem>>, vector<1x2x128xf32>
    %355 = vector.shape_cast %354 : vector<1x2x128xf32> to vector<2x128xf32>
    %356 = vector.shape_cast %353 : vector<2x128xf32> to vector<1x2x128xf32>
    tpu.vector_store %arg5[%c8_245, %c0_246, %c0_247], %356 {strides = array<i32>} : memref<16x2x128xf32, #tpu.memory_space<vmem>>, vector<1x2x128xf32>,
    %c9_248 = arith.constant 9 : index
    %c0_249 = arith.constant 0 : index
    %c0_250 = arith.constant 0 : index
    %357 = vector.load %arg5[%c9_248, %c0_249, %c0_250] : memref<16x2x128xf32, #tpu.memory_space<vmem>>, vector<1x2x128xf32>
    %358 = vector.shape_cast %357 : vector<1x2x128xf32> to vector<2x128xf32>
    %359 = vector.broadcast %254 : vector<1x128xf32> to vector<2x128xf32>
    %360 = arith.mulf %358, %359 : vector<2x128xf32>
    %361 = vector.broadcast %257 : vector<1x128xf32> to vector<2x128xf32>
    %362 = arith.addf %360, %361 : vector<2x128xf32>
    %cst_251 = arith.constant 0.000000e+00 : f32
    %363 = vector.broadcast %cst_251 : f32 to vector<2x128xf32>
    %364 = arith.maximumf %362, %363 : vector<2x128xf32>
    %c9_252 = arith.constant 9 : index
    %c0_253 = arith.constant 0 : index
    %c0_254 = arith.constant 0 : index
    %365 = vector.load %arg5[%c9_252, %c0_253, %c0_254] : memref<16x2x128xf32, #tpu.memory_space<vmem>>, vector<1x2x128xf32>
    %366 = vector.shape_cast %365 : vector<1x2x128xf32> to vector<2x128xf32>
    %367 = vector.shape_cast %364 : vector<2x128xf32> to vector<1x2x128xf32>
    tpu.vector_store %arg5[%c9_252, %c0_253, %c0_254], %367 {strides = array<i32>} : memref<16x2x128xf32, #tpu.memory_space<vmem>>, vector<1x2x128xf32>,
    %c10_255 = arith.constant 10 : index
    %c0_256 = arith.constant 0 : index
    %c0_257 = arith.constant 0 : index
    %368 = vector.load %arg5[%c10_255, %c0_256, %c0_257] : memref<16x2x128xf32, #tpu.memory_space<vmem>>, vector<1x2x128xf32>
    %369 = vector.shape_cast %368 : vector<1x2x128xf32> to vector<2x128xf32>
    %370 = vector.broadcast %254 : vector<1x128xf32> to vector<2x128xf32>
    %371 = arith.mulf %369, %370 : vector<2x128xf32>
    %372 = vector.broadcast %257 : vector<1x128xf32> to vector<2x128xf32>
    %373 = arith.addf %371, %372 : vector<2x128xf32>
    %cst_258 = arith.constant 0.000000e+00 : f32
    %374 = vector.broadcast %cst_258 : f32 to vector<2x128xf32>
    %375 = arith.maximumf %373, %374 : vector<2x128xf32>
    %c10_259 = arith.constant 10 : index
    %c0_260 = arith.constant 0 : index
    %c0_261 = arith.constant 0 : index
    %376 = vector.load %arg5[%c10_259, %c0_260, %c0_261] : memref<16x2x128xf32, #tpu.memory_space<vmem>>, vector<1x2x128xf32>
    %377 = vector.shape_cast %376 : vector<1x2x128xf32> to vector<2x128xf32>
    %378 = vector.shape_cast %375 : vector<2x128xf32> to vector<1x2x128xf32>
    tpu.vector_store %arg5[%c10_259, %c0_260, %c0_261], %378 {strides = array<i32>} : memref<16x2x128xf32, #tpu.memory_space<vmem>>, vector<1x2x128xf32>,
    %c11_262 = arith.constant 11 : index
    %c0_263 = arith.constant 0 : index
    %c0_264 = arith.constant 0 : index
    %379 = vector.load %arg5[%c11_262, %c0_263, %c0_264] : memref<16x2x128xf32, #tpu.memory_space<vmem>>, vector<1x2x128xf32>
    %380 = vector.shape_cast %379 : vector<1x2x128xf32> to vector<2x128xf32>
    %381 = vector.broadcast %254 : vector<1x128xf32> to vector<2x128xf32>
    %382 = arith.mulf %380, %381 : vector<2x128xf32>
    %383 = vector.broadcast %257 : vector<1x128xf32> to vector<2x128xf32>
    %384 = arith.addf %382, %383 : vector<2x128xf32>
    %cst_265 = arith.constant 0.000000e+00 : f32
    %385 = vector.broadcast %cst_265 : f32 to vector<2x128xf32>
    %386 = arith.maximumf %384, %385 : vector<2x128xf32>
    %c11_266 = arith.constant 11 : index
    %c0_267 = arith.constant 0 : index
    %c0_268 = arith.constant 0 : index
    %387 = vector.load %arg5[%c11_266, %c0_267, %c0_268] : memref<16x2x128xf32, #tpu.memory_space<vmem>>, vector<1x2x128xf32>
    %388 = vector.shape_cast %387 : vector<1x2x128xf32> to vector<2x128xf32>
    %389 = vector.shape_cast %386 : vector<2x128xf32> to vector<1x2x128xf32>
    tpu.vector_store %arg5[%c11_266, %c0_267, %c0_268], %389 {strides = array<i32>} : memref<16x2x128xf32, #tpu.memory_space<vmem>>, vector<1x2x128xf32>,
    %c12_269 = arith.constant 12 : index
    %c0_270 = arith.constant 0 : index
    %c0_271 = arith.constant 0 : index
    %390 = vector.load %arg5[%c12_269, %c0_270, %c0_271] : memref<16x2x128xf32, #tpu.memory_space<vmem>>, vector<1x2x128xf32>
    %391 = vector.shape_cast %390 : vector<1x2x128xf32> to vector<2x128xf32>
    %392 = vector.broadcast %254 : vector<1x128xf32> to vector<2x128xf32>
    %393 = arith.mulf %391, %392 : vector<2x128xf32>
    %394 = vector.broadcast %257 : vector<1x128xf32> to vector<2x128xf32>
    %395 = arith.addf %393, %394 : vector<2x128xf32>
    %cst_272 = arith.constant 0.000000e+00 : f32
    %396 = vector.broadcast %cst_272 : f32 to vector<2x128xf32>
    %397 = arith.maximumf %395, %396 : vector<2x128xf32>
    %c12_273 = arith.constant 12 : index
    %c0_274 = arith.constant 0 : index
    %c0_275 = arith.constant 0 : index
    %398 = vector.load %arg5[%c12_273, %c0_274, %c0_275] : memref<16x2x128xf32, #tpu.memory_space<vmem>>, vector<1x2x128xf32>
    %399 = vector.shape_cast %398 : vector<1x2x128xf32> to vector<2x128xf32>
    %400 = vector.shape_cast %397 : vector<2x128xf32> to vector<1x2x128xf32>
    tpu.vector_store %arg5[%c12_273, %c0_274, %c0_275], %400 {strides = array<i32>} : memref<16x2x128xf32, #tpu.memory_space<vmem>>, vector<1x2x128xf32>,
    %c13_276 = arith.constant 13 : index
    %c0_277 = arith.constant 0 : index
    %c0_278 = arith.constant 0 : index
    %401 = vector.load %arg5[%c13_276, %c0_277, %c0_278] : memref<16x2x128xf32, #tpu.memory_space<vmem>>, vector<1x2x128xf32>
    %402 = vector.shape_cast %401 : vector<1x2x128xf32> to vector<2x128xf32>
    %403 = vector.broadcast %254 : vector<1x128xf32> to vector<2x128xf32>
    %404 = arith.mulf %402, %403 : vector<2x128xf32>
    %405 = vector.broadcast %257 : vector<1x128xf32> to vector<2x128xf32>
    %406 = arith.addf %404, %405 : vector<2x128xf32>
    %cst_279 = arith.constant 0.000000e+00 : f32
    %407 = vector.broadcast %cst_279 : f32 to vector<2x128xf32>
    %408 = arith.maximumf %406, %407 : vector<2x128xf32>
    %c13_280 = arith.constant 13 : index
    %c0_281 = arith.constant 0 : index
    %c0_282 = arith.constant 0 : index
    %409 = vector.load %arg5[%c13_280, %c0_281, %c0_282] : memref<16x2x128xf32, #tpu.memory_space<vmem>>, vector<1x2x128xf32>
    %410 = vector.shape_cast %409 : vector<1x2x128xf32> to vector<2x128xf32>
    %411 = vector.shape_cast %408 : vector<2x128xf32> to vector<1x2x128xf32>
    tpu.vector_store %arg5[%c13_280, %c0_281, %c0_282], %411 {strides = array<i32>} : memref<16x2x128xf32, #tpu.memory_space<vmem>>, vector<1x2x128xf32>,
    %c14_283 = arith.constant 14 : index
    %c0_284 = arith.constant 0 : index
    %c0_285 = arith.constant 0 : index
    %412 = vector.load %arg5[%c14_283, %c0_284, %c0_285] : memref<16x2x128xf32, #tpu.memory_space<vmem>>, vector<1x2x128xf32>
    %413 = vector.shape_cast %412 : vector<1x2x128xf32> to vector<2x128xf32>
    %414 = vector.broadcast %254 : vector<1x128xf32> to vector<2x128xf32>
    %415 = arith.mulf %413, %414 : vector<2x128xf32>
    %416 = vector.broadcast %257 : vector<1x128xf32> to vector<2x128xf32>
    %417 = arith.addf %415, %416 : vector<2x128xf32>
    %cst_286 = arith.constant 0.000000e+00 : f32
    %418 = vector.broadcast %cst_286 : f32 to vector<2x128xf32>
    %419 = arith.maximumf %417, %418 : vector<2x128xf32>
    %c14_287 = arith.constant 14 : index
    %c0_288 = arith.constant 0 : index
    %c0_289 = arith.constant 0 : index
    %420 = vector.load %arg5[%c14_287, %c0_288, %c0_289] : memref<16x2x128xf32, #tpu.memory_space<vmem>>, vector<1x2x128xf32>
    %421 = vector.shape_cast %420 : vector<1x2x128xf32> to vector<2x128xf32>
    %422 = vector.shape_cast %419 : vector<2x128xf32> to vector<1x2x128xf32>
    tpu.vector_store %arg5[%c14_287, %c0_288, %c0_289], %422 {strides = array<i32>} : memref<16x2x128xf32, #tpu.memory_space<vmem>>, vector<1x2x128xf32>,
    %c15_290 = arith.constant 15 : index
    %c0_291 = arith.constant 0 : index
    %c0_292 = arith.constant 0 : index
    %423 = vector.load %arg5[%c15_290, %c0_291, %c0_292] : memref<16x2x128xf32, #tpu.memory_space<vmem>>, vector<1x2x128xf32>
    %424 = vector.shape_cast %423 : vector<1x2x128xf32> to vector<2x128xf32>
    %425 = vector.broadcast %254 : vector<1x128xf32> to vector<2x128xf32>
    %426 = arith.mulf %424, %425 : vector<2x128xf32>
    %427 = vector.broadcast %257 : vector<1x128xf32> to vector<2x128xf32>
    %428 = arith.addf %426, %427 : vector<2x128xf32>
    %cst_293 = arith.constant 0.000000e+00 : f32
    %429 = vector.broadcast %cst_293 : f32 to vector<2x128xf32>
    %430 = arith.maximumf %428, %429 : vector<2x128xf32>
    %c15_294 = arith.constant 15 : index
    %c0_295 = arith.constant 0 : index
    %c0_296 = arith.constant 0 : index
    %431 = vector.load %arg5[%c15_294, %c0_295, %c0_296] : memref<16x2x128xf32, #tpu.memory_space<vmem>>, vector<1x2x128xf32>
    %432 = vector.shape_cast %431 : vector<1x2x128xf32> to vector<2x128xf32>
    %433 = vector.shape_cast %430 : vector<2x128xf32> to vector<1x2x128xf32>
    tpu.vector_store %arg5[%c15_294, %c0_295, %c0_296], %433 {strides = array<i32>} : memref<16x2x128xf32, #tpu.memory_space<vmem>>, vector<1x2x128xf32>,
    return
  }
  func.func @transform_0(%arg0: i32) -> (i32, i32, i32) {
    %c0_i32 = arith.constant 0 : i32
    %c0_i32_0 = arith.constant 0 : i32
    %c0_i32_1 = arith.constant 0 : i32
    %c0_i32_2 = arith.constant 0 : i32
    return %c0_i32, %c0_i32_0, %c0_i32_1 : i32, i32, i32
  }
  func.func @transform_1(%arg0: i32) -> (i32, i32, i32) {
    %c0_i32 = arith.constant 0 : i32
    %c0_i32_0 = arith.constant 0 : i32
    %c0_i32_1 = arith.constant 0 : i32
    %c0_i32_2 = arith.constant 0 : i32
    return %c0_i32, %c0_i32_0, %c0_i32_1 : i32, i32, i32
  }
  func.func @transform_2(%arg0: i32) -> (i32, i32) {
    %c0_i32 = arith.constant 0 : i32
    %c0_i32_0 = arith.constant 0 : i32
    %c0_i32_1 = arith.constant 0 : i32
    return %c0_i32, %c0_i32_0 : i32, i32
  }
  func.func @transform_3(%arg0: i32) -> (i32, i32) {
    %c0_i32 = arith.constant 0 : i32
    %c0_i32_0 = arith.constant 0 : i32
    %c0_i32_1 = arith.constant 0 : i32
    return %c0_i32, %c0_i32_0 : i32, i32
  }
  func.func @transform_4(%arg0: i32) -> (i32, i32, i32) {
    %c0_i32 = arith.constant 0 : i32
    %c0_i32_0 = arith.constant 0 : i32
    %c0_i32_1 = arith.constant 0 : i32
    %c0_i32_2 = arith.constant 0 : i32
    return %c0_i32, %c0_i32_0, %c0_i32_1 : i32, i32, i32
  }
}

module attributes {stable_mosaic.version = 11 : i64} {
  func.func @_phase_mm_bn_relu_kernel(%arg0: i32, %arg1: memref<4x32x256xbf16, #tpu.memory_space<vmem>>, %arg2: memref<4x256x128xbf16, #tpu.memory_space<vmem>>, %arg3: memref<1x128xf32, #tpu.memory_space<vmem>>, %arg4: memref<1x128xf32, #tpu.memory_space<vmem>>, %arg5: memref<4x32x128xf32, #tpu.memory_space<vmem>>) attributes {dimension_semantics = [#tpu.dimension_semantics<arbitrary>], iteration_bounds = array<i64: 1>, scalar_prefetch = 0 : i64, scratch_operands = 0 : i64, tpu.core_type = #tpu.core_type<tc>, window_params = [{pipeline_mode = #tpu.pipeline_mode<synchronous>, transform_indices = @transform_0, window_bounds = array<i64: 4, 32, 256>}, {pipeline_mode = #tpu.pipeline_mode<synchronous>, transform_indices = @transform_1, window_bounds = array<i64: 4, 256, 128>}, {pipeline_mode = #tpu.pipeline_mode<synchronous>, transform_indices = @transform_2, window_bounds = array<i64: 1, 128>}, {pipeline_mode = #tpu.pipeline_mode<synchronous>, transform_indices = @transform_3, window_bounds = array<i64: 1, 128>}, {pipeline_mode = #tpu.pipeline_mode<synchronous>, transform_indices = @transform_4, window_bounds = array<i64: 4, 32, 128>}]} {
    %cst = arith.constant 0.000000e+00 : f32
    %0 = vector.broadcast %cst : f32 to vector<1x128xf32>
    %cst_0 = arith.constant 0.000000e+00 : f32
    %1 = vector.broadcast %cst_0 : f32 to vector<1x128xf32>
    %c0 = arith.constant 0 : index
    %c0_1 = arith.constant 0 : index
    %c0_2 = arith.constant 0 : index
    %2 = vector.load %arg1[%c0, %c0_1, %c0_2] : memref<4x32x256xbf16, #tpu.memory_space<vmem>>, vector<1x32x256xbf16>
    %3 = vector.shape_cast %2 : vector<1x32x256xbf16> to vector<32x256xbf16>
    %c0_3 = arith.constant 0 : index
    %c0_4 = arith.constant 0 : index
    %c0_5 = arith.constant 0 : index
    %4 = vector.load %arg2[%c0_3, %c0_4, %c0_5] : memref<4x256x128xbf16, #tpu.memory_space<vmem>>, vector<1x256x128xbf16>
    %5 = vector.shape_cast %4 : vector<1x256x128xbf16> to vector<256x128xbf16>
    %cst_6 = arith.constant dense<0.000000e+00> : vector<32x128xf32>
    %6 = tpu.matmul %3, %5, %cst_6 {dimension_numbers = #tpu.dot_dimension_numbers<[1], [0], [0], [1], [0, 0, 1, 1], [], []>} : vector<32x256xbf16>, vector<256x128xbf16>, vector<32x128xf32> -> vector<32x128xf32>
    %c0_7 = arith.constant 0 : index
    %c0_8 = arith.constant 0 : index
    %c0_9 = arith.constant 0 : index
    %7 = vector.load %arg5[%c0_7, %c0_8, %c0_9] : memref<4x32x128xf32, #tpu.memory_space<vmem>>, vector<1x32x128xf32>
    %8 = vector.shape_cast %7 : vector<1x32x128xf32> to vector<32x128xf32>
    %9 = vector.shape_cast %6 : vector<32x128xf32> to vector<1x32x128xf32>
    tpu.vector_store %arg5[%c0_7, %c0_8, %c0_9], %9 {strides = array<i32>} : memref<4x32x128xf32, #tpu.memory_space<vmem>>, vector<1x32x128xf32>,
    %cst_10 = arith.constant dense<0.000000e+00> : vector<128xf32>
    %10 = vector.multi_reduction <add>, %6, %cst_10 [0] : vector<32x128xf32> to vector<128xf32>
    %11 = vector.shape_cast %10 : vector<128xf32> to vector<1x128xf32>
    %12 = arith.addf %0, %11 : vector<1x128xf32>
    %13 = arith.mulf %6, %6 : vector<32x128xf32>
    %cst_11 = arith.constant dense<0.000000e+00> : vector<128xf32>
    %14 = vector.multi_reduction <add>, %13, %cst_11 [0] : vector<32x128xf32> to vector<128xf32>
    %15 = vector.shape_cast %14 : vector<128xf32> to vector<1x128xf32>
    %16 = arith.addf %1, %15 : vector<1x128xf32>
    %c1 = arith.constant 1 : index
    %c0_12 = arith.constant 0 : index
    %c0_13 = arith.constant 0 : index
    %17 = vector.load %arg1[%c1, %c0_12, %c0_13] : memref<4x32x256xbf16, #tpu.memory_space<vmem>>, vector<1x32x256xbf16>
    %18 = vector.shape_cast %17 : vector<1x32x256xbf16> to vector<32x256xbf16>
    %c1_14 = arith.constant 1 : index
    %c0_15 = arith.constant 0 : index
    %c0_16 = arith.constant 0 : index
    %19 = vector.load %arg2[%c1_14, %c0_15, %c0_16] : memref<4x256x128xbf16, #tpu.memory_space<vmem>>, vector<1x256x128xbf16>
    %20 = vector.shape_cast %19 : vector<1x256x128xbf16> to vector<256x128xbf16>
    %cst_17 = arith.constant dense<0.000000e+00> : vector<32x128xf32>
    %21 = tpu.matmul %18, %20, %cst_17 {dimension_numbers = #tpu.dot_dimension_numbers<[1], [0], [0], [1], [0, 0, 1, 1], [], []>} : vector<32x256xbf16>, vector<256x128xbf16>, vector<32x128xf32> -> vector<32x128xf32>
    %c1_18 = arith.constant 1 : index
    %c0_19 = arith.constant 0 : index
    %c0_20 = arith.constant 0 : index
    %22 = vector.load %arg5[%c1_18, %c0_19, %c0_20] : memref<4x32x128xf32, #tpu.memory_space<vmem>>, vector<1x32x128xf32>
    %23 = vector.shape_cast %22 : vector<1x32x128xf32> to vector<32x128xf32>
    %24 = vector.shape_cast %21 : vector<32x128xf32> to vector<1x32x128xf32>
    tpu.vector_store %arg5[%c1_18, %c0_19, %c0_20], %24 {strides = array<i32>} : memref<4x32x128xf32, #tpu.memory_space<vmem>>, vector<1x32x128xf32>,
    %cst_21 = arith.constant dense<0.000000e+00> : vector<128xf32>
    %25 = vector.multi_reduction <add>, %21, %cst_21 [0] : vector<32x128xf32> to vector<128xf32>
    %26 = vector.shape_cast %25 : vector<128xf32> to vector<1x128xf32>
    %27 = arith.addf %12, %26 : vector<1x128xf32>
    %28 = arith.mulf %21, %21 : vector<32x128xf32>
    %cst_22 = arith.constant dense<0.000000e+00> : vector<128xf32>
    %29 = vector.multi_reduction <add>, %28, %cst_22 [0] : vector<32x128xf32> to vector<128xf32>
    %30 = vector.shape_cast %29 : vector<128xf32> to vector<1x128xf32>
    %31 = arith.addf %16, %30 : vector<1x128xf32>
    %c2 = arith.constant 2 : index
    %c0_23 = arith.constant 0 : index
    %c0_24 = arith.constant 0 : index
    %32 = vector.load %arg1[%c2, %c0_23, %c0_24] : memref<4x32x256xbf16, #tpu.memory_space<vmem>>, vector<1x32x256xbf16>
    %33 = vector.shape_cast %32 : vector<1x32x256xbf16> to vector<32x256xbf16>
    %c2_25 = arith.constant 2 : index
    %c0_26 = arith.constant 0 : index
    %c0_27 = arith.constant 0 : index
    %34 = vector.load %arg2[%c2_25, %c0_26, %c0_27] : memref<4x256x128xbf16, #tpu.memory_space<vmem>>, vector<1x256x128xbf16>
    %35 = vector.shape_cast %34 : vector<1x256x128xbf16> to vector<256x128xbf16>
    %cst_28 = arith.constant dense<0.000000e+00> : vector<32x128xf32>
    %36 = tpu.matmul %33, %35, %cst_28 {dimension_numbers = #tpu.dot_dimension_numbers<[1], [0], [0], [1], [0, 0, 1, 1], [], []>} : vector<32x256xbf16>, vector<256x128xbf16>, vector<32x128xf32> -> vector<32x128xf32>
    %c2_29 = arith.constant 2 : index
    %c0_30 = arith.constant 0 : index
    %c0_31 = arith.constant 0 : index
    %37 = vector.load %arg5[%c2_29, %c0_30, %c0_31] : memref<4x32x128xf32, #tpu.memory_space<vmem>>, vector<1x32x128xf32>
    %38 = vector.shape_cast %37 : vector<1x32x128xf32> to vector<32x128xf32>
    %39 = vector.shape_cast %36 : vector<32x128xf32> to vector<1x32x128xf32>
    tpu.vector_store %arg5[%c2_29, %c0_30, %c0_31], %39 {strides = array<i32>} : memref<4x32x128xf32, #tpu.memory_space<vmem>>, vector<1x32x128xf32>,
    %cst_32 = arith.constant dense<0.000000e+00> : vector<128xf32>
    %40 = vector.multi_reduction <add>, %36, %cst_32 [0] : vector<32x128xf32> to vector<128xf32>
    %41 = vector.shape_cast %40 : vector<128xf32> to vector<1x128xf32>
    %42 = arith.addf %27, %41 : vector<1x128xf32>
    %43 = arith.mulf %36, %36 : vector<32x128xf32>
    %cst_33 = arith.constant dense<0.000000e+00> : vector<128xf32>
    %44 = vector.multi_reduction <add>, %43, %cst_33 [0] : vector<32x128xf32> to vector<128xf32>
    %45 = vector.shape_cast %44 : vector<128xf32> to vector<1x128xf32>
    %46 = arith.addf %31, %45 : vector<1x128xf32>
    %c3 = arith.constant 3 : index
    %c0_34 = arith.constant 0 : index
    %c0_35 = arith.constant 0 : index
    %47 = vector.load %arg1[%c3, %c0_34, %c0_35] : memref<4x32x256xbf16, #tpu.memory_space<vmem>>, vector<1x32x256xbf16>
    %48 = vector.shape_cast %47 : vector<1x32x256xbf16> to vector<32x256xbf16>
    %c3_36 = arith.constant 3 : index
    %c0_37 = arith.constant 0 : index
    %c0_38 = arith.constant 0 : index
    %49 = vector.load %arg2[%c3_36, %c0_37, %c0_38] : memref<4x256x128xbf16, #tpu.memory_space<vmem>>, vector<1x256x128xbf16>
    %50 = vector.shape_cast %49 : vector<1x256x128xbf16> to vector<256x128xbf16>
    %cst_39 = arith.constant dense<0.000000e+00> : vector<32x128xf32>
    %51 = tpu.matmul %48, %50, %cst_39 {dimension_numbers = #tpu.dot_dimension_numbers<[1], [0], [0], [1], [0, 0, 1, 1], [], []>} : vector<32x256xbf16>, vector<256x128xbf16>, vector<32x128xf32> -> vector<32x128xf32>
    %c3_40 = arith.constant 3 : index
    %c0_41 = arith.constant 0 : index
    %c0_42 = arith.constant 0 : index
    %52 = vector.load %arg5[%c3_40, %c0_41, %c0_42] : memref<4x32x128xf32, #tpu.memory_space<vmem>>, vector<1x32x128xf32>
    %53 = vector.shape_cast %52 : vector<1x32x128xf32> to vector<32x128xf32>
    %54 = vector.shape_cast %51 : vector<32x128xf32> to vector<1x32x128xf32>
    tpu.vector_store %arg5[%c3_40, %c0_41, %c0_42], %54 {strides = array<i32>} : memref<4x32x128xf32, #tpu.memory_space<vmem>>, vector<1x32x128xf32>,
    %cst_43 = arith.constant dense<0.000000e+00> : vector<128xf32>
    %55 = vector.multi_reduction <add>, %51, %cst_43 [0] : vector<32x128xf32> to vector<128xf32>
    %56 = vector.shape_cast %55 : vector<128xf32> to vector<1x128xf32>
    %57 = arith.addf %42, %56 : vector<1x128xf32>
    %58 = arith.mulf %51, %51 : vector<32x128xf32>
    %cst_44 = arith.constant dense<0.000000e+00> : vector<128xf32>
    %59 = vector.multi_reduction <add>, %58, %cst_44 [0] : vector<32x128xf32> to vector<128xf32>
    %60 = vector.shape_cast %59 : vector<128xf32> to vector<1x128xf32>
    %61 = arith.addf %46, %60 : vector<1x128xf32>
    %cst_45 = arith.constant 7.812500e-03 : f32
    %62 = vector.broadcast %cst_45 : f32 to vector<1x128xf32>
    %63 = arith.mulf %57, %62 : vector<1x128xf32>
    %cst_46 = arith.constant 7.812500e-03 : f32
    %64 = vector.broadcast %cst_46 : f32 to vector<1x128xf32>
    %65 = arith.mulf %61, %64 : vector<1x128xf32>
    %66 = arith.mulf %63, %63 : vector<1x128xf32>
    %67 = arith.subf %65, %66 : vector<1x128xf32>
    %cst_47 = arith.constant 0.000000e+00 : f32
    %68 = vector.broadcast %cst_47 : f32 to vector<1x128xf32>
    %69 = arith.maximumf %67, %68 : vector<1x128xf32>
    %c0_48 = arith.constant 0 : index
    %c0_49 = arith.constant 0 : index
    %70 = vector.load %arg3[%c0_48, %c0_49] : memref<1x128xf32, #tpu.memory_space<vmem>>, vector<1x128xf32>
    %cst_50 = arith.constant 9.99999974E-6 : f32
    %71 = vector.broadcast %cst_50 : f32 to vector<1x128xf32>
    %72 = arith.addf %69, %71 : vector<1x128xf32>
    %73 = math.rsqrt %72 : vector<1x128xf32>
    %74 = arith.mulf %70, %73 : vector<1x128xf32>
    %c0_51 = arith.constant 0 : index
    %c0_52 = arith.constant 0 : index
    %75 = vector.load %arg4[%c0_51, %c0_52] : memref<1x128xf32, #tpu.memory_space<vmem>>, vector<1x128xf32>
    %76 = arith.mulf %63, %74 : vector<1x128xf32>
    %77 = arith.subf %75, %76 : vector<1x128xf32>
    %c0_53 = arith.constant 0 : index
    %c0_54 = arith.constant 0 : index
    %c0_55 = arith.constant 0 : index
    %78 = vector.load %arg5[%c0_53, %c0_54, %c0_55] : memref<4x32x128xf32, #tpu.memory_space<vmem>>, vector<1x32x128xf32>
    %79 = vector.shape_cast %78 : vector<1x32x128xf32> to vector<32x128xf32>
    %80 = vector.broadcast %74 : vector<1x128xf32> to vector<32x128xf32>
    %81 = arith.mulf %79, %80 : vector<32x128xf32>
    %82 = vector.broadcast %77 : vector<1x128xf32> to vector<32x128xf32>
    %83 = arith.addf %81, %82 : vector<32x128xf32>
    %cst_56 = arith.constant 0.000000e+00 : f32
    %84 = vector.broadcast %cst_56 : f32 to vector<32x128xf32>
    %85 = arith.maximumf %83, %84 : vector<32x128xf32>
    %c0_57 = arith.constant 0 : index
    %c0_58 = arith.constant 0 : index
    %c0_59 = arith.constant 0 : index
    %86 = vector.load %arg5[%c0_57, %c0_58, %c0_59] : memref<4x32x128xf32, #tpu.memory_space<vmem>>, vector<1x32x128xf32>
    %87 = vector.shape_cast %86 : vector<1x32x128xf32> to vector<32x128xf32>
    %88 = vector.shape_cast %85 : vector<32x128xf32> to vector<1x32x128xf32>
    tpu.vector_store %arg5[%c0_57, %c0_58, %c0_59], %88 {strides = array<i32>} : memref<4x32x128xf32, #tpu.memory_space<vmem>>, vector<1x32x128xf32>,
    %c1_60 = arith.constant 1 : index
    %c0_61 = arith.constant 0 : index
    %c0_62 = arith.constant 0 : index
    %89 = vector.load %arg5[%c1_60, %c0_61, %c0_62] : memref<4x32x128xf32, #tpu.memory_space<vmem>>, vector<1x32x128xf32>
    %90 = vector.shape_cast %89 : vector<1x32x128xf32> to vector<32x128xf32>
    %91 = vector.broadcast %74 : vector<1x128xf32> to vector<32x128xf32>
    %92 = arith.mulf %90, %91 : vector<32x128xf32>
    %93 = vector.broadcast %77 : vector<1x128xf32> to vector<32x128xf32>
    %94 = arith.addf %92, %93 : vector<32x128xf32>
    %cst_63 = arith.constant 0.000000e+00 : f32
    %95 = vector.broadcast %cst_63 : f32 to vector<32x128xf32>
    %96 = arith.maximumf %94, %95 : vector<32x128xf32>
    %c1_64 = arith.constant 1 : index
    %c0_65 = arith.constant 0 : index
    %c0_66 = arith.constant 0 : index
    %97 = vector.load %arg5[%c1_64, %c0_65, %c0_66] : memref<4x32x128xf32, #tpu.memory_space<vmem>>, vector<1x32x128xf32>
    %98 = vector.shape_cast %97 : vector<1x32x128xf32> to vector<32x128xf32>
    %99 = vector.shape_cast %96 : vector<32x128xf32> to vector<1x32x128xf32>
    tpu.vector_store %arg5[%c1_64, %c0_65, %c0_66], %99 {strides = array<i32>} : memref<4x32x128xf32, #tpu.memory_space<vmem>>, vector<1x32x128xf32>,
    %c2_67 = arith.constant 2 : index
    %c0_68 = arith.constant 0 : index
    %c0_69 = arith.constant 0 : index
    %100 = vector.load %arg5[%c2_67, %c0_68, %c0_69] : memref<4x32x128xf32, #tpu.memory_space<vmem>>, vector<1x32x128xf32>
    %101 = vector.shape_cast %100 : vector<1x32x128xf32> to vector<32x128xf32>
    %102 = vector.broadcast %74 : vector<1x128xf32> to vector<32x128xf32>
    %103 = arith.mulf %101, %102 : vector<32x128xf32>
    %104 = vector.broadcast %77 : vector<1x128xf32> to vector<32x128xf32>
    %105 = arith.addf %103, %104 : vector<32x128xf32>
    %cst_70 = arith.constant 0.000000e+00 : f32
    %106 = vector.broadcast %cst_70 : f32 to vector<32x128xf32>
    %107 = arith.maximumf %105, %106 : vector<32x128xf32>
    %c2_71 = arith.constant 2 : index
    %c0_72 = arith.constant 0 : index
    %c0_73 = arith.constant 0 : index
    %108 = vector.load %arg5[%c2_71, %c0_72, %c0_73] : memref<4x32x128xf32, #tpu.memory_space<vmem>>, vector<1x32x128xf32>
    %109 = vector.shape_cast %108 : vector<1x32x128xf32> to vector<32x128xf32>
    %110 = vector.shape_cast %107 : vector<32x128xf32> to vector<1x32x128xf32>
    tpu.vector_store %arg5[%c2_71, %c0_72, %c0_73], %110 {strides = array<i32>} : memref<4x32x128xf32, #tpu.memory_space<vmem>>, vector<1x32x128xf32>,
    %c3_74 = arith.constant 3 : index
    %c0_75 = arith.constant 0 : index
    %c0_76 = arith.constant 0 : index
    %111 = vector.load %arg5[%c3_74, %c0_75, %c0_76] : memref<4x32x128xf32, #tpu.memory_space<vmem>>, vector<1x32x128xf32>
    %112 = vector.shape_cast %111 : vector<1x32x128xf32> to vector<32x128xf32>
    %113 = vector.broadcast %74 : vector<1x128xf32> to vector<32x128xf32>
    %114 = arith.mulf %112, %113 : vector<32x128xf32>
    %115 = vector.broadcast %77 : vector<1x128xf32> to vector<32x128xf32>
    %116 = arith.addf %114, %115 : vector<32x128xf32>
    %cst_77 = arith.constant 0.000000e+00 : f32
    %117 = vector.broadcast %cst_77 : f32 to vector<32x128xf32>
    %118 = arith.maximumf %116, %117 : vector<32x128xf32>
    %c3_78 = arith.constant 3 : index
    %c0_79 = arith.constant 0 : index
    %c0_80 = arith.constant 0 : index
    %119 = vector.load %arg5[%c3_78, %c0_79, %c0_80] : memref<4x32x128xf32, #tpu.memory_space<vmem>>, vector<1x32x128xf32>
    %120 = vector.shape_cast %119 : vector<1x32x128xf32> to vector<32x128xf32>
    %121 = vector.shape_cast %118 : vector<32x128xf32> to vector<1x32x128xf32>
    tpu.vector_store %arg5[%c3_78, %c0_79, %c0_80], %121 {strides = array<i32>} : memref<4x32x128xf32, #tpu.memory_space<vmem>>, vector<1x32x128xf32>,
    return
  }
  func.func @transform_0(%arg0: i32) -> (i32, i32, i32) {
    %c0_i32 = arith.constant 0 : i32
    %c0_i32_0 = arith.constant 0 : i32
    %c0_i32_1 = arith.constant 0 : i32
    %c0_i32_2 = arith.constant 0 : i32
    return %c0_i32, %c0_i32_0, %c0_i32_1 : i32, i32, i32
  }
  func.func @transform_1(%arg0: i32) -> (i32, i32, i32) {
    %c0_i32 = arith.constant 0 : i32
    %c0_i32_0 = arith.constant 0 : i32
    %c0_i32_1 = arith.constant 0 : i32
    %c0_i32_2 = arith.constant 0 : i32
    return %c0_i32, %c0_i32_0, %c0_i32_1 : i32, i32, i32
  }
  func.func @transform_2(%arg0: i32) -> (i32, i32) {
    %c0_i32 = arith.constant 0 : i32
    %c0_i32_0 = arith.constant 0 : i32
    %c0_i32_1 = arith.constant 0 : i32
    return %c0_i32, %c0_i32_0 : i32, i32
  }
  func.func @transform_3(%arg0: i32) -> (i32, i32) {
    %c0_i32 = arith.constant 0 : i32
    %c0_i32_0 = arith.constant 0 : i32
    %c0_i32_1 = arith.constant 0 : i32
    return %c0_i32, %c0_i32_0 : i32, i32
  }
  func.func @transform_4(%arg0: i32) -> (i32, i32, i32) {
    %c0_i32 = arith.constant 0 : i32
    %c0_i32_0 = arith.constant 0 : i32
    %c0_i32_1 = arith.constant 0 : i32
    %c0_i32_2 = arith.constant 0 : i32
    return %c0_i32, %c0_i32_0, %c0_i32_1 : i32, i32, i32
  }
}

module attributes {stable_mosaic.version = 11 : i64} {
  func.func @_phase_mm_bn_relu_kernel(%arg0: i32, %arg1: memref<4x128x128xbf16, #tpu.memory_space<vmem>>, %arg2: memref<4x128x128xbf16, #tpu.memory_space<vmem>>, %arg3: memref<1x128xf32, #tpu.memory_space<vmem>>, %arg4: memref<1x128xf32, #tpu.memory_space<vmem>>, %arg5: memref<4x128x128xf32, #tpu.memory_space<vmem>>) attributes {dimension_semantics = [#tpu.dimension_semantics<arbitrary>], iteration_bounds = array<i64: 1>, scalar_prefetch = 0 : i64, scratch_operands = 0 : i64, tpu.core_type = #tpu.core_type<tc>, window_params = [{pipeline_mode = #tpu.pipeline_mode<synchronous>, transform_indices = @transform_0, window_bounds = array<i64: 4, 128, 128>}, {pipeline_mode = #tpu.pipeline_mode<synchronous>, transform_indices = @transform_1, window_bounds = array<i64: 4, 128, 128>}, {pipeline_mode = #tpu.pipeline_mode<synchronous>, transform_indices = @transform_2, window_bounds = array<i64: 1, 128>}, {pipeline_mode = #tpu.pipeline_mode<synchronous>, transform_indices = @transform_3, window_bounds = array<i64: 1, 128>}, {pipeline_mode = #tpu.pipeline_mode<synchronous>, transform_indices = @transform_4, window_bounds = array<i64: 4, 128, 128>}]} {
    %cst = arith.constant 0.000000e+00 : f32
    %0 = vector.broadcast %cst : f32 to vector<1x128xf32>
    %cst_0 = arith.constant 0.000000e+00 : f32
    %1 = vector.broadcast %cst_0 : f32 to vector<1x128xf32>
    %c0 = arith.constant 0 : index
    %c0_1 = arith.constant 0 : index
    %c0_2 = arith.constant 0 : index
    %2 = vector.load %arg1[%c0, %c0_1, %c0_2] : memref<4x128x128xbf16, #tpu.memory_space<vmem>>, vector<1x128x128xbf16>
    %3 = vector.shape_cast %2 : vector<1x128x128xbf16> to vector<128x128xbf16>
    %c0_3 = arith.constant 0 : index
    %c0_4 = arith.constant 0 : index
    %c0_5 = arith.constant 0 : index
    %4 = vector.load %arg2[%c0_3, %c0_4, %c0_5] : memref<4x128x128xbf16, #tpu.memory_space<vmem>>, vector<1x128x128xbf16>
    %5 = vector.shape_cast %4 : vector<1x128x128xbf16> to vector<128x128xbf16>
    %cst_6 = arith.constant dense<0.000000e+00> : vector<128x128xf32>
    %6 = tpu.matmul %3, %5, %cst_6 {dimension_numbers = #tpu.dot_dimension_numbers<[1], [0], [0], [1], [0, 0, 1, 1], [], []>} : vector<128x128xbf16>, vector<128x128xbf16>, vector<128x128xf32> -> vector<128x128xf32>
    %c0_7 = arith.constant 0 : index
    %c0_8 = arith.constant 0 : index
    %c0_9 = arith.constant 0 : index
    %7 = vector.load %arg5[%c0_7, %c0_8, %c0_9] : memref<4x128x128xf32, #tpu.memory_space<vmem>>, vector<1x128x128xf32>
    %8 = vector.shape_cast %7 : vector<1x128x128xf32> to vector<128x128xf32>
    %9 = vector.shape_cast %6 : vector<128x128xf32> to vector<1x128x128xf32>
    tpu.vector_store %arg5[%c0_7, %c0_8, %c0_9], %9 {strides = array<i32>} : memref<4x128x128xf32, #tpu.memory_space<vmem>>, vector<1x128x128xf32>,
    %cst_10 = arith.constant dense<0.000000e+00> : vector<128xf32>
    %10 = vector.multi_reduction <add>, %6, %cst_10 [0] : vector<128x128xf32> to vector<128xf32>
    %11 = vector.shape_cast %10 : vector<128xf32> to vector<1x128xf32>
    %12 = arith.addf %0, %11 : vector<1x128xf32>
    %13 = arith.mulf %6, %6 : vector<128x128xf32>
    %cst_11 = arith.constant dense<0.000000e+00> : vector<128xf32>
    %14 = vector.multi_reduction <add>, %13, %cst_11 [0] : vector<128x128xf32> to vector<128xf32>
    %15 = vector.shape_cast %14 : vector<128xf32> to vector<1x128xf32>
    %16 = arith.addf %1, %15 : vector<1x128xf32>
    %c1 = arith.constant 1 : index
    %c0_12 = arith.constant 0 : index
    %c0_13 = arith.constant 0 : index
    %17 = vector.load %arg1[%c1, %c0_12, %c0_13] : memref<4x128x128xbf16, #tpu.memory_space<vmem>>, vector<1x128x128xbf16>
    %18 = vector.shape_cast %17 : vector<1x128x128xbf16> to vector<128x128xbf16>
    %c1_14 = arith.constant 1 : index
    %c0_15 = arith.constant 0 : index
    %c0_16 = arith.constant 0 : index
    %19 = vector.load %arg2[%c1_14, %c0_15, %c0_16] : memref<4x128x128xbf16, #tpu.memory_space<vmem>>, vector<1x128x128xbf16>
    %20 = vector.shape_cast %19 : vector<1x128x128xbf16> to vector<128x128xbf16>
    %cst_17 = arith.constant dense<0.000000e+00> : vector<128x128xf32>
    %21 = tpu.matmul %18, %20, %cst_17 {dimension_numbers = #tpu.dot_dimension_numbers<[1], [0], [0], [1], [0, 0, 1, 1], [], []>} : vector<128x128xbf16>, vector<128x128xbf16>, vector<128x128xf32> -> vector<128x128xf32>
    %c1_18 = arith.constant 1 : index
    %c0_19 = arith.constant 0 : index
    %c0_20 = arith.constant 0 : index
    %22 = vector.load %arg5[%c1_18, %c0_19, %c0_20] : memref<4x128x128xf32, #tpu.memory_space<vmem>>, vector<1x128x128xf32>
    %23 = vector.shape_cast %22 : vector<1x128x128xf32> to vector<128x128xf32>
    %24 = vector.shape_cast %21 : vector<128x128xf32> to vector<1x128x128xf32>
    tpu.vector_store %arg5[%c1_18, %c0_19, %c0_20], %24 {strides = array<i32>} : memref<4x128x128xf32, #tpu.memory_space<vmem>>, vector<1x128x128xf32>,
    %cst_21 = arith.constant dense<0.000000e+00> : vector<128xf32>
    %25 = vector.multi_reduction <add>, %21, %cst_21 [0] : vector<128x128xf32> to vector<128xf32>
    %26 = vector.shape_cast %25 : vector<128xf32> to vector<1x128xf32>
    %27 = arith.addf %12, %26 : vector<1x128xf32>
    %28 = arith.mulf %21, %21 : vector<128x128xf32>
    %cst_22 = arith.constant dense<0.000000e+00> : vector<128xf32>
    %29 = vector.multi_reduction <add>, %28, %cst_22 [0] : vector<128x128xf32> to vector<128xf32>
    %30 = vector.shape_cast %29 : vector<128xf32> to vector<1x128xf32>
    %31 = arith.addf %16, %30 : vector<1x128xf32>
    %c2 = arith.constant 2 : index
    %c0_23 = arith.constant 0 : index
    %c0_24 = arith.constant 0 : index
    %32 = vector.load %arg1[%c2, %c0_23, %c0_24] : memref<4x128x128xbf16, #tpu.memory_space<vmem>>, vector<1x128x128xbf16>
    %33 = vector.shape_cast %32 : vector<1x128x128xbf16> to vector<128x128xbf16>
    %c2_25 = arith.constant 2 : index
    %c0_26 = arith.constant 0 : index
    %c0_27 = arith.constant 0 : index
    %34 = vector.load %arg2[%c2_25, %c0_26, %c0_27] : memref<4x128x128xbf16, #tpu.memory_space<vmem>>, vector<1x128x128xbf16>
    %35 = vector.shape_cast %34 : vector<1x128x128xbf16> to vector<128x128xbf16>
    %cst_28 = arith.constant dense<0.000000e+00> : vector<128x128xf32>
    %36 = tpu.matmul %33, %35, %cst_28 {dimension_numbers = #tpu.dot_dimension_numbers<[1], [0], [0], [1], [0, 0, 1, 1], [], []>} : vector<128x128xbf16>, vector<128x128xbf16>, vector<128x128xf32> -> vector<128x128xf32>
    %c2_29 = arith.constant 2 : index
    %c0_30 = arith.constant 0 : index
    %c0_31 = arith.constant 0 : index
    %37 = vector.load %arg5[%c2_29, %c0_30, %c0_31] : memref<4x128x128xf32, #tpu.memory_space<vmem>>, vector<1x128x128xf32>
    %38 = vector.shape_cast %37 : vector<1x128x128xf32> to vector<128x128xf32>
    %39 = vector.shape_cast %36 : vector<128x128xf32> to vector<1x128x128xf32>
    tpu.vector_store %arg5[%c2_29, %c0_30, %c0_31], %39 {strides = array<i32>} : memref<4x128x128xf32, #tpu.memory_space<vmem>>, vector<1x128x128xf32>,
    %cst_32 = arith.constant dense<0.000000e+00> : vector<128xf32>
    %40 = vector.multi_reduction <add>, %36, %cst_32 [0] : vector<128x128xf32> to vector<128xf32>
    %41 = vector.shape_cast %40 : vector<128xf32> to vector<1x128xf32>
    %42 = arith.addf %27, %41 : vector<1x128xf32>
    %43 = arith.mulf %36, %36 : vector<128x128xf32>
    %cst_33 = arith.constant dense<0.000000e+00> : vector<128xf32>
    %44 = vector.multi_reduction <add>, %43, %cst_33 [0] : vector<128x128xf32> to vector<128xf32>
    %45 = vector.shape_cast %44 : vector<128xf32> to vector<1x128xf32>
    %46 = arith.addf %31, %45 : vector<1x128xf32>
    %c3 = arith.constant 3 : index
    %c0_34 = arith.constant 0 : index
    %c0_35 = arith.constant 0 : index
    %47 = vector.load %arg1[%c3, %c0_34, %c0_35] : memref<4x128x128xbf16, #tpu.memory_space<vmem>>, vector<1x128x128xbf16>
    %48 = vector.shape_cast %47 : vector<1x128x128xbf16> to vector<128x128xbf16>
    %c3_36 = arith.constant 3 : index
    %c0_37 = arith.constant 0 : index
    %c0_38 = arith.constant 0 : index
    %49 = vector.load %arg2[%c3_36, %c0_37, %c0_38] : memref<4x128x128xbf16, #tpu.memory_space<vmem>>, vector<1x128x128xbf16>
    %50 = vector.shape_cast %49 : vector<1x128x128xbf16> to vector<128x128xbf16>
    %cst_39 = arith.constant dense<0.000000e+00> : vector<128x128xf32>
    %51 = tpu.matmul %48, %50, %cst_39 {dimension_numbers = #tpu.dot_dimension_numbers<[1], [0], [0], [1], [0, 0, 1, 1], [], []>} : vector<128x128xbf16>, vector<128x128xbf16>, vector<128x128xf32> -> vector<128x128xf32>
    %c3_40 = arith.constant 3 : index
    %c0_41 = arith.constant 0 : index
    %c0_42 = arith.constant 0 : index
    %52 = vector.load %arg5[%c3_40, %c0_41, %c0_42] : memref<4x128x128xf32, #tpu.memory_space<vmem>>, vector<1x128x128xf32>
    %53 = vector.shape_cast %52 : vector<1x128x128xf32> to vector<128x128xf32>
    %54 = vector.shape_cast %51 : vector<128x128xf32> to vector<1x128x128xf32>
    tpu.vector_store %arg5[%c3_40, %c0_41, %c0_42], %54 {strides = array<i32>} : memref<4x128x128xf32, #tpu.memory_space<vmem>>, vector<1x128x128xf32>,
    %cst_43 = arith.constant dense<0.000000e+00> : vector<128xf32>
    %55 = vector.multi_reduction <add>, %51, %cst_43 [0] : vector<128x128xf32> to vector<128xf32>
    %56 = vector.shape_cast %55 : vector<128xf32> to vector<1x128xf32>
    %57 = arith.addf %42, %56 : vector<1x128xf32>
    %58 = arith.mulf %51, %51 : vector<128x128xf32>
    %cst_44 = arith.constant dense<0.000000e+00> : vector<128xf32>
    %59 = vector.multi_reduction <add>, %58, %cst_44 [0] : vector<128x128xf32> to vector<128xf32>
    %60 = vector.shape_cast %59 : vector<128xf32> to vector<1x128xf32>
    %61 = arith.addf %46, %60 : vector<1x128xf32>
    %cst_45 = arith.constant 0.001953125 : f32
    %62 = vector.broadcast %cst_45 : f32 to vector<1x128xf32>
    %63 = arith.mulf %57, %62 : vector<1x128xf32>
    %cst_46 = arith.constant 0.001953125 : f32
    %64 = vector.broadcast %cst_46 : f32 to vector<1x128xf32>
    %65 = arith.mulf %61, %64 : vector<1x128xf32>
    %66 = arith.mulf %63, %63 : vector<1x128xf32>
    %67 = arith.subf %65, %66 : vector<1x128xf32>
    %cst_47 = arith.constant 0.000000e+00 : f32
    %68 = vector.broadcast %cst_47 : f32 to vector<1x128xf32>
    %69 = arith.maximumf %67, %68 : vector<1x128xf32>
    %c0_48 = arith.constant 0 : index
    %c0_49 = arith.constant 0 : index
    %70 = vector.load %arg3[%c0_48, %c0_49] : memref<1x128xf32, #tpu.memory_space<vmem>>, vector<1x128xf32>
    %cst_50 = arith.constant 9.99999974E-6 : f32
    %71 = vector.broadcast %cst_50 : f32 to vector<1x128xf32>
    %72 = arith.addf %69, %71 : vector<1x128xf32>
    %73 = math.rsqrt %72 : vector<1x128xf32>
    %74 = arith.mulf %70, %73 : vector<1x128xf32>
    %c0_51 = arith.constant 0 : index
    %c0_52 = arith.constant 0 : index
    %75 = vector.load %arg4[%c0_51, %c0_52] : memref<1x128xf32, #tpu.memory_space<vmem>>, vector<1x128xf32>
    %76 = arith.mulf %63, %74 : vector<1x128xf32>
    %77 = arith.subf %75, %76 : vector<1x128xf32>
    %c0_53 = arith.constant 0 : index
    %c0_54 = arith.constant 0 : index
    %c0_55 = arith.constant 0 : index
    %78 = vector.load %arg5[%c0_53, %c0_54, %c0_55] : memref<4x128x128xf32, #tpu.memory_space<vmem>>, vector<1x128x128xf32>
    %79 = vector.shape_cast %78 : vector<1x128x128xf32> to vector<128x128xf32>
    %80 = vector.broadcast %74 : vector<1x128xf32> to vector<128x128xf32>
    %81 = arith.mulf %79, %80 : vector<128x128xf32>
    %82 = vector.broadcast %77 : vector<1x128xf32> to vector<128x128xf32>
    %83 = arith.addf %81, %82 : vector<128x128xf32>
    %cst_56 = arith.constant 0.000000e+00 : f32
    %84 = vector.broadcast %cst_56 : f32 to vector<128x128xf32>
    %85 = arith.maximumf %83, %84 : vector<128x128xf32>
    %c0_57 = arith.constant 0 : index
    %c0_58 = arith.constant 0 : index
    %c0_59 = arith.constant 0 : index
    %86 = vector.load %arg5[%c0_57, %c0_58, %c0_59] : memref<4x128x128xf32, #tpu.memory_space<vmem>>, vector<1x128x128xf32>
    %87 = vector.shape_cast %86 : vector<1x128x128xf32> to vector<128x128xf32>
    %88 = vector.shape_cast %85 : vector<128x128xf32> to vector<1x128x128xf32>
    tpu.vector_store %arg5[%c0_57, %c0_58, %c0_59], %88 {strides = array<i32>} : memref<4x128x128xf32, #tpu.memory_space<vmem>>, vector<1x128x128xf32>,
    %c1_60 = arith.constant 1 : index
    %c0_61 = arith.constant 0 : index
    %c0_62 = arith.constant 0 : index
    %89 = vector.load %arg5[%c1_60, %c0_61, %c0_62] : memref<4x128x128xf32, #tpu.memory_space<vmem>>, vector<1x128x128xf32>
    %90 = vector.shape_cast %89 : vector<1x128x128xf32> to vector<128x128xf32>
    %91 = vector.broadcast %74 : vector<1x128xf32> to vector<128x128xf32>
    %92 = arith.mulf %90, %91 : vector<128x128xf32>
    %93 = vector.broadcast %77 : vector<1x128xf32> to vector<128x128xf32>
    %94 = arith.addf %92, %93 : vector<128x128xf32>
    %cst_63 = arith.constant 0.000000e+00 : f32
    %95 = vector.broadcast %cst_63 : f32 to vector<128x128xf32>
    %96 = arith.maximumf %94, %95 : vector<128x128xf32>
    %c1_64 = arith.constant 1 : index
    %c0_65 = arith.constant 0 : index
    %c0_66 = arith.constant 0 : index
    %97 = vector.load %arg5[%c1_64, %c0_65, %c0_66] : memref<4x128x128xf32, #tpu.memory_space<vmem>>, vector<1x128x128xf32>
    %98 = vector.shape_cast %97 : vector<1x128x128xf32> to vector<128x128xf32>
    %99 = vector.shape_cast %96 : vector<128x128xf32> to vector<1x128x128xf32>
    tpu.vector_store %arg5[%c1_64, %c0_65, %c0_66], %99 {strides = array<i32>} : memref<4x128x128xf32, #tpu.memory_space<vmem>>, vector<1x128x128xf32>,
    %c2_67 = arith.constant 2 : index
    %c0_68 = arith.constant 0 : index
    %c0_69 = arith.constant 0 : index
    %100 = vector.load %arg5[%c2_67, %c0_68, %c0_69] : memref<4x128x128xf32, #tpu.memory_space<vmem>>, vector<1x128x128xf32>
    %101 = vector.shape_cast %100 : vector<1x128x128xf32> to vector<128x128xf32>
    %102 = vector.broadcast %74 : vector<1x128xf32> to vector<128x128xf32>
    %103 = arith.mulf %101, %102 : vector<128x128xf32>
    %104 = vector.broadcast %77 : vector<1x128xf32> to vector<128x128xf32>
    %105 = arith.addf %103, %104 : vector<128x128xf32>
    %cst_70 = arith.constant 0.000000e+00 : f32
    %106 = vector.broadcast %cst_70 : f32 to vector<128x128xf32>
    %107 = arith.maximumf %105, %106 : vector<128x128xf32>
    %c2_71 = arith.constant 2 : index
    %c0_72 = arith.constant 0 : index
    %c0_73 = arith.constant 0 : index
    %108 = vector.load %arg5[%c2_71, %c0_72, %c0_73] : memref<4x128x128xf32, #tpu.memory_space<vmem>>, vector<1x128x128xf32>
    %109 = vector.shape_cast %108 : vector<1x128x128xf32> to vector<128x128xf32>
    %110 = vector.shape_cast %107 : vector<128x128xf32> to vector<1x128x128xf32>
    tpu.vector_store %arg5[%c2_71, %c0_72, %c0_73], %110 {strides = array<i32>} : memref<4x128x128xf32, #tpu.memory_space<vmem>>, vector<1x128x128xf32>,
    %c3_74 = arith.constant 3 : index
    %c0_75 = arith.constant 0 : index
    %c0_76 = arith.constant 0 : index
    %111 = vector.load %arg5[%c3_74, %c0_75, %c0_76] : memref<4x128x128xf32, #tpu.memory_space<vmem>>, vector<1x128x128xf32>
    %112 = vector.shape_cast %111 : vector<1x128x128xf32> to vector<128x128xf32>
    %113 = vector.broadcast %74 : vector<1x128xf32> to vector<128x128xf32>
    %114 = arith.mulf %112, %113 : vector<128x128xf32>
    %115 = vector.broadcast %77 : vector<1x128xf32> to vector<128x128xf32>
    %116 = arith.addf %114, %115 : vector<128x128xf32>
    %cst_77 = arith.constant 0.000000e+00 : f32
    %117 = vector.broadcast %cst_77 : f32 to vector<128x128xf32>
    %118 = arith.maximumf %116, %117 : vector<128x128xf32>
    %c3_78 = arith.constant 3 : index
    %c0_79 = arith.constant 0 : index
    %c0_80 = arith.constant 0 : index
    %119 = vector.load %arg5[%c3_78, %c0_79, %c0_80] : memref<4x128x128xf32, #tpu.memory_space<vmem>>, vector<1x128x128xf32>
    %120 = vector.shape_cast %119 : vector<1x128x128xf32> to vector<128x128xf32>
    %121 = vector.shape_cast %118 : vector<128x128xf32> to vector<1x128x128xf32>
    tpu.vector_store %arg5[%c3_78, %c0_79, %c0_80], %121 {strides = array<i32>} : memref<4x128x128xf32, #tpu.memory_space<vmem>>, vector<1x128x128xf32>,
    return
  }
  func.func @transform_0(%arg0: i32) -> (i32, i32, i32) {
    %c0_i32 = arith.constant 0 : i32
    %c0_i32_0 = arith.constant 0 : i32
    %c0_i32_1 = arith.constant 0 : i32
    %c0_i32_2 = arith.constant 0 : i32
    return %c0_i32, %c0_i32_0, %c0_i32_1 : i32, i32, i32
  }
  func.func @transform_1(%arg0: i32) -> (i32, i32, i32) {
    %c0_i32 = arith.constant 0 : i32
    %c0_i32_0 = arith.constant 0 : i32
    %c0_i32_1 = arith.constant 0 : i32
    %c0_i32_2 = arith.constant 0 : i32
    return %c0_i32, %c0_i32_0, %c0_i32_1 : i32, i32, i32
  }
  func.func @transform_2(%arg0: i32) -> (i32, i32) {
    %c0_i32 = arith.constant 0 : i32
    %c0_i32_0 = arith.constant 0 : i32
    %c0_i32_1 = arith.constant 0 : i32
    return %c0_i32, %c0_i32_0 : i32, i32
  }
  func.func @transform_3(%arg0: i32) -> (i32, i32) {
    %c0_i32 = arith.constant 0 : i32
    %c0_i32_0 = arith.constant 0 : i32
    %c0_i32_1 = arith.constant 0 : i32
    return %c0_i32, %c0_i32_0 : i32, i32
  }
  func.func @transform_4(%arg0: i32) -> (i32, i32, i32) {
    %c0_i32 = arith.constant 0 : i32
    %c0_i32_0 = arith.constant 0 : i32
    %c0_i32_1 = arith.constant 0 : i32
    %c0_i32_2 = arith.constant 0 : i32
    return %c0_i32, %c0_i32_0, %c0_i32_1 : i32, i32, i32
  }
}

module attributes {stable_mosaic.version = 11 : i64} {
  func.func @_phase_mm_act_kernel(%arg0: i32, %arg1: memref<1x512x64xbf16, #tpu.memory_space<vmem>>, %arg2: memref<1x64x128xbf16, #tpu.memory_space<vmem>>, %arg3: memref<1x512x128xf32, #tpu.memory_space<vmem>>) attributes {dimension_semantics = [#tpu.dimension_semantics<parallel>], iteration_bounds = array<i64: 4>, scalar_prefetch = 0 : i64, scratch_operands = 0 : i64, tpu.core_type = #tpu.core_type<tc>, window_params = [{transform_indices = @transform_0, window_bounds = array<i64: 1, 512, 64>}, {transform_indices = @transform_1, window_bounds = array<i64: 1, 64, 128>}, {transform_indices = @transform_2, window_bounds = array<i64: 1, 512, 128>}]} {
    %c0 = arith.constant 0 : index
    %c0_0 = arith.constant 0 : index
    %c0_1 = arith.constant 0 : index
    %0 = vector.load %arg1[%c0, %c0_0, %c0_1] : memref<1x512x64xbf16, #tpu.memory_space<vmem>>, vector<1x512x64xbf16>
    %1 = vector.shape_cast %0 : vector<1x512x64xbf16> to vector<512x64xbf16>
    %c0_2 = arith.constant 0 : index
    %c0_3 = arith.constant 0 : index
    %c0_4 = arith.constant 0 : index
    %2 = vector.load %arg2[%c0_2, %c0_3, %c0_4] : memref<1x64x128xbf16, #tpu.memory_space<vmem>>, vector<1x64x128xbf16>
    %3 = vector.shape_cast %2 : vector<1x64x128xbf16> to vector<64x128xbf16>
    %cst = arith.constant dense<0.000000e+00> : vector<512x128xf32>
    %4 = tpu.matmul %1, %3, %cst {dimension_numbers = #tpu.dot_dimension_numbers<[1], [0], [0], [1], [0, 0, 1, 1], [], []>} : vector<512x64xbf16>, vector<64x128xbf16>, vector<512x128xf32> -> vector<512x128xf32>
    %5 = math.tanh %4 : vector<512x128xf32>
    %c0_5 = arith.constant 0 : index
    %c0_6 = arith.constant 0 : index
    %c0_7 = arith.constant 0 : index
    %6 = vector.load %arg3[%c0_5, %c0_6, %c0_7] : memref<1x512x128xf32, #tpu.memory_space<vmem>>, vector<1x512x128xf32>
    %7 = vector.shape_cast %6 : vector<1x512x128xf32> to vector<512x128xf32>
    %8 = vector.shape_cast %5 : vector<512x128xf32> to vector<1x512x128xf32>
    tpu.vector_store %arg3[%c0_5, %c0_6, %c0_7], %8 {strides = array<i32>} : memref<1x512x128xf32, #tpu.memory_space<vmem>>, vector<1x512x128xf32>,
    return
  }
  func.func @transform_0(%arg0: i32) -> (i32, i32, i32) {
    %c0_i32 = arith.constant 0 : i32
    %c0_i32_0 = arith.constant 0 : i32
    %c0_i32_1 = arith.constant 0 : i32
    return %arg0, %c0_i32, %c0_i32_0 : i32, i32, i32
  }
  func.func @transform_1(%arg0: i32) -> (i32, i32, i32) {
    %c0_i32 = arith.constant 0 : i32
    %c0_i32_0 = arith.constant 0 : i32
    %c0_i32_1 = arith.constant 0 : i32
    return %arg0, %c0_i32, %c0_i32_0 : i32, i32, i32
  }
  func.func @transform_2(%arg0: i32) -> (i32, i32, i32) {
    %c0_i32 = arith.constant 0 : i32
    %c0_i32_0 = arith.constant 0 : i32
    %c0_i32_1 = arith.constant 0 : i32
    return %arg0, %c0_i32, %c0_i32_0 : i32, i32, i32
  }
}

</mosaic_0001>

<llo_original>
// kernel: dc_generator_forward.5
$region0: #{dc_generator_forward.5}
  #allocation0 [shape = 'u32[]', space=smem, size = 0x4, offset = 0x4, fixed_abs, tag = 'smem constant byte address 0x4 - core index']
  #allocation1 [shape = 'u32[72,128]{1,0:T(1,128)}', space=vmem, size = 0x9000, scoped, tag = 'internal scratch']
  %s0 = inlined_call_operand.vmem [shape: bf16[4,32,256], index: 0, kind: input, shape index: {}]
  %s1 = inlined_call_operand.vmem [shape: bf16[4,256,128], index: 1, kind: input, shape index: {}]
  %s2 = inlined_call_operand.vmem [shape: f32[1,128], index: 2, kind: input, shape index: {}]
  %s3 = inlined_call_operand.vmem [shape: f32[1,128], index: 3, kind: input, shape index: {}]
  %s4 = inlined_call_operand.vmem [shape: f32[4,32,128], index: 4, kind: output, shape index: {}]
  %s5 = sld [smem:[#allocation0]]
  $region26: #{dc_generator_forward.5} parent=0
    _
  %s7 = ssub.s32 1, %s5
  %s8 = scalar_select 0, %s7, %s5
  // Predicated region
  $region2: #{dc_generator_forward.5} parent=0 // pred_check
    _
  $region3: #{dc_generator_forward.5} parent=0 // pred_check_branch
    %10 = sbr.rel (0) target = $region5
  $region4: #{dc_generator_forward.5} parent=0 // pred_region
    _
  $region5: #{dc_generator_forward.5} parent=0 // pred_fallthru
    _
  // Predicated region
  $region6: #{dc_generator_forward.5} parent=0 // pred_check
    _
  $region7: #{dc_generator_forward.5} parent=0 // pred_check_branch
    %12 = sbr.rel (0) target = $region9
  $region8: #{dc_generator_forward.5} parent=0 // pred_region
    _
  $region9: #{dc_generator_forward.5} parent=0 // pred_fallthru
    _
  // Predicated region
  $region10: #{dc_generator_forward.5} parent=0 // pred_check
    _
  $region11: #{dc_generator_forward.5} parent=0 // pred_check_branch
    %14 = sbr.rel (0) target = $region13
  $region12: #{dc_generator_forward.5} parent=0 // pred_region
    _
  $region13: #{dc_generator_forward.5} parent=0 // pred_fallthru
    _
  // Predicated region
  $region14: #{dc_generator_forward.5} parent=0 // pred_check
    _
  $region15: #{dc_generator_forward.5} parent=0 // pred_check_branch
    %16 = sbr.rel (0) target = $region17
  $region16: #{dc_generator_forward.5} parent=0 // pred_region
    _
  $region17: #{dc_generator_forward.5} parent=0 // pred_fallthru
    _
  %v17 = vld [vmem:[%s0] sm:$0xff]
  %v18 = vld [vmem:[%s0 + $0x8] sm:$0xff]
  %v19 = vld [vmem:[%s0 + $0x10] sm:$0xff]
  %v20 = vld [vmem:[%s0 + $0x18] sm:$0xff]
  %v21 = vld [vmem:[%s1] sm:$0xf]
  %v22 = vld [vmem:[%s1 + $0x4] sm:$0xf]
  %v23 = vld [vmem:[%s1 + $0x8] sm:$0xf]
  %v24 = vld [vmem:[%s1 + $0xc] sm:$0xf]
  %v25 = vld [vmem:[%s1 + $0x10] sm:$0xf]
  %v26 = vld [vmem:[%s1 + $0x14] sm:$0xf]
  %v27 = vld [vmem:[%s1 + $0x18] sm:$0xf]
  %v28 = vld [vmem:[%s1 + $0x1c] sm:$0xf]
  %v29 = vld [vmem:[%s1 + $0x20] sm:$0xf]
  %v30 = vld [vmem:[%s1 + $0x24] sm:$0xf]
  %v31 = vld [vmem:[%s1 + $0x28] sm:$0xf]
  %v32 = vld [vmem:[%s1 + $0x2c] sm:$0xf]
  %v33 = vld [vmem:[%s1 + $0x30] sm:$0xf]
  %v34 = vld [vmem:[%s1 + $0x34] sm:$0xf]
  %v35 = vld [vmem:[%s1 + $0x38] sm:$0xf]
  %v36 = vld [vmem:[%s1 + $0x3c] sm:$0xf]
  %v37 = vld [vmem:[%s1 + $0x40] sm:$0xf]
  %v38 = vld [vmem:[%s1 + $0x44] sm:$0xf]
  %v39 = vld [vmem:[%s1 + $0x48] sm:$0xf]
  %v40 = vld [vmem:[%s1 + $0x4c] sm:$0xf]
  %v41 = vld [vmem:[%s1 + $0x50] sm:$0xf]
  %v42 = vld [vmem:[%s1 + $0x54] sm:$0xf]
  %v43 = vld [vmem:[%s1 + $0x58] sm:$0xf]
  %v44 = vld [vmem:[%s1 + $0x5c] sm:$0xf]
  %v45 = vld [vmem:[%s1 + $0x60] sm:$0xf]
  %v46 = vld [vmem:[%s1 + $0x64] sm:$0xf]
  %v47 = vld [vmem:[%s1 + $0x68] sm:$0xf]
  %v48 = vld [vmem:[%s1 + $0x6c] sm:$0xf]
  %v49 = vld [vmem:[%s1 + $0x70] sm:$0xf]
  %v50 = vld [vmem:[%s1 + $0x74] sm:$0xf]
  %v51 = vld [vmem:[%s1 + $0x78] sm:$0xf]
  %v52 = vld [vmem:[%s1 + $0x7c] sm:$0xf]
  %v57 = vunpack.c.l.b16 %v17
  %v58 = vunpack.c.h.b16 %v17
  %v59 = vunpack.c.l.b16 %v18
  %v60 = vunpack.c.h.b16 %v18
  %v61 = vunpack.c.l.b16 %v19
  %v62 = vunpack.c.h.b16 %v19
  %v63 = vunpack.c.l.b16 %v20
  %v64 = vunpack.c.h.b16 %v20
  %v65 = vpack.c.b16 %v59, %v57
  %v66 = vpack.c.b16 %v60, %v58
  %v67 = vpack.c.b16 %v63, %v61
  %v68 = vpack.c.b16 %v64, %v62
  %v105 = vunpack.c.l.b16 %v21
  %v106 = vunpack.c.l.b16 %v22
  %v107 = vunpack.c.l.b16 %v23
  %v108 = vunpack.c.l.b16 %v24
  %v109 = vunpack.c.l.b16 %v25
  %v110 = vunpack.c.l.b16 %v26
  %v111 = vunpack.c.l.b16 %v27
  %v112 = vunpack.c.l.b16 %v28
  %v113 = vunpack.c.l.b16 %v29
  %v114 = vunpack.c.l.b16 %v30
  %v115 = vunpack.c.l.b16 %v31
  %v116 = vunpack.c.l.b16 %v32
  %v117 = vunpack.c.l.b16 %v33
  %v118 = vunpack.c.l.b16 %v34
  %v119 = vunpack.c.l.b16 %v35
  %v120 = vunpack.c.l.b16 %v36
  %v121 = vunpack.c.l.b16 %v37
  %v122 = vunpack.c.l.b16 %v38
  %v123 = vunpack.c.l.b16 %v39
  %v124 = vunpack.c.l.b16 %v40
  %v125 = vunpack.c.l.b16 %v41
  %v126 = vunpack.c.l.b16 %v42
  %v127 = vunpack.c.l.b16 %v43
  %v128 = vunpack.c.l.b16 %v44
  %v129 = vunpack.c.l.b16 %v45
  %v130 = vunpack.c.l.b16 %v46
  %v131 = vunpack.c.l.b16 %v47
  %v132 = vunpack.c.l.b16 %v48
  %v133 = vunpack.c.l.b16 %v49
  %v134 = vunpack.c.l.b16 %v50
  %v135 = vunpack.c.l.b16 %v51
  %v136 = vunpack.c.l.b16 %v52
  %v137 = vpack.c.b16 %v106, %v105
  %v138 = vpack.c.b16 %v108, %v107
  %v139 = vpack.c.b16 %v110, %v109
  %v140 = vpack.c.b16 %v112, %v111
  %v141 = vpack.c.b16 %v114, %v113
  %v142 = vpack.c.b16 %v116, %v115
  %v143 = vpack.c.b16 %v118, %v117
  %v144 = vpack.c.b16 %v120, %v119
  %v145 = vpack.c.b16 %v122, %v121
  %v146 = vpack.c.b16 %v124, %v123
  %v147 = vpack.c.b16 %v126, %v125
  %v148 = vpack.c.b16 %v128, %v127
  %v149 = vpack.c.b16 %v130, %v129
  %v150 = vpack.c.b16 %v132, %v131
  %v151 = vpack.c.b16 %v134, %v133
  %v152 = vpack.c.b16 %v136, %v135
  %169 = vmatpush.bf16.msra.mxu0 %v144
  %170 = vmatpush.bf16.msra.mxu0 %v143
  %171 = vmatpush.bf16.msra.mxu0 %v142
  %172 = vmatpush.bf16.msra.mxu0 %v141
  %173 = vmatpush.bf16.msra.mxu0 %v140
  %174 = vmatpush.bf16.msra.mxu0 %v139
  %175 = vmatpush.bf16.msra.mxu0 %v138
  %176 = vmatpush.bf16.msra.mxu0 %v137
  %177 = vmatmul.bf16.gmra.mxu0 %v65
  %v178 = vpop.f32.mrf.mxu0
  %v179 = vadd.f32 0.0, %v178
  %v180 = vpop.f32.mrf.mxu0
  %v181 = vadd.f32 0.0, %v180
  %182 = vmatmul.bf16.gmra.mxu0 %v67
  %v183 = vpop.f32.mrf.mxu0
  %v184 = vadd.f32 0.0, %v183
  %v185 = vpop.f32.mrf.mxu0
  %v186 = vadd.f32 0.0, %v185
  %187 = vdwg.mxu0
  %188 = vmatpush.bf16.msra.mxu0 %v152
  %189 = vmatpush.bf16.msra.mxu0 %v151
  %190 = vmatpush.bf16.msra.mxu0 %v150
  %191 = vmatpush.bf16.msra.mxu0 %v149
  %192 = vmatpush.bf16.msra.mxu0 %v148
  %193 = vmatpush.bf16.msra.mxu0 %v147
  %194 = vmatpush.bf16.msra.mxu0 %v146
  %195 = vmatpush.bf16.msra.mxu0 %v145
  %196 = vmatmul.bf16.gmra.mxu0 %v66
  %v197 = vpop.f32.mrf.mxu0
  %v198 = vadd.f32 %v179, %v197
  %v199 = vpop.f32.mrf.mxu0
  %v200 = vadd.f32 %v181, %v199
  %201 = vmatmul.bf16.gmra.mxu0 %v68
  %v202 = vpop.f32.mrf.mxu0
  %v203 = vadd.f32 %v184, %v202
  %v204 = vpop.f32.mrf.mxu0
  %v205 = vadd.f32 %v186, %v204
  %206 = vdwg.mxu0
  %207 = vst [vmem:[%s4] sm:$0xff] %v198
  %208 = vst [vmem:[%s4 + $0x8] sm:$0xff] %v200
  %209 = vst [vmem:[%s4 + $0x10] sm:$0xff] %v203
  %210 = vst [vmem:[%s4 + $0x18] sm:$0xff] %v205
  %v211 = vadd.f32 %v198, %v200
  %v212 = vadd.f32 %v211, %v203
  %v213 = vadd.f32 %v212, %v205
  %v214 = vrot.slane %v213, 4
  %v215 = vadd.f32 %v213, %v214
  %v216 = vrot.slane %v215, 2
  %v217 = vadd.f32 %v215, %v216
  %v218 = vrot.slane %v217, 1
  %v219 = vadd.f32 %v217, %v218
  %v220 = vadd.f32 %v219, 0.0
  %v221 = vmul.f32 %v198, %v198
  %v222 = vmul.f32 %v200, %v200
  %v223 = vmul.f32 %v203, %v203
  %v224 = vmul.f32 %v205, %v205
  %v225 = vadd.f32 %v221, %v222
  %v226 = vadd.f32 %v225, %v223
  %v227 = vadd.f32 %v226, %v224
  %v228 = vrot.slane %v227, 4
  %v229 = vadd.f32 %v227, %v228
  %v230 = vrot.slane %v229, 2
  %v231 = vadd.f32 %v229, %v230
  %v232 = vrot.slane %v231, 1
  %v233 = vadd.f32 %v231, %v232
  %v234 = vadd.f32 %v233, 0.0
  %s235 = scalar_lea.vmem %s0, 32
  %v236 = vld [vmem:[%s235] sm:$0xff]
  %v237 = vld [vmem:[%s235 + $0x8] sm:$0xff]
  %v238 = vld [vmem:[%s235 + $0x10] sm:$0xff]
  %v239 = vld [vmem:[%s235 + $0x18] sm:$0xff]
  %s240 = scalar_lea.vmem %s1, 128
  %v241 = vld [vmem:[%s240] sm:$0xf]
  %v242 = vld [vmem:[%s240 + $0x4] sm:$0xf]
  %v243 = vld [vmem:[%s240 + $0x8] sm:$0xf]
  %v244 = vld [vmem:[%s240 + $0xc] sm:$0xf]
  %v245 = vld [vmem:[%s240 + $0x10] sm:$0xf]
  %v246 = vld [vmem:[%s240 + $0x14] sm:$0xf]
  %v247 = vld [vmem:[%s240 + $0x18] sm:$0xf]
  %v248 = vld [vmem:[%s240 + $0x1c] sm:$0xf]
  %v249 = vld [vmem:[%s240 + $0x20] sm:$0xf]
  %v250 = vld [vmem:[%s240 + $0x24] sm:$0xf]
  %v251 = vld [vmem:[%s240 + $0x28] sm:$0xf]
  %v252 = vld [vmem:[%s240 + $0x2c] sm:$0xf]
  %v253 = vld [vmem:[%s240 + $0x30] sm:$0xf]
  %v254 = vld [vmem:[%s240 + $0x34] sm:$0xf]
  %v255 = vld [vmem:[%s240 + $0x38] sm:$0xf]
  %v256 = vld [vmem:[%s240 + $0x3c] sm:$0xf]
  %v257 = vld [vmem:[%s240 + $0x40] sm:$0xf]
  %v258 = vld [vmem:[%s240 + $0x44] sm:$0xf]
  %v259 = vld [vmem:[%s240 + $0x48] sm:$0xf]
  %v260 = vld [vmem:[%s240 + $0x4c] sm:$0xf]
  %v261 = vld [vmem:[%s240 + $0x50] sm:$0xf]
  %v262 = vld [vmem:[%s240 + $0x54] sm:$0xf]
  %v263 = vld [vmem:[%s240 + $0x58] sm:$0xf]
  %v264 = vld [vmem:[%s240 + $0x5c] sm:$0xf]
  %v265 = vld [vmem:[%s240 + $0x60] sm:$0xf]
  %v266 = vld [vmem:[%s240 + $0x64] sm:$0xf]
  %v267 = vld [vmem:[%s240 + $0x68] sm:$0xf]
  %v268 = vld [vmem:[%s240 + $0x6c] sm:$0xf]
  %v269 = vld [vmem:[%s240 + $0x70] sm:$0xf]
  %v270 = vld [vmem:[%s240 + $0x74] sm:$0xf]
  %v271 = vld [vmem:[%s240 + $0x78] sm:$0xf]
  %v272 = vld [vmem:[%s240 + $0x7c] sm:$0xf]
  %v277 = vunpack.c.l.b16 %v236
  %v278 = vunpack.c.h.b16 %v236
  %v279 = vunpack.c.l.b16 %v237
  %v280 = vunpack.c.h.b16 %v237
  %v281 = vunpack.c.l.b16 %v238
  %v282 = vunpack.c.h.b16 %v238
  %v283 = vunpack.c.l.b16 %v239
  %v284 = vunpack.c.h.b16 %v239
  %v285 = vpack.c.b16 %v279, %v277
  %v286 = vpack.c.b16 %v280, %v278
  %v287 = vpack.c.b16 %v283, %v281
  %v288 = vpack.c.b16 %v284, %v282
  %v325 = vunpack.c.l.b16 %v241
  %v326 = vunpack.c.l.b16 %v242
  %v327 = vunpack.c.l.b16 %v243
  %v328 = vunpack.c.l.b16 %v244
  %v329 = vunpack.c.l.b16 %v245
  %v330 = vunpack.c.l.b16 %v246
  %v331 = vunpack.c.l.b16 %v247
  %v332 = vunpack.c.l.b16 %v248
  %v333 = vunpack.c.l.b16 %v249
  %v334 = vunpack.c.l.b16 %v250
  %v335 = vunpack.c.l.b16 %v251
  %v336 = vunpack.c.l.b16 %v252
  %v337 = vunpack.c.l.b16 %v253
  %v338 = vunpack.c.l.b16 %v254
  %v339 = vunpack.c.l.b16 %v255
  %v340 = vunpack.c.l.b16 %v256
  %v341 = vunpack.c.l.b16 %v257
  %v342 = vunpack.c.l.b16 %v258
  %v343 = vunpack.c.l.b16 %v259
  %v344 = vunpack.c.l.b16 %v260
  %v345 = vunpack.c.l.b16 %v261
  %v346 = vunpack.c.l.b16 %v262
  %v347 = vunpack.c.l.b16 %v263
  %v348 = vunpack.c.l.b16 %v264
  %v349 = vunpack.c.l.b16 %v265
  %v350 = vunpack.c.l.b16 %v266
  %v351 = vunpack.c.l.b16 %v267
  %v352 = vunpack.c.l.b16 %v268
  %v353 = vunpack.c.l.b16 %v269
  %v354 = vunpack.c.l.b16 %v270
  %v355 = vunpack.c.l.b16 %v271
  %v356 = vunpack.c.l.b16 %v272
  %v357 = vpack.c.b16 %v326, %v325
  %v358 = vpack.c.b16 %v328, %v327
  %v359 = vpack.c.b16 %v330, %v329
  %v360 = vpack.c.b16 %v332, %v331
  %v361 = vpack.c.b16 %v334, %v333
  %v362 = vpack.c.b16 %v336, %v335
  %v363 = vpack.c.b16 %v338, %v337
  %v364 = vpack.c.b16 %v340, %v339
  %v365 = vpack.c.b16 %v342, %v341
  %v366 = vpack.c.b16 %v344, %v343
  %v367 = vpack.c.b16 %v346, %v345
  %v368 = vpack.c.b16 %v348, %v347
  %v369 = vpack.c.b16 %v350, %v349
  %v370 = vpack.c.b16 %v352, %v351
  %v371 = vpack.c.b16 %v354, %v353
  %v372 = vpack.c.b16 %v356, %v355
  %389 = vmatpush.bf16.msra.mxu0 %v364
  %390 = vmatpush.bf16.msra.mxu0 %v363
  %391 = vmatpush.bf16.msra.mxu0 %v362
  %392 = vmatpush.bf16.msra.mxu0 %v361
  %393 = vmatpush.bf16.msra.mxu0 %v360
  %394 = vmatpush.bf16.msra.mxu0 %v359
  %395 = vmatpush.bf16.msra.mxu0 %v358
  %396 = vmatpush.bf16.msra.mxu0 %v357
  %397 = vmatmul.bf16.gmra.mxu0 %v285
  %v398 = vpop.f32.mrf.mxu0
  %v399 = vadd.f32 0.0, %v398
  %v400 = vpop.f32.mrf.mxu0
  %v401 = vadd.f32 0.0, %v400
  %402 = vmatmul.bf16.gmra.mxu0 %v287
  %v403 = vpop.f32.mrf.mxu0
  %v404 = vadd.f32 0.0, %v403
  %v405 = vpop.f32.mrf.mxu0
  %v406 = vadd.f32 0.0, %v405
  %407 = vdwg.mxu0
  %408 = vmatpush.bf16.msra.mxu0 %v372
  %409 = vmatpush.bf16.msra.mxu0 %v371
  %410 = vmatpush.bf16.msra.mxu0 %v370
  %411 = vmatpush.bf16.msra.mxu0 %v369
  %412 = vmatpush.bf16.msra.mxu0 %v368
  %413 = vmatpush.bf16.msra.mxu0 %v367
  %414 = vmatpush.bf16.msra.mxu0 %v366
  %415 = vmatpush.bf16.msra.mxu0 %v365
  %416 = vmatmul.bf16.gmra.mxu0 %v286
  %v417 = vpop.f32.mrf.mxu0
  %v418 = vadd.f32 %v399, %v417
  %v419 = vpop.f32.mrf.mxu0
  %v420 = vadd.f32 %v401, %v419
  %421 = vmatmul.bf16.gmra.mxu0 %v288
  %v422 = vpop.f32.mrf.mxu0
  %v423 = vadd.f32 %v404, %v422
  %v424 = vpop.f32.mrf.mxu0
  %v425 = vadd.f32 %v406, %v424
  %426 = vdwg.mxu0
  %s427 = scalar_lea.vmem %s4, 32
  %428 = vst [vmem:[%s427] sm:$0xff] %v418
  %429 = vst [vmem:[%s427 + $0x8] sm:$0xff] %v420
  %430 = vst [vmem:[%s427 + $0x10] sm:$0xff] %v423
  %431 = vst [vmem:[%s427 + $0x18] sm:$0xff] %v425
  %v432 = vadd.f32 %v418, %v420
  %v433 = vadd.f32 %v432, %v423
  %v434 = vadd.f32 %v433, %v425
  %v435 = vrot.slane %v434, 4
  %v436 = vadd.f32 %v434, %v435
  %v437 = vrot.slane %v436, 2
  %v438 = vadd.f32 %v436, %v437
  %v439 = vrot.slane %v438, 1
  %v440 = vadd.f32 %v438, %v439
  %v441 = vadd.f32 %v220, %v440
  %v442 = vmul.f32 %v418, %v418
  %v443 = vmul.f32 %v420, %v420
  %v444 = vmul.f32 %v423, %v423
  %v445 = vmul.f32 %v425, %v425
  %v446 = vadd.f32 %v442, %v443
  %v447 = vadd.f32 %v446, %v444
  %v448 = vadd.f32 %v447, %v445
  %v449 = vrot.slane %v448, 4
  %v450 = vadd.f32 %v448, %v449
  %v451 = vrot.slane %v450, 2
  %v452 = vadd.f32 %v450, %v451
  %v453 = vrot.slane %v452, 1
  %v454 = vadd.f32 %v452, %v453
  %v455 = vadd.f32 %v234, %v454
  %s456 = scalar_lea.vmem %s0, 64
  %v457 = vld [vmem:[%s456] sm:$0xff]
  %v458 = vld [vmem:[%s456 + $0x8] sm:$0xff]
  %v459 = vld [vmem:[%s456 + $0x10] sm:$0xff]
  %v460 = vld [vmem:[%s456 + $0x18] sm:$0xff]
  %s461 = scalar_lea.vmem %s1, 256
  %v462 = vld [vmem:[%s461] sm:$0xf]
  %v463 = vld [vmem:[%s461 + $0x4] sm:$0xf]
  %v464 = vld [vmem:[%s461 + $0x8] sm:$0xf]
  %v465 = vld [vmem:[%s461 + $0xc] sm:$0xf]
  %v466 = vld [vmem:[%s461 + $0x10] sm:$0xf]
  %v467 = vld [vmem:[%s461 + $0x14] sm:$0xf]
  %v468 = vld [vmem:[%s461 + $0x18] sm:$0xf]
  %v469 = vld [vmem:[%s461 + $0x1c] sm:$0xf]
  %v470 = vld [vmem:[%s461 + $0x20] sm:$0xf]
  %v471 = vld [vmem:[%s461 + $0x24] sm:$0xf]
  %v472 = vld [vmem:[%s461 + $0x28] sm:$0xf]
  %v473 = vld [vmem:[%s461 + $0x2c] sm:$0xf]
  %v474 = vld [vmem:[%s461 + $0x30] sm:$0xf]
  %v475 = vld [vmem:[%s461 + $0x34] sm:$0xf]
  %v476 = vld [vmem:[%s461 + $0x38] sm:$0xf]
  %v477 = vld [vmem:[%s461 + $0x3c] sm:$0xf]
  %v478 = vld [vmem:[%s461 + $0x40] sm:$0xf]
  %v479 = vld [vmem:[%s461 + $0x44] sm:$0xf]
  %v480 = vld [vmem:[%s461 + $0x48] sm:$0xf]
  %v481 = vld [vmem:[%s461 + $0x4c] sm:$0xf]
  %v482 = vld [vmem:[%s461 + $0x50] sm:$0xf]
  %v483 = vld [vmem:[%s461 + $0x54] sm:$0xf]
  %v484 = vld [vmem:[%s461 + $0x58] sm:$0xf]
  %v485 = vld [vmem:[%s461 + $0x5c] sm:$0xf]
  %v486 = vld [vmem:[%s461 + $0x60] sm:$0xf]
  %v487 = vld [vmem:[%s461 + $0x64] sm:$0xf]
  %v488 = vld [vmem:[%s461 + $0x68] sm:$0xf]
  %v489 = vld [vmem:[%s461 + $0x6c] sm:$0xf]
  %v490 = vld [vmem:[%s461 + $0x70] sm:$0xf]
  %v491 = vld [vmem:[%s461 + $0x74] sm:$0xf]
  %v492 = vld [vmem:[%s461 + $0x78] sm:$0xf]
  %v493 = vld [vmem:[%s461 + $0x7c] sm:$0xf]
  %v498 = vunpack.c.l.b16 %v457
  %v499 = vunpack.c.h.b16 %v457
  %v500 = vunpack.c.l.b16 %v458
  %v501 = vunpack.c.h.b16 %v458
  %v502 = vunpack.c.l.b16 %v459
  %v503 = vunpack.c.h.b16 %v459
  %v504 = vunpack.c.l.b16 %v460
  %v505 = vunpack.c.h.b16 %v460
  %v506 = vpack.c.b16 %v500, %v498
  %v507 = vpack.c.b16 %v501, %v499
  %v508 = vpack.c.b16 %v504, %v502
  %v509 = vpack.c.b16 %v505, %v503
  %v546 = vunpack.c.l.b16 %v462
  %v547 = vunpack.c.l.b16 %v463
  %v548 = vunpack.c.l.b16 %v464
  %v549 = vunpack.c.l.b16 %v465
  %v550 = vunpack.c.l.b16 %v466
  %v551 = vunpack.c.l.b16 %v467
  %v552 = vunpack.c.l.b16 %v468
  %v553 = vunpack.c.l.b16 %v469
  %v554 = vunpack.c.l.b16 %v470
  %v555 = vunpack.c.l.b16 %v471
  %v556 = vunpack.c.l.b16 %v472
  %v557 = vunpack.c.l.b16 %v473
  %v558 = vunpack.c.l.b16 %v474
  %v559 = vunpack.c.l.b16 %v475
  %v560 = vunpack.c.l.b16 %v476
  %v561 = vunpack.c.l.b16 %v477
  %v562 = vunpack.c.l.b16 %v478
  %v563 = vunpack.c.l.b16 %v479
  %v564 = vunpack.c.l.b16 %v480
  %v565 = vunpack.c.l.b16 %v481
  %v566 = vunpack.c.l.b16 %v482
  %v567 = vunpack.c.l.b16 %v483
  %v568 = vunpack.c.l.b16 %v484
  %v569 = vunpack.c.l.b16 %v485
  %v570 = vunpack.c.l.b16 %v486
  %v571 = vunpack.c.l.b16 %v487
  %v572 = vunpack.c.l.b16 %v488
  %v573 = vunpack.c.l.b16 %v489
  %v574 = vunpack.c.l.b16 %v490
  %v575 = vunpack.c.l.b16 %v491
  %v576 = vunpack.c.l.b16 %v492
  %v577 = vunpack.c.l.b16 %v493
  %v578 = vpack.c.b16 %v547, %v546
  %v579 = vpack.c.b16 %v549, %v548
  %v580 = vpack.c.b16 %v551, %v550
  %v581 = vpack.c.b16 %v553, %v552
  %v582 = vpack.c.b16 %v555, %v554
  %v583 = vpack.c.b16 %v557, %v556
  %v584 = vpack.c.b16 %v559, %v558
  %v585 = vpack.c.b16 %v561, %v560
  %v586 = vpack.c.b16 %v563, %v562
  %v587 = vpack.c.b16 %v565, %v564
  %v588 = vpack.c.b16 %v567, %v566
  %v589 = vpack.c.b16 %v569, %v568
  %v590 = vpack.c.b16 %v571, %v570
  %v591 = vpack.c.b16 %v573, %v572
  %v592 = vpack.c.b16 %v575, %v574
  %v593 = vpack.c.b16 %v577, %v576
  %610 = vmatpush.bf16.msra.mxu0 %v585
  %611 = vmatpush.bf16.msra.mxu0 %v584
  %612 = vmatpush.bf16.msra.mxu0 %v583
  %613 = vmatpush.bf16.msra.mxu0 %v582
  %614 = vmatpush.bf16.msra.mxu0 %v581
  %615 = vmatpush.bf16.msra.mxu0 %v580
  %616 = vmatpush.bf16.msra.mxu0 %v579
  %617 = vmatpush.bf16.msra.mxu0 %v578
  %618 = vmatmul.bf16.gmra.mxu0 %v506
  %v619 = vpop.f32.mrf.mxu0
  %v620 = vadd.f32 0.0, %v619
  %v621 = vpop.f32.mrf.mxu0
  %v622 = vadd.f32 0.0, %v621
  %623 = vmatmul.bf16.gmra.mxu0 %v508
  %v624 = vpop.f32.mrf.mxu0
  %v625 = vadd.f32 0.0, %v624
  %v626 = vpop.f32.mrf.mxu0
  %v627 = vadd.f32 0.0, %v626
  %628 = vdwg.mxu0
  %629 = vmatpush.bf16.msra.mxu0 %v593
  %630 = vmatpush.bf16.msra.mxu0 %v592
  %631 = vmatpush.bf16.msra.mxu0 %v591
  %632 = vmatpush.bf16.msra.mxu0 %v590
  %633 = vmatpush.bf16.msra.mxu0 %v589
  %634 = vmatpush.bf16.msra.mxu0 %v588
  %635 = vmatpush.bf16.msra.mxu0 %v587
  %636 = vmatpush.bf16.msra.mxu0 %v586
  %637 = vmatmul.bf16.gmra.mxu0 %v507
  %v638 = vpop.f32.mrf.mxu0
  %v639 = vadd.f32 %v620, %v638
  %v640 = vpop.f32.mrf.mxu0
  %v641 = vadd.f32 %v622, %v640
  %642 = vmatmul.bf16.gmra.mxu0 %v509
  %v643 = vpop.f32.mrf.mxu0
  %v644 = vadd.f32 %v625, %v643
  %v645 = vpop.f32.mrf.mxu0
  %v646 = vadd.f32 %v627, %v645
  %647 = vdwg.mxu0
  %s648 = scalar_lea.vmem %s4, 64
  %649 = vst [vmem:[%s648] sm:$0xff] %v639
  %650 = vst [vmem:[%s648 + $0x8] sm:$0xff] %v641
  %651 = vst [vmem:[%s648 + $0x10] sm:$0xff] %v644
  %652 = vst [vmem:[%s648 + $0x18] sm:$0xff] %v646
  %v653 = vadd.f32 %v639, %v641
  %v654 = vadd.f32 %v653, %v644
  %v655 = vadd.f32 %v654, %v646
  %v656 = vrot.slane %v655, 4
  %v657 = vadd.f32 %v655, %v656
  %v658 = vrot.slane %v657, 2
  %v659 = vadd.f32 %v657, %v658
  %v660 = vrot.slane %v659, 1
  %v661 = vadd.f32 %v659, %v660
  %v662 = vadd.f32 %v441, %v661
  %v663 = vmul.f32 %v639, %v639
  %v664 = vmul.f32 %v641, %v641
  %v665 = vmul.f32 %v644, %v644
  %v666 = vmul.f32 %v646, %v646
  %v667 = vadd.f32 %v663, %v664
  %v668 = vadd.f32 %v667, %v665
  %v669 = vadd.f32 %v668, %v666
  %v670 = vrot.slane %v669, 4
  %v671 = vadd.f32 %v669, %v670
  %v672 = vrot.slane %v671, 2
  %v673 = vadd.f32 %v671, %v672
  %v674 = vrot.slane %v673, 1
  %v675 = vadd.f32 %v673, %v674
  %v676 = vadd.f32 %v455, %v675
  %s677 = scalar_lea.vmem %s0, 96
  %v678 = vld [vmem:[%s677] sm:$0xff]
  %v679 = vld [vmem:[%s677 + $0x8] sm:$0xff]
  %v680 = vld [vmem:[%s677 + $0x10] sm:$0xff]
  %v681 = vld [vmem:[%s677 + $0x18] sm:$0xff]
  %s682 = scalar_lea.vmem %s1, 384
  %v683 = vld [vmem:[%s682] sm:$0xf]
  %v684 = vld [vmem:[%s682 + $0x4] sm:$0xf]
  %v685 = vld [vmem:[%s682 + $0x8] sm:$0xf]
  %v686 = vld [vmem:[%s682 + $0xc] sm:$0xf]
  %v687 = vld [vmem:[%s682 + $0x10] sm:$0xf]
  %v688 = vld [vmem:[%s682 + $0x14] sm:$0xf]
  %v689 = vld [vmem:[%s682 + $0x18] sm:$0xf]
  %v690 = vld [vmem:[%s682 + $0x1c] sm:$0xf]
  %v691 = vld [vmem:[%s682 + $0x20] sm:$0xf]
  %v692 = vld [vmem:[%s682 + $0x24] sm:$0xf]
  %v693 = vld [vmem:[%s682 + $0x28] sm:$0xf]
  %v694 = vld [vmem:[%s682 + $0x2c] sm:$0xf]
  %v695 = vld [vmem:[%s682 + $0x30] sm:$0xf]
  %v696 = vld [vmem:[%s682 + $0x34] sm:$0xf]
  %v697 = vld [vmem:[%s682 + $0x38] sm:$0xf]
  %v698 = vld [vmem:[%s682 + $0x3c] sm:$0xf]
  %v699 = vld [vmem:[%s682 + $0x40] sm:$0xf]
  %v700 = vld [vmem:[%s682 + $0x44] sm:$0xf]
  %v701 = vld [vmem:[%s682 + $0x48] sm:$0xf]
  %v702 = vld [vmem:[%s682 + $0x4c] sm:$0xf]
  %v703 = vld [vmem:[%s682 + $0x50] sm:$0xf]
  %v704 = vld [vmem:[%s682 + $0x54] sm:$0xf]
  %v705 = vld [vmem:[%s682 + $0x58] sm:$0xf]
  %v706 = vld [vmem:[%s682 + $0x5c] sm:$0xf]
  %v707 = vld [vmem:[%s682 + $0x60] sm:$0xf]
  %v708 = vld [vmem:[%s682 + $0x64] sm:$0xf]
  %v709 = vld [vmem:[%s682 + $0x68] sm:$0xf]
  %v710 = vld [vmem:[%s682 + $0x6c] sm:$0xf]
  %v711 = vld [vmem:[%s682 + $0x70] sm:$0xf]
  %v712 = vld [vmem:[%s682 + $0x74] sm:$0xf]
  %v713 = vld [vmem:[%s682 + $0x78] sm:$0xf]
  %v714 = vld [vmem:[%s682 + $0x7c] sm:$0xf]
  %v719 = vunpack.c.l.b16 %v678
  %v720 = vunpack.c.h.b16 %v678
  %v721 = vunpack.c.l.b16 %v679
  %v722 = vunpack.c.h.b16 %v679
  %v723 = vunpack.c.l.b16 %v680
  %v724 = vunpack.c.h.b16 %v680
  %v725 = vunpack.c.l.b16 %v681
  %v726 = vunpack.c.h.b16 %v681
  %v727 = vpack.c.b16 %v721, %v719
  %v728 = vpack.c.b16 %v722, %v720
  %v729 = vpack.c.b16 %v725, %v723
  %v730 = vpack.c.b16 %v726, %v724
  %v767 = vunpack.c.l.b16 %v683
  %v768 = vunpack.c.l.b16 %v684
  %v769 = vunpack.c.l.b16 %v685
  %v770 = vunpack.c.l.b16 %v686
  %v771 = vunpack.c.l.b16 %v687
  %v772 = vunpack.c.l.b16 %v688
  %v773 = vunpack.c.l.b16 %v689
  %v774 = vunpack.c.l.b16 %v690
  %v775 = vunpack.c.l.b16 %v691
  %v776 = vunpack.c.l.b16 %v692
  %v777 = vunpack.c.l.b16 %v693
  %v778 = vunpack.c.l.b16 %v694
  %v779 = vunpack.c.l.b16 %v695
  %v780 = vunpack.c.l.b16 %v696
  %v781 = vunpack.c.l.b16 %v697
  %v782 = vunpack.c.l.b16 %v698
  %v783 = vunpack.c.l.b16 %v699
  %v784 = vunpack.c.l.b16 %v700
  %v785 = vunpack.c.l.b16 %v701
  %v786 = vunpack.c.l.b16 %v702
  %v787 = vunpack.c.l.b16 %v703
  %v788 = vunpack.c.l.b16 %v704
  %v789 = vunpack.c.l.b16 %v705
  %v790 = vunpack.c.l.b16 %v706
  %v791 = vunpack.c.l.b16 %v707
  %v792 = vunpack.c.l.b16 %v708
  %v793 = vunpack.c.l.b16 %v709
  %v794 = vunpack.c.l.b16 %v710
  %v795 = vunpack.c.l.b16 %v711
  %v796 = vunpack.c.l.b16 %v712
  %v797 = vunpack.c.l.b16 %v713
  %v798 = vunpack.c.l.b16 %v714
  %v799 = vpack.c.b16 %v768, %v767
  %v800 = vpack.c.b16 %v770, %v769
  %v801 = vpack.c.b16 %v772, %v771
  %v802 = vpack.c.b16 %v774, %v773
  %v803 = vpack.c.b16 %v776, %v775
  %v804 = vpack.c.b16 %v778, %v777
  %v805 = vpack.c.b16 %v780, %v779
  %v806 = vpack.c.b16 %v782, %v781
  %v807 = vpack.c.b16 %v784, %v783
  %v808 = vpack.c.b16 %v786, %v785
  %v809 = vpack.c.b16 %v788, %v787
  %v810 = vpack.c.b16 %v790, %v789
  %v811 = vpack.c.b16 %v792, %v791
  %v812 = vpack.c.b16 %v794, %v793
  %v813 = vpack.c.b16 %v796, %v795
  %v814 = vpack.c.b16 %v798, %v797
  %831 = vmatpush.bf16.msra.mxu0 %v806
  %832 = vmatpush.bf16.msra.mxu0 %v805
  %833 = vmatpush.bf16.msra.mxu0 %v804
  %834 = vmatpush.bf16.msra.mxu0 %v803
  %835 = vmatpush.bf16.msra.mxu0 %v802
  %836 = vmatpush.bf16.msra.mxu0 %v801
  %837 = vmatpush.bf16.msra.mxu0 %v800
  %838 = vmatpush.bf16.msra.mxu0 %v799
  %839 = vmatmul.bf16.gmra.mxu0 %v727
  %v840 = vpop.f32.mrf.mxu0
  %v841 = vadd.f32 0.0, %v840
  %v842 = vpop.f32.mrf.mxu0
  %v843 = vadd.f32 0.0, %v842
  %844 = vmatmul.bf16.gmra.mxu0 %v729
  %v845 = vpop.f32.mrf.mxu0
  %v846 = vadd.f32 0.0, %v845
  %v847 = vpop.f32.mrf.mxu0
  %v848 = vadd.f32 0.0, %v847
  %849 = vdwg.mxu0
  %850 = vmatpush.bf16.msra.mxu0 %v814
  %851 = vmatpush.bf16.msra.mxu0 %v813
  %852 = vmatpush.bf16.msra.mxu0 %v812
  %853 = vmatpush.bf16.msra.mxu0 %v811
  %854 = vmatpush.bf16.msra.mxu0 %v810
  %855 = vmatpush.bf16.msra.mxu0 %v809
  %856 = vmatpush.bf16.msra.mxu0 %v808
  %857 = vmatpush.bf16.msra.mxu0 %v807
  %858 = vmatmul.bf16.gmra.mxu0 %v728
  %v859 = vpop.f32.mrf.mxu0
  %v860 = vadd.f32 %v841, %v859
  %v861 = vpop.f32.mrf.mxu0
  %v862 = vadd.f32 %v843, %v861
  %863 = vmatmul.bf16.gmra.mxu0 %v730
  %v864 = vpop.f32.mrf.mxu0
  %v865 = vadd.f32 %v846, %v864
  %v866 = vpop.f32.mrf.mxu0
  %v867 = vadd.f32 %v848, %v866
  %868 = vdwg.mxu0
  %s869 = scalar_lea.vmem %s4, 96
  %870 = vst [vmem:[%s869] sm:$0xff] %v860
  %871 = vst [vmem:[%s869 + $0x8] sm:$0xff] %v862
  %872 = vst [vmem:[%s869 + $0x10] sm:$0xff] %v865
  %873 = vst [vmem:[%s869 + $0x18] sm:$0xff] %v867
  %v874 = vadd.f32 %v860, %v862
  %v875 = vadd.f32 %v874, %v865
  %v876 = vadd.f32 %v875, %v867
  %v877 = vrot.slane %v876, 4
  %v878 = vadd.f32 %v876, %v877
  %v879 = vrot.slane %v878, 2
  %v880 = vadd.f32 %v878, %v879
  %v881 = vrot.slane %v880, 1
  %v882 = vadd.f32 %v880, %v881
  %v883 = vadd.f32 %v662, %v882
  %v884 = vmul.f32 %v860, %v860
  %v885 = vmul.f32 %v862, %v862
  %v886 = vmul.f32 %v865, %v865
  %v887 = vmul.f32 %v867, %v867
  %v888 = vadd.f32 %v884, %v885
  %v889 = vadd.f32 %v888, %v886
  %v890 = vadd.f32 %v889, %v887
  %v891 = vrot.slane %v890, 4
  %v892 = vadd.f32 %v890, %v891
  %v893 = vrot.slane %v892, 2
  %v894 = vadd.f32 %v892, %v893
  %v895 = vrot.slane %v894, 1
  %v896 = vadd.f32 %v894, %v895
  %v897 = vadd.f32 %v676, %v896
  %v898 = vmul.f32 %v883, 0.0078125
  %v899 = vmul.f32 %v897, 0.0078125
  %v900 = vmul.f32 %v898, %v898
  %v901 = vsub.f32 %v899, %v900
  %v902 = vmax.f32 %v901, 0.0
  %v903 = vld [vmem:[%s2] sm:$0x1]
  %v904 = vadd.f32 %v902, 1e-05
  %v905 = vrsqrt.pop %v904
  %v906 = vmul.f32 %v905, %v904
  %v907 = vmul.f32 %v906, %v905
  %v908 = vmul.f32 0.5, %v907
  %v909 = vsub.f32 1.5, %v908
  %v910 = vmul.f32 %v905, %v909
  %vm911 = vweird.f32 %v904
  %vm912 = vweird.f32 %v905
  %vm913 = vmor %vm911, %vm912
  %v914 = vsel %vm913, %v905, %v910
  %v915 = vmul.f32 %v903, %v914
  %v916 = vld [vmem:[%s3] sm:$0x1]
  %v917 = vmul.f32 %v898, %v915
  %v918 = vsub.f32 %v916, %v917
  %v919 = vld [vmem:[%s4] sm:$0xff]
  %v920 = vld [vmem:[%s4 + $0x8] sm:$0xff]
  %v921 = vld [vmem:[%s4 + $0x10] sm:$0xff]
  %v922 = vld [vmem:[%s4 + $0x18] sm:$0xff]
  %v924 = vperm.slane %v915, 0
  %v926 = vmul.f32 %v919, %v924
  %v927 = vmul.f32 %v920, %v924
  %v928 = vmul.f32 %v921, %v924
  %v929 = vmul.f32 %v922, %v924
  %v931 = vperm.slane %v918, 0
  %v933 = vadd.f32 %v926, %v931
  %v934 = vadd.f32 %v927, %v931
  %v935 = vadd.f32 %v928, %v931
  %v936 = vadd.f32 %v929, %v931
  %v937 = vmax.f32 %v933, 0.0
  %v938 = vmax.f32 %v934, 0.0
  %v939 = vmax.f32 %v935, 0.0
  %v940 = vmax.f32 %v936, 0.0
  %941 = vst [vmem:[%s4] sm:$0xff] %v937
  %942 = vst [vmem:[%s4 + $0x8] sm:$0xff] %v938
  %943 = vst [vmem:[%s4 + $0x10] sm:$0xff] %v939
  %944 = vst [vmem:[%s4 + $0x18] sm:$0xff] %v940
  %v945 = vld [vmem:[%s427] sm:$0xff]
  %v946 = vld [vmem:[%s427 + $0x8] sm:$0xff]
  %v947 = vld [vmem:[%s427 + $0x10] sm:$0xff]
  %v948 = vld [vmem:[%s427 + $0x18] sm:$0xff]
  %v949 = vmul.f32 %v945, %v924
  %v950 = vmul.f32 %v946, %v924
  %v951 = vmul.f32 %v947, %v924
  %v952 = vmul.f32 %v948, %v924
  %v953 = vadd.f32 %v949, %v931
  %v954 = vadd.f32 %v950, %v931
  %v955 = vadd.f32 %v951, %v931
  %v956 = vadd.f32 %v952, %v931
  %v957 = vmax.f32 %v953, 0.0
  %v958 = vmax.f32 %v954, 0.0
  %v959 = vmax.f32 %v955, 0.0
  %v960 = vmax.f32 %v956, 0.0
  %961 = vst [vmem:[%s427] sm:$0xff] %v957
  %962 = vst [vmem:[%s427 + $0x8] sm:$0xff] %v958
  %963 = vst [vmem:[%s427 + $0x10] sm:$0xff] %v959
  %964 = vst [vmem:[%s427 + $0x18] sm:$0xff] %v960
  %v965 = vld [vmem:[%s648] sm:$0xff]
  %v966 = vld [vmem:[%s648 + $0x8] sm:$0xff]
  %v967 = vld [vmem:[%s648 + $0x10] sm:$0xff]
  %v968 = vld [vmem:[%s648 + $0x18] sm:$0xff]
  %v969 = vmul.f32 %v965, %v924
  %v970 = vmul.f32 %v966, %v924
  %v971 = vmul.f32 %v967, %v924
  %v972 = vmul.f32 %v968, %v924
  %v973 = vadd.f32 %v969, %v931
  %v974 = vadd.f32 %v970, %v931
  %v975 = vadd.f32 %v971, %v931
  %v976 = vadd.f32 %v972, %v931
  %v977 = vmax.f32 %v973, 0.0
  %v978 = vmax.f32 %v974, 0.0
  %v979 = vmax.f32 %v975, 0.0
  %v980 = vmax.f32 %v976, 0.0
  %981 = vst [vmem:[%s648] sm:$0xff] %v977
  %982 = vst [vmem:[%s648 + $0x8] sm:$0xff] %v978
  %983 = vst [vmem:[%s648 + $0x10] sm:$0xff] %v979
  %984 = vst [vmem:[%s648 + $0x18] sm:$0xff] %v980
  %v985 = vld [vmem:[%s869] sm:$0xff]
  %v986 = vld [vmem:[%s869 + $0x8] sm:$0xff]
  %v987 = vld [vmem:[%s869 + $0x10] sm:$0xff]
  %v988 = vld [vmem:[%s869 + $0x18] sm:$0xff]
  %v989 = vmul.f32 %v985, %v924
  %v990 = vmul.f32 %v986, %v924
  %v991 = vmul.f32 %v987, %v924
  %v992 = vmul.f32 %v988, %v924
  %v993 = vadd.f32 %v989, %v931
  %v994 = vadd.f32 %v990, %v931
  %v995 = vadd.f32 %v991, %v931
  %v996 = vadd.f32 %v992, %v931
  %v997 = vmax.f32 %v993, 0.0
  %v998 = vmax.f32 %v994, 0.0
  %v999 = vmax.f32 %v995, 0.0
  %v1000 = vmax.f32 %v996, 0.0
  %1001 = vst [vmem:[%s869] sm:$0xff] %v997
  %1002 = vst [vmem:[%s869 + $0x8] sm:$0xff] %v998
  %1003 = vst [vmem:[%s869 + $0x10] sm:$0xff] %v999
  %1004 = vst [vmem:[%s869 + $0x18] sm:$0xff] %v1000
  // Predicated region
  $region18: #{dc_generator_forward.5} parent=0 // pred_check
    _
  $region19: #{dc_generator_forward.5} parent=0 // pred_check_branch
    %1006 = sbr.rel (0) target = $region21
  $region20: #{dc_generator_forward.5} parent=0 // pred_region
    _
  $region21: #{dc_generator_forward.5} parent=0 // pred_fallthru
    _
  // Predicated region
  $region22: #{dc_generator_forward.5} parent=0 // pred_check
    _
  $region23: #{dc_generator_forward.5} parent=0 // pred_check_branch
    %1008 = sbr.rel (0) target = $region25
  $region24: #{dc_generator_forward.5} parent=0 // pred_region
    _
  $region25: #{dc_generator_forward.5} parent=0 // pred_fallthru
    _

// kernel: dc_generator_forward.4
$region0: #{dc_generator_forward.4}
  #allocation0 [shape = 'u32[]', space=smem, size = 0x4, offset = 0x4, fixed_abs, tag = 'smem constant byte address 0x4 - core index']
  #allocation1 [shape = 'u32[72,128]{1,0:T(1,128)}', space=vmem, size = 0x9000, scoped, tag = 'internal scratch']
  %s0 = inlined_call_operand.vmem [shape: bf16[16,2,16], index: 0, kind: input, shape index: {}]
  %s1 = inlined_call_operand.hbm [shape: bf16[16,16,128], index: 1, kind: input, shape index: {}]
  %s2 = inlined_call_operand.vmem [shape: f32[1,128], index: 2, kind: input, shape index: {}]
  %s3 = inlined_call_operand.vmem [shape: f32[1,128], index: 3, kind: input, shape index: {}]
  %s4 = inlined_call_operand.vmem [shape: f32[16,2,128], index: 4, kind: output, shape index: {}]
  %s5 = sld [smem:[#allocation0]]
  $region30: #{dc_generator_forward.4} parent=0
    _
  %s7 = ssub.s32 1, %s5
  %s8 = scalar_select 0, %s7, %s5
  $region1: #{dc_generator_forward.4} parent=0
    #allocation2 [shape = 'u8[65536]{0}', space=vmem, size = 0x10000, scoped, tag = 'input window, operand 1, single buffered']
    #allocation3 [shape = 's32[1]{0}', space=sflag, size = 0x4, scoped, tag = 'scoped memory for dc_generator_forward.4']
    %9 = vsyncpa [#allocation3], 0
    // Predicated region
    $region2: #{dc_generator_forward.4} parent=1 // pred_check
      _
    $region3: #{dc_generator_forward.4} parent=1 // pred_check_branch
      %11 = sbr.rel (0) target = $region5
    $region4: #{dc_generator_forward.4} parent=1 // pred_region
      _
    $region5: #{dc_generator_forward.4} parent=1 // pred_fallthru
      _
    // Predicated region
    $region6: #{dc_generator_forward.4} parent=1 // pred_check
      _
    $region7: #{dc_generator_forward.4} parent=1 // pred_check_branch
      %13 = sbr.rel (0) target = $region9
    $region8: #{dc_generator_forward.4} parent=1 // pred_region
      %15 = vsyncadd [#allocation3], 0
      %s16 = sshll.u32 %s1, 4
      %s17 = int_to_ptr.hbm [resolvable:$true] %s16
      %s18 = sshll.u32 [#allocation2], 4
      %s19 = int_to_ptr.vmem [resolvable:$true] %s18
      %24 = dma.hbm_to_vmem [thread:$0]  %s17, 2048, %s19, [#allocation3], 64, 64, 4
    $region9: #{dc_generator_forward.4} parent=1 // pred_fallthru
      _
    // Predicated region
    $region10: #{dc_generator_forward.4} parent=1 // pred_check
      _
    $region11: #{dc_generator_forward.4} parent=1 // pred_check_branch
      %26 = sbr.rel (0) target = $region13
    $region12: #{dc_generator_forward.4} parent=1 // pred_region
      _
    $region13: #{dc_generator_forward.4} parent=1 // pred_fallthru
      _
    // Predicated region
    $region14: #{dc_generator_forward.4} parent=1 // pred_check
      _
    $region15: #{dc_generator_forward.4} parent=1 // pred_check_branch
      %28 = sbr.rel (0) target = $region17
    $region16: #{dc_generator_forward.4} parent=1 // pred_region
      _
    $region17: #{dc_generator_forward.4} parent=1 // pred_fallthru
      _
    // Predicated region
    $region18: #{dc_generator_forward.4} parent=1 // pred_check
      _
    $region19: #{dc_generator_forward.4} parent=1 // pred_check_branch
      %30 = sbr.rel (0) target = $region21
    $region20: #{dc_generator_forward.4} parent=1 // pred_region
      %32 = dma.done [#allocation3], 2048
    $region21: #{dc_generator_forward.4} parent=1 // pred_fallthru
      _
    %v34 = vld [vmem:[%s0] sm:$0x1]
    %v35 = vld [vmem:[#allocation2] sm:$0xf]
    %v36 = vld [vmem:[#allocation2 + $0x4] sm:$0xf]
    %v39 = vunpack.c.l.b16 %v35
    %v40 = vunpack.c.l.b16 %v36
    %v41 = vpack.c.b16 %v40, %v39
    %vm43 = vcmask 130048
    %v45 = vsel %vm43, %v34, 0
    %47 = vmatpush.bf16.msra.mxu0 0
    %48 = vmatpush.bf16.msra.mxu0 0
    %49 = vmatpush.bf16.msra.mxu0 0
    %50 = vmatpush.bf16.msra.mxu0 0
    %51 = vmatpush.bf16.msra.mxu0 0
    %52 = vmatpush.bf16.msra.mxu0 0
    %53 = vmatpush.bf16.msra.mxu0 0
    %54 = vmatpush.bf16.msra.mxu0 %v41
    %55 = vmatmul.bf16.gmra.mxu0 %v45
    %v56 = vpop.f32.mrf.mxu0
    %v57 = vadd.f32 0.0, %v56
    %v58 = vpop.f32.mrf.mxu0
    %59 = vdwg.mxu0
    %60 = vst [vmem:[%s4] sm:$0x3] %v57
    %vm61 = vcmask 1041408
    %v62 = vsel %vm61, %v57, 0.0
    %v63 = vrot.slane %v62, 4
    %v64 = vadd.f32 %v62, %v63
    %v65 = vrot.slane %v64, 2
    %v66 = vadd.f32 %v64, %v65
    %v67 = vrot.slane %v66, 1
    %v68 = vadd.f32 %v66, %v67
    %v69 = vadd.f32 %v68, 0.0
    %v70 = vmul.f32 %v57, %v57
    %v71 = vsel %vm61, %v70, 0.0
    %v72 = vrot.slane %v71, 4
    %v73 = vadd.f32 %v71, %v72
    %v74 = vrot.slane %v73, 2
    %v75 = vadd.f32 %v73, %v74
    %v76 = vrot.slane %v75, 1
    %v77 = vadd.f32 %v75, %v76
    %v78 = vadd.f32 %v77, 0.0
    %s79 = scalar_lea.vmem %s0, 1
    %v80 = vld [vmem:[%s79] sm:$0x1]
    %s81 = scalar_lea.vmem [#allocation2], 8
    %v82 = vld [vmem:[%s81] sm:$0xf]
    %v83 = vld [vmem:[%s81 + $0x4] sm:$0xf]
    %v86 = vunpack.c.l.b16 %v82
    %v87 = vunpack.c.l.b16 %v83
    %v88 = vpack.c.b16 %v87, %v86
    %v91 = vsel %vm43, %v80, 0
    %93 = vmatpush.bf16.msra.mxu0 0
    %94 = vmatpush.bf16.msra.mxu0 0
    %95 = vmatpush.bf16.msra.mxu0 0
    %96 = vmatpush.bf16.msra.mxu0 0
    %97 = vmatpush.bf16.msra.mxu0 0
    %98 = vmatpush.bf16.msra.mxu0 0
    %99 = vmatpush.bf16.msra.mxu0 0
    %100 = vmatpush.bf16.msra.mxu0 %v88
    %101 = vmatmul.bf16.gmra.mxu0 %v91
    %v102 = vpop.f32.mrf.mxu0
    %v103 = vadd.f32 0.0, %v102
    %v104 = vpop.f32.mrf.mxu0
    %105 = vdwg.mxu0
    %s106 = scalar_lea.vmem %s4, 2
    %107 = vst [vmem:[%s106] sm:$0x3] %v103
    %v108 = vsel %vm61, %v103, 0.0
    %v109 = vrot.slane %v108, 4
    %v110 = vadd.f32 %v108, %v109
    %v111 = vrot.slane %v110, 2
    %v112 = vadd.f32 %v110, %v111
    %v113 = vrot.slane %v112, 1
    %v114 = vadd.f32 %v112, %v113
    %v115 = vadd.f32 %v69, %v114
    %v116 = vmul.f32 %v103, %v103
    %v117 = vsel %vm61, %v116, 0.0
    %v118 = vrot.slane %v117, 4
    %v119 = vadd.f32 %v117, %v118
    %v120 = vrot.slane %v119, 2
    %v121 = vadd.f32 %v119, %v120
    %v122 = vrot.slane %v121, 1
    %v123 = vadd.f32 %v121, %v122
    %v124 = vadd.f32 %v78, %v123
    %s125 = scalar_lea.vmem %s0, 2
    %v126 = vld [vmem:[%s125] sm:$0x1]
    %s127 = scalar_lea.vmem [#allocation2], 16
    %v128 = vld [vmem:[%s127] sm:$0xf]
    %v129 = vld [vmem:[%s127 + $0x4] sm:$0xf]
    %v132 = vunpack.c.l.b16 %v128
    %v133 = vunpack.c.l.b16 %v129
    %v134 = vpack.c.b16 %v133, %v132
    %v137 = vsel %vm43, %v126, 0
    %139 = vmatpush.bf16.msra.mxu0 0
    %140 = vmatpush.bf16.msra.mxu0 0
    %141 = vmatpush.bf16.msra.mxu0 0
    %142 = vmatpush.bf16.msra.mxu0 0
    %143 = vmatpush.bf16.msra.mxu0 0
    %144 = vmatpush.bf16.msra.mxu0 0
    %145 = vmatpush.bf16.msra.mxu0 0
    %146 = vmatpush.bf16.msra.mxu0 %v134
    %147 = vmatmul.bf16.gmra.mxu0 %v137
    %v148 = vpop.f32.mrf.mxu0
    %v149 = vadd.f32 0.0, %v148
    %v150 = vpop.f32.mrf.mxu0
    %151 = vdwg.mxu0
    %s152 = scalar_lea.vmem %s4, 4
    %153 = vst [vmem:[%s152] sm:$0x3] %v149
    %v154 = vsel %vm61, %v149, 0.0
    %v155 = vrot.slane %v154, 4
    %v156 = vadd.f32 %v154, %v155
    %v157 = vrot.slane %v156, 2
    %v158 = vadd.f32 %v156, %v157
    %v159 = vrot.slane %v158, 1
    %v160 = vadd.f32 %v158, %v159
    %v161 = vadd.f32 %v115, %v160
    %v162 = vmul.f32 %v149, %v149
    %v163 = vsel %vm61, %v162, 0.0
    %v164 = vrot.slane %v163, 4
    %v165 = vadd.f32 %v163, %v164
    %v166 = vrot.slane %v165, 2
    %v167 = vadd.f32 %v165, %v166
    %v168 = vrot.slane %v167, 1
    %v169 = vadd.f32 %v167, %v168
    %v170 = vadd.f32 %v124, %v169
    %s171 = scalar_lea.vmem %s0, 3
    %v172 = vld [vmem:[%s171] sm:$0x1]
    %s173 = scalar_lea.vmem [#allocation2], 24
    %v174 = vld [vmem:[%s173] sm:$0xf]
    %v175 = vld [vmem:[%s173 + $0x4] sm:$0xf]
    %v178 = vunpack.c.l.b16 %v174
    %v179 = vunpack.c.l.b16 %v175
    %v180 = vpack.c.b16 %v179, %v178
    %v183 = vsel %vm43, %v172, 0
    %185 = vmatpush.bf16.msra.mxu0 0
    %186 = vmatpush.bf16.msra.mxu0 0
    %187 = vmatpush.bf16.msra.mxu0 0
    %188 = vmatpush.bf16.msra.mxu0 0
    %189 = vmatpush.bf16.msra.mxu0 0
    %190 = vmatpush.bf16.msra.mxu0 0
    %191 = vmatpush.bf16.msra.mxu0 0
    %192 = vmatpush.bf16.msra.mxu0 %v180
    %193 = vmatmul.bf16.gmra.mxu0 %v183
    %v194 = vpop.f32.mrf.mxu0
    %v195 = vadd.f32 0.0, %v194
    %v196 = vpop.f32.mrf.mxu0
    %197 = vdwg.mxu0
    %s198 = scalar_lea.vmem %s4, 6
    %199 = vst [vmem:[%s198] sm:$0x3] %v195
    %v200 = vsel %vm61, %v195, 0.0
    %v201 = vrot.slane %v200, 4
    %v202 = vadd.f32 %v200, %v201
    %v203 = vrot.slane %v202, 2
    %v204 = vadd.f32 %v202, %v203
    %v205 = vrot.slane %v204, 1
    %v206 = vadd.f32 %v204, %v205
    %v207 = vadd.f32 %v161, %v206
    %v208 = vmul.f32 %v195, %v195
    %v209 = vsel %vm61, %v208, 0.0
    %v210 = vrot.slane %v209, 4
    %v211 = vadd.f32 %v209, %v210
    %v212 = vrot.slane %v211, 2
    %v213 = vadd.f32 %v211, %v212
    %v214 = vrot.slane %v213, 1
    %v215 = vadd.f32 %v213, %v214
    %v216 = vadd.f32 %v170, %v215
    %s217 = scalar_lea.vmem %s0, 4
    %v218 = vld [vmem:[%s217] sm:$0x1]
    %s219 = scalar_lea.vmem [#allocation2], 32
    %v220 = vld [vmem:[%s219] sm:$0xf]
    %v221 = vld [vmem:[%s219 + $0x4] sm:$0xf]
    %v224 = vunpack.c.l.b16 %v220
    %v225 = vunpack.c.l.b16 %v221
    %v226 = vpack.c.b16 %v225, %v224
    %v229 = vsel %vm43, %v218, 0
    %231 = vmatpush.bf16.msra.mxu0 0
    %232 = vmatpush.bf16.msra.mxu0 0
    %233 = vmatpush.bf16.msra.mxu0 0
    %234 = vmatpush.bf16.msra.mxu0 0
    %235 = vmatpush.bf16.msra.mxu0 0
    %236 = vmatpush.bf16.msra.mxu0 0
    %237 = vmatpush.bf16.msra.mxu0 0
    %238 = vmatpush.bf16.msra.mxu0 %v226
    %239 = vmatmul.bf16.gmra.mxu0 %v229
    %v240 = vpop.f32.mrf.mxu0
    %v241 = vadd.f32 0.0, %v240
    %v242 = vpop.f32.mrf.mxu0
    %243 = vdwg.mxu0
    %s244 = scalar_lea.vmem %s4, 8
    %245 = vst [vmem:[%s244] sm:$0x3] %v241
    %v246 = vsel %vm61, %v241, 0.0
    %v247 = vrot.slane %v246, 4
    %v248 = vadd.f32 %v246, %v247
    %v249 = vrot.slane %v248, 2
    %v250 = vadd.f32 %v248, %v249
    %v251 = vrot.slane %v250, 1
    %v252 = vadd.f32 %v250, %v251
    %v253 = vadd.f32 %v207, %v252
    %v254 = vmul.f32 %v241, %v241
    %v255 = vsel %vm61, %v254, 0.0
    %v256 = vrot.slane %v255, 4
    %v257 = vadd.f32 %v255, %v256
    %v258 = vrot.slane %v257, 2
    %v259 = vadd.f32 %v257, %v258
    %v260 = vrot.slane %v259, 1
    %v261 = vadd.f32 %v259, %v260
    %v262 = vadd.f32 %v216, %v261
    %s263 = scalar_lea.vmem %s0, 5
    %v264 = vld [vmem:[%s263] sm:$0x1]
    %s265 = scalar_lea.vmem [#allocation2], 40
    %v266 = vld [vmem:[%s265] sm:$0xf]
    %v267 = vld [vmem:[%s265 + $0x4] sm:$0xf]
    %v270 = vunpack.c.l.b16 %v266
    %v271 = vunpack.c.l.b16 %v267
    %v272 = vpack.c.b16 %v271, %v270
    %v275 = vsel %vm43, %v264, 0
    %277 = vmatpush.bf16.msra.mxu0 0
    %278 = vmatpush.bf16.msra.mxu0 0
    %279 = vmatpush.bf16.msra.mxu0 0
    %280 = vmatpush.bf16.msra.mxu0 0
    %281 = vmatpush.bf16.msra.mxu0 0
    %282 = vmatpush.bf16.msra.mxu0 0
    %283 = vmatpush.bf16.msra.mxu0 0
    %284 = vmatpush.bf16.msra.mxu0 %v272
    %285 = vmatmul.bf16.gmra.mxu0 %v275
    %v286 = vpop.f32.mrf.mxu0
    %v287 = vadd.f32 0.0, %v286
    %v288 = vpop.f32.mrf.mxu0
    %289 = vdwg.mxu0
    %s290 = scalar_lea.vmem %s4, 10
    %291 = vst [vmem:[%s290] sm:$0x3] %v287
    %v292 = vsel %vm61, %v287, 0.0
    %v293 = vrot.slane %v292, 4
    %v294 = vadd.f32 %v292, %v293
    %v295 = vrot.slane %v294, 2
    %v296 = vadd.f32 %v294, %v295
    %v297 = vrot.slane %v296, 1
    %v298 = vadd.f32 %v296, %v297
    %v299 = vadd.f32 %v253, %v298
    %v300 = vmul.f32 %v287, %v287
    %v301 = vsel %vm61, %v300, 0.0
    %v302 = vrot.slane %v301, 4
    %v303 = vadd.f32 %v301, %v302
    %v304 = vrot.slane %v303, 2
    %v305 = vadd.f32 %v303, %v304
    %v306 = vrot.slane %v305, 1
    %v307 = vadd.f32 %v305, %v306
    %v308 = vadd.f32 %v262, %v307
    %s309 = scalar_lea.vmem %s0, 6
    %v310 = vld [vmem:[%s309] sm:$0x1]
    %s311 = scalar_lea.vmem [#allocation2], 48
    %v312 = vld [vmem:[%s311] sm:$0xf]
    %v313 = vld [vmem:[%s311 + $0x4] sm:$0xf]
    %v316 = vunpack.c.l.b16 %v312
    %v317 = vunpack.c.l.b16 %v313
    %v318 = vpack.c.b16 %v317, %v316
    %v321 = vsel %vm43, %v310, 0
    %323 = vmatpush.bf16.msra.mxu0 0
    %324 = vmatpush.bf16.msra.mxu0 0
    %325 = vmatpush.bf16.msra.mxu0 0
    %326 = vmatpush.bf16.msra.mxu0 0
    %327 = vmatpush.bf16.msra.mxu0 0
    %328 = vmatpush.bf16.msra.mxu0 0
    %329 = vmatpush.bf16.msra.mxu0 0
    %330 = vmatpush.bf16.msra.mxu0 %v318
    %331 = vmatmul.bf16.gmra.mxu0 %v321
    %v332 = vpop.f32.mrf.mxu0
    %v333 = vadd.f32 0.0, %v332
    %v334 = vpop.f32.mrf.mxu0
    %335 = vdwg.mxu0
    %s336 = scalar_lea.vmem %s4, 12
    %337 = vst [vmem:[%s336] sm:$0x3] %v333
    %v338 = vsel %vm61, %v333, 0.0
    %v339 = vrot.slane %v338, 4
    %v340 = vadd.f32 %v338, %v339
    %v341 = vrot.slane %v340, 2
    %v342 = vadd.f32 %v340, %v341
    %v343 = vrot.slane %v342, 1
    %v344 = vadd.f32 %v342, %v343
    %v345 = vadd.f32 %v299, %v344
    %v346 = vmul.f32 %v333, %v333
    %v347 = vsel %vm61, %v346, 0.0
    %v348 = vrot.slane %v347, 4
    %v349 = vadd.f32 %v347, %v348
    %v350 = vrot.slane %v349, 2
    %v351 = vadd.f32 %v349, %v350
    %v352 = vrot.slane %v351, 1
    %v353 = vadd.f32 %v351, %v352
    %v354 = vadd.f32 %v308, %v353
    %s355 = scalar_lea.vmem %s0, 7
    %v356 = vld [vmem:[%s355] sm:$0x1]
    %s357 = scalar_lea.vmem [#allocation2], 56
    %v358 = vld [vmem:[%s357] sm:$0xf]
    %v359 = vld [vmem:[%s357 + $0x4] sm:$0xf]
    %v362 = vunpack.c.l.b16 %v358
    %v363 = vunpack.c.l.b16 %v359
    %v364 = vpack.c.b16 %v363, %v362
    %v367 = vsel %vm43, %v356, 0
    %369 = vmatpush.bf16.msra.mxu0 0
    %370 = vmatpush.bf16.msra.mxu0 0
    %371 = vmatpush.bf16.msra.mxu0 0
    %372 = vmatpush.bf16.msra.mxu0 0
    %373 = vmatpush.bf16.msra.mxu0 0
    %374 = vmatpush.bf16.msra.mxu0 0
    %375 = vmatpush.bf16.msra.mxu0 0
    %376 = vmatpush.bf16.msra.mxu0 %v364
    %377 = vmatmul.bf16.gmra.mxu0 %v367
    %v378 = vpop.f32.mrf.mxu0
    %v379 = vadd.f32 0.0, %v378
    %v380 = vpop.f32.mrf.mxu0
    %381 = vdwg.mxu0
    %s382 = scalar_lea.vmem %s4, 14
    %383 = vst [vmem:[%s382] sm:$0x3] %v379
    %v384 = vsel %vm61, %v379, 0.0
    %v385 = vrot.slane %v384, 4
    %v386 = vadd.f32 %v384, %v385
    %v387 = vrot.slane %v386, 2
    %v388 = vadd.f32 %v386, %v387
    %v389 = vrot.slane %v388, 1
    %v390 = vadd.f32 %v388, %v389
    %v391 = vadd.f32 %v345, %v390
    %v392 = vmul.f32 %v379, %v379
    %v393 = vsel %vm61, %v392, 0.0
    %v394 = vrot.slane %v393, 4
    %v395 = vadd.f32 %v393, %v394
    %v396 = vrot.slane %v395, 2
    %v397 = vadd.f32 %v395, %v396
    %v398 = vrot.slane %v397, 1
    %v399 = vadd.f32 %v397, %v398
    %v400 = vadd.f32 %v354, %v399
    %s401 = scalar_lea.vmem %s0, 8
    %v402 = vld [vmem:[%s401] sm:$0x1]
    %s403 = scalar_lea.vmem [#allocation2], 64
    %v404 = vld [vmem:[%s403] sm:$0xf]
    %v405 = vld [vmem:[%s403 + $0x4] sm:$0xf]
    %v408 = vunpack.c.l.b16 %v404
    %v409 = vunpack.c.l.b16 %v405
    %v410 = vpack.c.b16 %v409, %v408
    %v413 = vsel %vm43, %v402, 0
    %415 = vmatpush.bf16.msra.mxu0 0
    %416 = vmatpush.bf16.msra.mxu0 0
    %417 = vmatpush.bf16.msra.mxu0 0
    %418 = vmatpush.bf16.msra.mxu0 0
    %419 = vmatpush.bf16.msra.mxu0 0
    %420 = vmatpush.bf16.msra.mxu0 0
    %421 = vmatpush.bf16.msra.mxu0 0
    %422 = vmatpush.bf16.msra.mxu0 %v410
    %423 = vmatmul.bf16.gmra.mxu0 %v413
    %v424 = vpop.f32.mrf.mxu0
    %v425 = vadd.f32 0.0, %v424
    %v426 = vpop.f32.mrf.mxu0
    %427 = vdwg.mxu0
    %s428 = scalar_lea.vmem %s4, 16
    %429 = vst [vmem:[%s428] sm:$0x3] %v425
    %v430 = vsel %vm61, %v425, 0.0
    %v431 = vrot.slane %v430, 4
    %v432 = vadd.f32 %v430, %v431
    %v433 = vrot.slane %v432, 2
    %v434 = vadd.f32 %v432, %v433
    %v435 = vrot.slane %v434, 1
    %v436 = vadd.f32 %v434, %v435
    %v437 = vadd.f32 %v391, %v436
    %v438 = vmul.f32 %v425, %v425
    %v439 = vsel %vm61, %v438, 0.0
    %v440 = vrot.slane %v439, 4
    %v441 = vadd.f32 %v439, %v440
    %v442 = vrot.slane %v441, 2
    %v443 = vadd.f32 %v441, %v442
    %v444 = vrot.slane %v443, 1
    %v445 = vadd.f32 %v443, %v444
    %v446 = vadd.f32 %v400, %v445
    %s447 = scalar_lea.vmem %s0, 9
    %v448 = vld [vmem:[%s447] sm:$0x1]
    %s449 = scalar_lea.vmem [#allocation2], 72
    %v450 = vld [vmem:[%s449] sm:$0xf]
    %v451 = vld [vmem:[%s449 + $0x4] sm:$0xf]
    %v454 = vunpack.c.l.b16 %v450
    %v455 = vunpack.c.l.b16 %v451
    %v456 = vpack.c.b16 %v455, %v454
    %v459 = vsel %vm43, %v448, 0
    %461 = vmatpush.bf16.msra.mxu0 0
    %462 = vmatpush.bf16.msra.mxu0 0
    %463 = vmatpush.bf16.msra.mxu0 0
    %464 = vmatpush.bf16.msra.mxu0 0
    %465 = vmatpush.bf16.msra.mxu0 0
    %466 = vmatpush.bf16.msra.mxu0 0
    %467 = vmatpush.bf16.msra.mxu0 0
    %468 = vmatpush.bf16.msra.mxu0 %v456
    %469 = vmatmul.bf16.gmra.mxu0 %v459
    %v470 = vpop.f32.mrf.mxu0
    %v471 = vadd.f32 0.0, %v470
    %v472 = vpop.f32.mrf.mxu0
    %473 = vdwg.mxu0
    %s474 = scalar_lea.vmem %s4, 18
    %475 = vst [vmem:[%s474] sm:$0x3] %v471
    %v476 = vsel %vm61, %v471, 0.0
    %v477 = vrot.slane %v476, 4
    %v478 = vadd.f32 %v476, %v477
    %v479 = vrot.slane %v478, 2
    %v480 = vadd.f32 %v478, %v479
    %v481 = vrot.slane %v480, 1
    %v482 = vadd.f32 %v480, %v481
    %v483 = vadd.f32 %v437, %v482
    %v484 = vmul.f32 %v471, %v471
    %v485 = vsel %vm61, %v484, 0.0
    %v486 = vrot.slane %v485, 4
    %v487 = vadd.f32 %v485, %v486
    %v488 = vrot.slane %v487, 2
    %v489 = vadd.f32 %v487, %v488
    %v490 = vrot.slane %v489, 1
    %v491 = vadd.f32 %v489, %v490
    %v492 = vadd.f32 %v446, %v491
    %s493 = scalar_lea.vmem %s0, 10
    %v494 = vld [vmem:[%s493] sm:$0x1]
    %s495 = scalar_lea.vmem [#allocation2], 80
    %v496 = vld [vmem:[%s495] sm:$0xf]
    %v497 = vld [vmem:[%s495 + $0x4] sm:$0xf]
    %v500 = vunpack.c.l.b16 %v496
    %v501 = vunpack.c.l.b16 %v497
    %v502 = vpack.c.b16 %v501, %v500
    %v505 = vsel %vm43, %v494, 0
    %507 = vmatpush.bf16.msra.mxu0 0
    %508 = vmatpush.bf16.msra.mxu0 0
    %509 = vmatpush.bf16.msra.mxu0 0
    %510 = vmatpush.bf16.msra.mxu0 0
    %511 = vmatpush.bf16.msra.mxu0 0
    %512 = vmatpush.bf16.msra.mxu0 0
    %513 = vmatpush.bf16.msra.mxu0 0
    %514 = vmatpush.bf16.msra.mxu0 %v502
    %515 = vmatmul.bf16.gmra.mxu0 %v505
    %v516 = vpop.f32.mrf.mxu0
    %v517 = vadd.f32 0.0, %v516
    %v518 = vpop.f32.mrf.mxu0
    %519 = vdwg.mxu0
    %s520 = scalar_lea.vmem %s4, 20
    %521 = vst [vmem:[%s520] sm:$0x3] %v517
    %v522 = vsel %vm61, %v517, 0.0
    %v523 = vrot.slane %v522, 4
    %v524 = vadd.f32 %v522, %v523
    %v525 = vrot.slane %v524, 2
    %v526 = vadd.f32 %v524, %v525
    %v527 = vrot.slane %v526, 1
    %v528 = vadd.f32 %v526, %v527
    %v529 = vadd.f32 %v483, %v528
    %v530 = vmul.f32 %v517, %v517
    %v531 = vsel %vm61, %v530, 0.0
    %v532 = vrot.slane %v531, 4
    %v533 = vadd.f32 %v531, %v532
    %v534 = vrot.slane %v533, 2
    %v535 = vadd.f32 %v533, %v534
    %v536 = vrot.slane %v535, 1
    %v537 = vadd.f32 %v535, %v536
    %v538 = vadd.f32 %v492, %v537
    %s539 = scalar_lea.vmem %s0, 11
    %v540 = vld [vmem:[%s539] sm:$0x1]
    %s541 = scalar_lea.vmem [#allocation2], 88
    %v542 = vld [vmem:[%s541] sm:$0xf]
    %v543 = vld [vmem:[%s541 + $0x4] sm:$0xf]
    %v546 = vunpack.c.l.b16 %v542
    %v547 = vunpack.c.l.b16 %v543
    %v548 = vpack.c.b16 %v547, %v546
    %v551 = vsel %vm43, %v540, 0
    %553 = vmatpush.bf16.msra.mxu0 0
    %554 = vmatpush.bf16.msra.mxu0 0
    %555 = vmatpush.bf16.msra.mxu0 0
    %556 = vmatpush.bf16.msra.mxu0 0
    %557 = vmatpush.bf16.msra.mxu0 0
    %558 = vmatpush.bf16.msra.mxu0 0
    %559 = vmatpush.bf16.msra.mxu0 0
    %560 = vmatpush.bf16.msra.mxu0 %v548
    %561 = vmatmul.bf16.gmra.mxu0 %v551
    %v562 = vpop.f32.mrf.mxu0
    %v563 = vadd.f32 0.0, %v562
    %v564 = vpop.f32.mrf.mxu0
    %565 = vdwg.mxu0
    %s566 = scalar_lea.vmem %s4, 22
    %567 = vst [vmem:[%s566] sm:$0x3] %v563
    %v568 = vsel %vm61, %v563, 0.0
    %v569 = vrot.slane %v568, 4
    %v570 = vadd.f32 %v568, %v569
    %v571 = vrot.slane %v570, 2
    %v572 = vadd.f32 %v570, %v571
    %v573 = vrot.slane %v572, 1
    %v574 = vadd.f32 %v572, %v573
    %v575 = vadd.f32 %v529, %v574
    %v576 = vmul.f32 %v563, %v563
    %v577 = vsel %vm61, %v576, 0.0
    %v578 = vrot.slane %v577, 4
    %v579 = vadd.f32 %v577, %v578
    %v580 = vrot.slane %v579, 2
    %v581 = vadd.f32 %v579, %v580
    %v582 = vrot.slane %v581, 1
    %v583 = vadd.f32 %v581, %v582
    %v584 = vadd.f32 %v538, %v583
    %s585 = scalar_lea.vmem %s0, 12
    %v586 = vld [vmem:[%s585] sm:$0x1]
    %s587 = scalar_lea.vmem [#allocation2], 96
    %v588 = vld [vmem:[%s587] sm:$0xf]
    %v589 = vld [vmem:[%s587 + $0x4] sm:$0xf]
    %v592 = vunpack.c.l.b16 %v588
    %v593 = vunpack.c.l.b16 %v589
    %v594 = vpack.c.b16 %v593, %v592
    %v597 = vsel %vm43, %v586, 0
    %599 = vmatpush.bf16.msra.mxu0 0
    %600 = vmatpush.bf16.msra.mxu0 0
    %601 = vmatpush.bf16.msra.mxu0 0
    %602 = vmatpush.bf16.msra.mxu0 0
    %603 = vmatpush.bf16.msra.mxu0 0
    %604 = vmatpush.bf16.msra.mxu0 0
    %605 = vmatpush.bf16.msra.mxu0 0
    %606 = vmatpush.bf16.msra.mxu0 %v594
    %607 = vmatmul.bf16.gmra.mxu0 %v597
    %v608 = vpop.f32.mrf.mxu0
    %v609 = vadd.f32 0.0, %v608
    %v610 = vpop.f32.mrf.mxu0
    %611 = vdwg.mxu0
    %s612 = scalar_lea.vmem %s4, 24
    %613 = vst [vmem:[%s612] sm:$0x3] %v609
    %v614 = vsel %vm61, %v609, 0.0
    %v615 = vrot.slane %v614, 4
    %v616 = vadd.f32 %v614, %v615
    %v617 = vrot.slane %v616, 2
    %v618 = vadd.f32 %v616, %v617
    %v619 = vrot.slane %v618, 1
    %v620 = vadd.f32 %v618, %v619
    %v621 = vadd.f32 %v575, %v620
    %v622 = vmul.f32 %v609, %v609
    %v623 = vsel %vm61, %v622, 0.0
    %v624 = vrot.slane %v623, 4
    %v625 = vadd.f32 %v623, %v624
    %v626 = vrot.slane %v625, 2
    %v627 = vadd.f32 %v625, %v626
    %v628 = vrot.slane %v627, 1
    %v629 = vadd.f32 %v627, %v628
    %v630 = vadd.f32 %v584, %v629
    %s631 = scalar_lea.vmem %s0, 13
    %v632 = vld [vmem:[%s631] sm:$0x1]
    %s633 = scalar_lea.vmem [#allocation2], 104
    %v634 = vld [vmem:[%s633] sm:$0xf]
    %v635 = vld [vmem:[%s633 + $0x4] sm:$0xf]
    %v638 = vunpack.c.l.b16 %v634
    %v639 = vunpack.c.l.b16 %v635
    %v640 = vpack.c.b16 %v639, %v638
    %v643 = vsel %vm43, %v632, 0
    %645 = vmatpush.bf16.msra.mxu0 0
    %646 = vmatpush.bf16.msra.mxu0 0
    %647 = vmatpush.bf16.msra.mxu0 0
    %648 = vmatpush.bf16.msra.mxu0 0
    %649 = vmatpush.bf16.msra.mxu0 0
    %650 = vmatpush.bf16.msra.mxu0 0
    %651 = vmatpush.bf16.msra.mxu0 0
    %652 = vmatpush.bf16.msra.mxu0 %v640
    %653 = vmatmul.bf16.gmra.mxu0 %v643
    %v654 = vpop.f32.mrf.mxu0
    %v655 = vadd.f32 0.0, %v654
    %v656 = vpop.f32.mrf.mxu0
    %657 = vdwg.mxu0
    %s658 = scalar_lea.vmem %s4, 26
    %659 = vst [vmem:[%s658] sm:$0x3] %v655
    %v660 = vsel %vm61, %v655, 0.0
    %v661 = vrot.slane %v660, 4
    %v662 = vadd.f32 %v660, %v661
    %v663 = vrot.slane %v662, 2
    %v664 = vadd.f32 %v662, %v663
    %v665 = vrot.slane %v664, 1
    %v666 = vadd.f32 %v664, %v665
    %v667 = vadd.f32 %v621, %v666
    %v668 = vmul.f32 %v655, %v655
    %v669 = vsel %vm61, %v668, 0.0
    %v670 = vrot.slane %v669, 4
    %v671 = vadd.f32 %v669, %v670
    %v672 = vrot.slane %v671, 2
    %v673 = vadd.f32 %v671, %v672
    %v674 = vrot.slane %v673, 1
    %v675 = vadd.f32 %v673, %v674
    %v676 = vadd.f32 %v630, %v675
    %s677 = scalar_lea.vmem %s0, 14
    %v678 = vld [vmem:[%s677] sm:$0x1]
    %s679 = scalar_lea.vmem [#allocation2], 112
    %v680 = vld [vmem:[%s679] sm:$0xf]
    %v681 = vld [vmem:[%s679 + $0x4] sm:$0xf]
    %v684 = vunpack.c.l.b16 %v680
    %v685 = vunpack.c.l.b16 %v681
    %v686 = vpack.c.b16 %v685, %v684
    %v689 = vsel %vm43, %v678, 0
    %691 = vmatpush.bf16.msra.mxu0 0
    %692 = vmatpush.bf16.msra.mxu0 0
    %693 = vmatpush.bf16.msra.mxu0 0
    %694 = vmatpush.bf16.msra.mxu0 0
    %695 = vmatpush.bf16.msra.mxu0 0
    %696 = vmatpush.bf16.msra.mxu0 0
    %697 = vmatpush.bf16.msra.mxu0 0
    %698 = vmatpush.bf16.msra.mxu0 %v686
    %699 = vmatmul.bf16.gmra.mxu0 %v689
    %v700 = vpop.f32.mrf.mxu0
    %v701 = vadd.f32 0.0, %v700
    %v702 = vpop.f32.mrf.mxu0
    %703 = vdwg.mxu0
    %s704 = scalar_lea.vmem %s4, 28
    %705 = vst [vmem:[%s704] sm:$0x3] %v701
    %v706 = vsel %vm61, %v701, 0.0
    %v707 = vrot.slane %v706, 4
    %v708 = vadd.f32 %v706, %v707
    %v709 = vrot.slane %v708, 2
    %v710 = vadd.f32 %v708, %v709
    %v711 = vrot.slane %v710, 1
    %v712 = vadd.f32 %v710, %v711
    %v713 = vadd.f32 %v667, %v712
    %v714 = vmul.f32 %v701, %v701
    %v715 = vsel %vm61, %v714, 0.0
    %v716 = vrot.slane %v715, 4
    %v717 = vadd.f32 %v715, %v716
    %v718 = vrot.slane %v717, 2
    %v719 = vadd.f32 %v717, %v718
    %v720 = vrot.slane %v719, 1
    %v721 = vadd.f32 %v719, %v720
    %v722 = vadd.f32 %v676, %v721
    %s723 = scalar_lea.vmem %s0, 15
    %v724 = vld [vmem:[%s723] sm:$0x1]
    %s725 = scalar_lea.vmem [#allocation2], 120
    %v726 = vld [vmem:[%s725] sm:$0xf]
    %v727 = vld [vmem:[%s725 + $0x4] sm:$0xf]
    %v730 = vunpack.c.l.b16 %v726
    %v731 = vunpack.c.l.b16 %v727
    %v732 = vpack.c.b16 %v731, %v730
    %v735 = vsel %vm43, %v724, 0
    %737 = vmatpush.bf16.msra.mxu0 0
    %738 = vmatpush.bf16.msra.mxu0 0
    %739 = vmatpush.bf16.msra.mxu0 0
    %740 = vmatpush.bf16.msra.mxu0 0
    %741 = vmatpush.bf16.msra.mxu0 0
    %742 = vmatpush.bf16.msra.mxu0 0
    %743 = vmatpush.bf16.msra.mxu0 0
    %744 = vmatpush.bf16.msra.mxu0 %v732
    %745 = vmatmul.bf16.gmra.mxu0 %v735
    %v746 = vpop.f32.mrf.mxu0
    %v747 = vadd.f32 0.0, %v746
    %v748 = vpop.f32.mrf.mxu0
    %749 = vdwg.mxu0
    %s750 = scalar_lea.vmem %s4, 30
    %751 = vst [vmem:[%s750] sm:$0x3] %v747
    %v752 = vsel %vm61, %v747, 0.0
    %v753 = vrot.slane %v752, 4
    %v754 = vadd.f32 %v752, %v753
    %v755 = vrot.slane %v754, 2
    %v756 = vadd.f32 %v754, %v755
    %v757 = vrot.slane %v756, 1
    %v758 = vadd.f32 %v756, %v757
    %v759 = vadd.f32 %v713, %v758
    %v760 = vmul.f32 %v747, %v747
    %v761 = vsel %vm61, %v760, 0.0
    %v762 = vrot.slane %v761, 4
    %v763 = vadd.f32 %v761, %v762
    %v764 = vrot.slane %v763, 2
    %v765 = vadd.f32 %v763, %v764
    %v766 = vrot.slane %v765, 1
    %v767 = vadd.f32 %v765, %v766
    %v768 = vadd.f32 %v722, %v767
    %v769 = vmul.f32 %v759, 0.03125
    %v770 = vmul.f32 %v768, 0.03125
    %v771 = vmul.f32 %v769, %v769
    %v772 = vsub.f32 %v770, %v771
    %v773 = vmax.f32 %v772, 0.0
    %v774 = vld [vmem:[%s2] sm:$0x1]
    %v775 = vadd.f32 %v773, 1e-05
    %v776 = vrsqrt.pop %v775
    %v777 = vmul.f32 %v776, %v775
    %v778 = vmul.f32 %v777, %v776
    %v779 = vmul.f32 0.5, %v778
    %v780 = vsub.f32 1.5, %v779
    %v781 = vmul.f32 %v776, %v780
    %vm782 = vweird.f32 %v775
    %vm783 = vweird.f32 %v776
    %vm784 = vmor %vm782, %vm783
    %v785 = vsel %vm784, %v776, %v781
    %v786 = vmul.f32 %v774, %v785
    %v787 = vld [vmem:[%s3] sm:$0x1]
    %v788 = vmul.f32 %v769, %v786
    %v789 = vsub.f32 %v787, %v788
    %v790 = vld [vmem:[%s4] sm:$0x3]
    %v792 = vperm.slane %v786, 0
    %v794 = vmul.f32 %v790, %v792
    %v796 = vperm.slane %v789, 0
    %v798 = vadd.f32 %v794, %v796
    %v799 = vmax.f32 %v798, 0.0
    %800 = vst [vmem:[%s4] sm:$0x3] %v799
    %v801 = vld [vmem:[%s106] sm:$0x3]
    %v802 = vmul.f32 %v801, %v792
    %v803 = vadd.f32 %v802, %v796
    %v804 = vmax.f32 %v803, 0.0
    %805 = vst [vmem:[%s106] sm:$0x3] %v804
    %v806 = vld [vmem:[%s152] sm:$0x3]
    %v807 = vmul.f32 %v806, %v792
    %v808 = vadd.f32 %v807, %v796
    %v809 = vmax.f32 %v808, 0.0
    %810 = vst [vmem:[%s152] sm:$0x3] %v809
    %v811 = vld [vmem:[%s198] sm:$0x3]
    %v812 = vmul.f32 %v811, %v792
    %v813 = vadd.f32 %v812, %v796
    %v814 = vmax.f32 %v813, 0.0
    %815 = vst [vmem:[%s198] sm:$0x3] %v814
    %v816 = vld [vmem:[%s244] sm:$0x3]
    %v817 = vmul.f32 %v816, %v792
    %v818 = vadd.f32 %v817, %v796
    %v819 = vmax.f32 %v818, 0.0
    %820 = vst [vmem:[%s244] sm:$0x3] %v819
    %v821 = vld [vmem:[%s290] sm:$0x3]
    %v822 = vmul.f32 %v821, %v792
    %v823 = vadd.f32 %v822, %v796
    %v824 = vmax.f32 %v823, 0.0
    %825 = vst [vmem:[%s290] sm:$0x3] %v824
    %v826 = vld [vmem:[%s336] sm:$0x3]
    %v827 = vmul.f32 %v826, %v792
    %v828 = vadd.f32 %v827, %v796
    %v829 = vmax.f32 %v828, 0.0
    %830 = vst [vmem:[%s336] sm:$0x3] %v829
    %v831 = vld [vmem:[%s382] sm:$0x3]
    %v832 = vmul.f32 %v831, %v792
    %v833 = vadd.f32 %v832, %v796
    %v834 = vmax.f32 %v833, 0.0
    %835 = vst [vmem:[%s382] sm:$0x3] %v834
    %v836 = vld [vmem:[%s428] sm:$0x3]
    %v837 = vmul.f32 %v836, %v792
    %v838 = vadd.f32 %v837, %v796
    %v839 = vmax.f32 %v838, 0.0
    %840 = vst [vmem:[%s428] sm:$0x3] %v839
    %v841 = vld [vmem:[%s474] sm:$0x3]
    %v842 = vmul.f32 %v841, %v792
    %v843 = vadd.f32 %v842, %v796
    %v844 = vmax.f32 %v843, 0.0
    %845 = vst [vmem:[%s474] sm:$0x3] %v844
    %v846 = vld [vmem:[%s520] sm:$0x3]
    %v847 = vmul.f32 %v846, %v792
    %v848 = vadd.f32 %v847, %v796
    %v849 = vmax.f32 %v848, 0.0
    %850 = vst [vmem:[%s520] sm:$0x3] %v849
    %v851 = vld [vmem:[%s566] sm:$0x3]
    %v852 = vmul.f32 %v851, %v792
    %v853 = vadd.f32 %v852, %v796
    %v854 = vmax.f32 %v853, 0.0
    %855 = vst [vmem:[%s566] sm:$0x3] %v854
    %v856 = vld [vmem:[%s612] sm:$0x3]
    %v857 = vmul.f32 %v856, %v792
    %v858 = vadd.f32 %v857, %v796
    %v859 = vmax.f32 %v858, 0.0
    %860 = vst [vmem:[%s612] sm:$0x3] %v859
    %v861 = vld [vmem:[%s658] sm:$0x3]
    %v862 = vmul.f32 %v861, %v792
    %v863 = vadd.f32 %v862, %v796
    %v864 = vmax.f32 %v863, 0.0
    %865 = vst [vmem:[%s658] sm:$0x3] %v864
    %v866 = vld [vmem:[%s704] sm:$0x3]
    %v867 = vmul.f32 %v866, %v792
    %v868 = vadd.f32 %v867, %v796
    %v869 = vmax.f32 %v868, 0.0
    %870 = vst [vmem:[%s704] sm:$0x3] %v869
    %v871 = vld [vmem:[%s750] sm:$0x3]
    %v872 = vmul.f32 %v871, %v792
    %v873 = vadd.f32 %v872, %v796
    %v874 = vmax.f32 %v873, 0.0
    %875 = vst [vmem:[%s750] sm:$0x3] %v874
    // Predicated region
    $region22: #{dc_generator_forward.4} parent=1 // pred_check
      _
    $region23: #{dc_generator_forward.4} parent=1 // pred_check_branch
      %877 = sbr.rel (0) target = $region25
    $region24: #{dc_generator_forward.4} parent=1 // pred_region
      _
    $region25: #{dc_generator_forward.4} parent=1 // pred_fallthru
      _
    // Predicated region
    $region26: #{dc_generator_forward.4} parent=1 // pred_check
      _
    $region27: #{dc_generator_forward.4} parent=1 // pred_check_branch
      %879 = sbr.rel (0) target = $region29
    $region28: #{dc_generator_forward.4} parent=1 // pred_region
      _
    $region29: #{dc_generator_forward.4} parent=1 // pred_fallthru
      _
    %880 = vsyncpa [#allocation3], 1

// kernel: dc_generator_forward.6
$region0: #{dc_generator_forward.6}
  #allocation0 [shape = 'u32[]', space=smem, size = 0x4, offset = 0x4, fixed_abs, tag = 'smem constant byte address 0x4 - core index']
  #allocation1 [shape = 'u32[72,128]{1,0:T(1,128)}', space=vmem, size = 0x9000, scoped, tag = 'internal scratch']
  %s0 = inlined_call_operand.vmem [shape: bf16[4,128,128], index: 0, kind: input, shape index: {}]
  %s1 = inlined_call_operand.vmem [shape: bf16[4,128,128], index: 1, kind: input, shape index: {}]
  %s2 = inlined_call_operand.vmem [shape: f32[1,128], index: 2, kind: input, shape index: {}]
  %s3 = inlined_call_operand.vmem [shape: f32[1,128], index: 3, kind: input, shape index: {}]
  %s4 = inlined_call_operand.vmem [shape: f32[4,128,128], index: 4, kind: output, shape index: {}]
  %s5 = sld [smem:[#allocation0]]
  $region26: #{dc_generator_forward.6} parent=0
    _
  %s7 = ssub.s32 1, %s5
  %s8 = scalar_select 0, %s7, %s5
  // Predicated region
  $region2: #{dc_generator_forward.6} parent=0 // pred_check
    _
  $region3: #{dc_generator_forward.6} parent=0 // pred_check_branch
    %10 = sbr.rel (0) target = $region5
  $region4: #{dc_generator_forward.6} parent=0 // pred_region
    _
  $region5: #{dc_generator_forward.6} parent=0 // pred_fallthru
    _
  // Predicated region
  $region6: #{dc_generator_forward.6} parent=0 // pred_check
    _
  $region7: #{dc_generator_forward.6} parent=0 // pred_check_branch
    %12 = sbr.rel (0) target = $region9
  $region8: #{dc_generator_forward.6} parent=0 // pred_region
    _
  $region9: #{dc_generator_forward.6} parent=0 // pred_fallthru
    _
  // Predicated region
  $region10: #{dc_generator_forward.6} parent=0 // pred_check
    _
  $region11: #{dc_generator_forward.6} parent=0 // pred_check_branch
    %14 = sbr.rel (0) target = $region13
  $region12: #{dc_generator_forward.6} parent=0 // pred_region
    _
  $region13: #{dc_generator_forward.6} parent=0 // pred_fallthru
    _
  // Predicated region
  $region14: #{dc_generator_forward.6} parent=0 // pred_check
    _
  $region15: #{dc_generator_forward.6} parent=0 // pred_check_branch
    %16 = sbr.rel (0) target = $region17
  $region16: #{dc_generator_forward.6} parent=0 // pred_region
    _
  $region17: #{dc_generator_forward.6} parent=0 // pred_fallthru
    _
  %v17 = vld [vmem:[%s0] sm:$0xf]
  %v18 = vld [vmem:[%s0 + $0x4] sm:$0xf]
  %v19 = vld [vmem:[%s0 + $0x8] sm:$0xf]
  %v20 = vld [vmem:[%s0 + $0xc] sm:$0xf]
  %v21 = vld [vmem:[%s0 + $0x10] sm:$0xf]
  %v22 = vld [vmem:[%s0 + $0x14] sm:$0xf]
  %v23 = vld [vmem:[%s0 + $0x18] sm:$0xf]
  %v24 = vld [vmem:[%s0 + $0x1c] sm:$0xf]
  %v25 = vld [vmem:[%s0 + $0x20] sm:$0xf]
  %v26 = vld [vmem:[%s0 + $0x24] sm:$0xf]
  %v27 = vld [vmem:[%s0 + $0x28] sm:$0xf]
  %v28 = vld [vmem:[%s0 + $0x2c] sm:$0xf]
  %v29 = vld [vmem:[%s0 + $0x30] sm:$0xf]
  %v30 = vld [vmem:[%s0 + $0x34] sm:$0xf]
  %v31 = vld [vmem:[%s0 + $0x38] sm:$0xf]
  %v32 = vld [vmem:[%s0 + $0x3c] sm:$0xf]
  %v33 = vld [vmem:[%s1] sm:$0xf]
  %v34 = vld [vmem:[%s1 + $0x4] sm:$0xf]
  %v35 = vld [vmem:[%s1 + $0x8] sm:$0xf]
  %v36 = vld [vmem:[%s1 + $0xc] sm:$0xf]
  %v37 = vld [vmem:[%s1 + $0x10] sm:$0xf]
  %v38 = vld [vmem:[%s1 + $0x14] sm:$0xf]
  %v39 = vld [vmem:[%s1 + $0x18] sm:$0xf]
  %v40 = vld [vmem:[%s1 + $0x1c] sm:$0xf]
  %v41 = vld [vmem:[%s1 + $0x20] sm:$0xf]
  %v42 = vld [vmem:[%s1 + $0x24] sm:$0xf]
  %v43 = vld [vmem:[%s1 + $0x28] sm:$0xf]
  %v44 = vld [vmem:[%s1 + $0x2c] sm:$0xf]
  %v45 = vld [vmem:[%s1 + $0x30] sm:$0xf]
  %v46 = vld [vmem:[%s1 + $0x34] sm:$0xf]
  %v47 = vld [vmem:[%s1 + $0x38] sm:$0xf]
  %v48 = vld [vmem:[%s1 + $0x3c] sm:$0xf]
  %v65 = vunpack.c.l.b16 %v17
  %v66 = vunpack.c.l.b16 %v18
  %v67 = vunpack.c.l.b16 %v19
  %v68 = vunpack.c.l.b16 %v20
  %v69 = vunpack.c.l.b16 %v21
  %v70 = vunpack.c.l.b16 %v22
  %v71 = vunpack.c.l.b16 %v23
  %v72 = vunpack.c.l.b16 %v24
  %v73 = vunpack.c.l.b16 %v25
  %v74 = vunpack.c.l.b16 %v26
  %v75 = vunpack.c.l.b16 %v27
  %v76 = vunpack.c.l.b16 %v28
  %v77 = vunpack.c.l.b16 %v29
  %v78 = vunpack.c.l.b16 %v30
  %v79 = vunpack.c.l.b16 %v31
  %v80 = vunpack.c.l.b16 %v32
  %v81 = vpack.c.b16 %v66, %v65
  %v82 = vpack.c.b16 %v68, %v67
  %v83 = vpack.c.b16 %v70, %v69
  %v84 = vpack.c.b16 %v72, %v71
  %v85 = vpack.c.b16 %v74, %v73
  %v86 = vpack.c.b16 %v76, %v75
  %v87 = vpack.c.b16 %v78, %v77
  %v88 = vpack.c.b16 %v80, %v79
  %v113 = vunpack.c.l.b16 %v33
  %v114 = vunpack.c.l.b16 %v34
  %v115 = vunpack.c.l.b16 %v35
  %v116 = vunpack.c.l.b16 %v36
  %v117 = vunpack.c.l.b16 %v37
  %v118 = vunpack.c.l.b16 %v38
  %v119 = vunpack.c.l.b16 %v39
  %v120 = vunpack.c.l.b16 %v40
  %v121 = vunpack.c.l.b16 %v41
  %v122 = vunpack.c.l.b16 %v42
  %v123 = vunpack.c.l.b16 %v43
  %v124 = vunpack.c.l.b16 %v44
  %v125 = vunpack.c.l.b16 %v45
  %v126 = vunpack.c.l.b16 %v46
  %v127 = vunpack.c.l.b16 %v47
  %v128 = vunpack.c.l.b16 %v48
  %v129 = vpack.c.b16 %v114, %v113
  %v130 = vpack.c.b16 %v116, %v115
  %v131 = vpack.c.b16 %v118, %v117
  %v132 = vpack.c.b16 %v120, %v119
  %v133 = vpack.c.b16 %v122, %v121
  %v134 = vpack.c.b16 %v124, %v123
  %v135 = vpack.c.b16 %v126, %v125
  %v136 = vpack.c.b16 %v128, %v127
  %145 = vmatpush.bf16.msra.mxu0 %v136
  %146 = vmatpush.bf16.msra.mxu0 %v135
  %147 = vmatpush.bf16.msra.mxu0 %v134
  %148 = vmatpush.bf16.msra.mxu0 %v133
  %149 = vmatpush.bf16.msra.mxu0 %v132
  %150 = vmatpush.bf16.msra.mxu0 %v131
  %151 = vmatpush.bf16.msra.mxu0 %v130
  %152 = vmatpush.bf16.msra.mxu0 %v129
  %153 = vmatmul.bf16.gmra.mxu0 %v81
  %v154 = vpop.f32.mrf.mxu0
  %v155 = vadd.f32 0.0, %v154
  %v156 = vpop.f32.mrf.mxu0
  %v157 = vadd.f32 0.0, %v156
  %158 = vmatmul.bf16.gmra.mxu0 %v82
  %v159 = vpop.f32.mrf.mxu0
  %v160 = vadd.f32 0.0, %v159
  %v161 = vpop.f32.mrf.mxu0
  %v162 = vadd.f32 0.0, %v161
  %163 = vmatmul.bf16.gmra.mxu0 %v83
  %v164 = vpop.f32.mrf.mxu0
  %v165 = vadd.f32 0.0, %v164
  %v166 = vpop.f32.mrf.mxu0
  %v167 = vadd.f32 0.0, %v166
  %168 = vmatmul.bf16.gmra.mxu0 %v84
  %v169 = vpop.f32.mrf.mxu0
  %v170 = vadd.f32 0.0, %v169
  %v171 = vpop.f32.mrf.mxu0
  %v172 = vadd.f32 0.0, %v171
  %173 = vmatmul.bf16.gmra.mxu0 %v85
  %v174 = vpop.f32.mrf.mxu0
  %v175 = vadd.f32 0.0, %v174
  %v176 = vpop.f32.mrf.mxu0
  %v177 = vadd.f32 0.0, %v176
  %178 = vmatmul.bf16.gmra.mxu0 %v86
  %v179 = vpop.f32.mrf.mxu0
  %v180 = vadd.f32 0.0, %v179
  %v181 = vpop.f32.mrf.mxu0
  %v182 = vadd.f32 0.0, %v181
  %183 = vmatmul.bf16.gmra.mxu0 %v87
  %v184 = vpop.f32.mrf.mxu0
  %v185 = vadd.f32 0.0, %v184
  %v186 = vpop.f32.mrf.mxu0
  %v187 = vadd.f32 0.0, %v186
  %188 = vmatmul.bf16.gmra.mxu0 %v88
  %v189 = vpop.f32.mrf.mxu0
  %v190 = vadd.f32 0.0, %v189
  %v191 = vpop.f32.mrf.mxu0
  %v192 = vadd.f32 0.0, %v191
  %193 = vdwg.mxu0
  %194 = vst [vmem:[%s4] sm:$0xff] %v155
  %195 = vst [vmem:[%s4 + $0x8] sm:$0xff] %v157
  %196 = vst [vmem:[%s4 + $0x10] sm:$0xff] %v160
  %197 = vst [vmem:[%s4 + $0x18] sm:$0xff] %v162
  %198 = vst [vmem:[%s4 + $0x20] sm:$0xff] %v165
  %199 = vst [vmem:[%s4 + $0x28] sm:$0xff] %v167
  %200 = vst [vmem:[%s4 + $0x30] sm:$0xff] %v170
  %201 = vst [vmem:[%s4 + $0x38] sm:$0xff] %v172
  %202 = vst [vmem:[%s4 + $0x40] sm:$0xff] %v175
  %203 = vst [vmem:[%s4 + $0x48] sm:$0xff] %v177
  %204 = vst [vmem:[%s4 + $0x50] sm:$0xff] %v180
  %205 = vst [vmem:[%s4 + $0x58] sm:$0xff] %v182
  %206 = vst [vmem:[%s4 + $0x60] sm:$0xff] %v185
  %207 = vst [vmem:[%s4 + $0x68] sm:$0xff] %v187
  %208 = vst [vmem:[%s4 + $0x70] sm:$0xff] %v190
  %209 = vst [vmem:[%s4 + $0x78] sm:$0xff] %v192
  %v210 = vadd.f32 %v155, %v157
  %v211 = vadd.f32 %v210, %v160
  %v212 = vadd.f32 %v211, %v162
  %v213 = vadd.f32 %v212, %v165
  %v214 = vadd.f32 %v213, %v167
  %v215 = vadd.f32 %v214, %v170
  %v216 = vadd.f32 %v215, %v172
  %v217 = vadd.f32 %v216, %v175
  %v218 = vadd.f32 %v217, %v177
  %v219 = vadd.f32 %v218, %v180
  %v220 = vadd.f32 %v219, %v182
  %v221 = vadd.f32 %v220, %v185
  %v222 = vadd.f32 %v221, %v187
  %v223 = vadd.f32 %v222, %v190
  %v224 = vadd.f32 %v223, %v192
  %v225 = vrot.slane %v224, 4
  %v226 = vadd.f32 %v224, %v225
  %v227 = vrot.slane %v226, 2
  %v228 = vadd.f32 %v226, %v227
  %v229 = vrot.slane %v228, 1
  %v230 = vadd.f32 %v228, %v229
  %v231 = vadd.f32 %v230, 0.0
  %v232 = vmul.f32 %v155, %v155
  %v233 = vmul.f32 %v157, %v157
  %v234 = vmul.f32 %v160, %v160
  %v235 = vmul.f32 %v162, %v162
  %v236 = vmul.f32 %v165, %v165
  %v237 = vmul.f32 %v167, %v167
  %v238 = vmul.f32 %v170, %v170
  %v239 = vmul.f32 %v172, %v172
  %v240 = vmul.f32 %v175, %v175
  %v241 = vmul.f32 %v177, %v177
  %v242 = vmul.f32 %v180, %v180
  %v243 = vmul.f32 %v182, %v182
  %v244 = vmul.f32 %v185, %v185
  %v245 = vmul.f32 %v187, %v187
  %v246 = vmul.f32 %v190, %v190
  %v247 = vmul.f32 %v192, %v192
  %v248 = vadd.f32 %v232, %v233
  %v249 = vadd.f32 %v248, %v234
  %v250 = vadd.f32 %v249, %v235
  %v251 = vadd.f32 %v250, %v236
  %v252 = vadd.f32 %v251, %v237
  %v253 = vadd.f32 %v252, %v238
  %v254 = vadd.f32 %v253, %v239
  %v255 = vadd.f32 %v254, %v240
  %v256 = vadd.f32 %v255, %v241
  %v257 = vadd.f32 %v256, %v242
  %v258 = vadd.f32 %v257, %v243
  %v259 = vadd.f32 %v258, %v244
  %v260 = vadd.f32 %v259, %v245
  %v261 = vadd.f32 %v260, %v246
  %v262 = vadd.f32 %v261, %v247
  %v263 = vrot.slane %v262, 4
  %v264 = vadd.f32 %v262, %v263
  %v265 = vrot.slane %v264, 2
  %v266 = vadd.f32 %v264, %v265
  %v267 = vrot.slane %v266, 1
  %v268 = vadd.f32 %v266, %v267
  %v269 = vadd.f32 %v268, 0.0
  %s270 = scalar_lea.vmem %s0, 64
  %v271 = vld [vmem:[%s270] sm:$0xf]
  %v272 = vld [vmem:[%s270 + $0x4] sm:$0xf]
  %v273 = vld [vmem:[%s270 + $0x8] sm:$0xf]
  %v274 = vld [vmem:[%s270 + $0xc] sm:$0xf]
  %v275 = vld [vmem:[%s270 + $0x10] sm:$0xf]
  %v276 = vld [vmem:[%s270 + $0x14] sm:$0xf]
  %v277 = vld [vmem:[%s270 + $0x18] sm:$0xf]
  %v278 = vld [vmem:[%s270 + $0x1c] sm:$0xf]
  %v279 = vld [vmem:[%s270 + $0x20] sm:$0xf]
  %v280 = vld [vmem:[%s270 + $0x24] sm:$0xf]
  %v281 = vld [vmem:[%s270 + $0x28] sm:$0xf]
  %v282 = vld [vmem:[%s270 + $0x2c] sm:$0xf]
  %v283 = vld [vmem:[%s270 + $0x30] sm:$0xf]
  %v284 = vld [vmem:[%s270 + $0x34] sm:$0xf]
  %v285 = vld [vmem:[%s270 + $0x38] sm:$0xf]
  %v286 = vld [vmem:[%s270 + $0x3c] sm:$0xf]
  %s287 = scalar_lea.vmem %s1, 64
  %v288 = vld [vmem:[%s287] sm:$0xf]
  %v289 = vld [vmem:[%s287 + $0x4] sm:$0xf]
  %v290 = vld [vmem:[%s287 + $0x8] sm:$0xf]
  %v291 = vld [vmem:[%s287 + $0xc] sm:$0xf]
  %v292 = vld [vmem:[%s287 + $0x10] sm:$0xf]
  %v293 = vld [vmem:[%s287 + $0x14] sm:$0xf]
  %v294 = vld [vmem:[%s287 + $0x18] sm:$0xf]
  %v295 = vld [vmem:[%s287 + $0x1c] sm:$0xf]
  %v296 = vld [vmem:[%s287 + $0x20] sm:$0xf]
  %v297 = vld [vmem:[%s287 + $0x24] sm:$0xf]
  %v298 = vld [vmem:[%s287 + $0x28] sm:$0xf]
  %v299 = vld [vmem:[%s287 + $0x2c] sm:$0xf]
  %v300 = vld [vmem:[%s287 + $0x30] sm:$0xf]
  %v301 = vld [vmem:[%s287 + $0x34] sm:$0xf]
  %v302 = vld [vmem:[%s287 + $0x38] sm:$0xf]
  %v303 = vld [vmem:[%s287 + $0x3c] sm:$0xf]
  %v320 = vunpack.c.l.b16 %v271
  %v321 = vunpack.c.l.b16 %v272
  %v322 = vunpack.c.l.b16 %v273
  %v323 = vunpack.c.l.b16 %v274
  %v324 = vunpack.c.l.b16 %v275
  %v325 = vunpack.c.l.b16 %v276
  %v326 = vunpack.c.l.b16 %v277
  %v327 = vunpack.c.l.b16 %v278
  %v328 = vunpack.c.l.b16 %v279
  %v329 = vunpack.c.l.b16 %v280
  %v330 = vunpack.c.l.b16 %v281
  %v331 = vunpack.c.l.b16 %v282
  %v332 = vunpack.c.l.b16 %v283
  %v333 = vunpack.c.l.b16 %v284
  %v334 = vunpack.c.l.b16 %v285
  %v335 = vunpack.c.l.b16 %v286
  %v336 = vpack.c.b16 %v321, %v320
  %v337 = vpack.c.b16 %v323, %v322
  %v338 = vpack.c.b16 %v325, %v324
  %v339 = vpack.c.b16 %v327, %v326
  %v340 = vpack.c.b16 %v329, %v328
  %v341 = vpack.c.b16 %v331, %v330
  %v342 = vpack.c.b16 %v333, %v332
  %v343 = vpack.c.b16 %v335, %v334
  %v368 = vunpack.c.l.b16 %v288
  %v369 = vunpack.c.l.b16 %v289
  %v370 = vunpack.c.l.b16 %v290
  %v371 = vunpack.c.l.b16 %v291
  %v372 = vunpack.c.l.b16 %v292
  %v373 = vunpack.c.l.b16 %v293
  %v374 = vunpack.c.l.b16 %v294
  %v375 = vunpack.c.l.b16 %v295
  %v376 = vunpack.c.l.b16 %v296
  %v377 = vunpack.c.l.b16 %v297
  %v378 = vunpack.c.l.b16 %v298
  %v379 = vunpack.c.l.b16 %v299
  %v380 = vunpack.c.l.b16 %v300
  %v381 = vunpack.c.l.b16 %v301
  %v382 = vunpack.c.l.b16 %v302
  %v383 = vunpack.c.l.b16 %v303
  %v384 = vpack.c.b16 %v369, %v368
  %v385 = vpack.c.b16 %v371, %v370
  %v386 = vpack.c.b16 %v373, %v372
  %v387 = vpack.c.b16 %v375, %v374
  %v388 = vpack.c.b16 %v377, %v376
  %v389 = vpack.c.b16 %v379, %v378
  %v390 = vpack.c.b16 %v381, %v380
  %v391 = vpack.c.b16 %v383, %v382
  %400 = vmatpush.bf16.msra.mxu0 %v391
  %401 = vmatpush.bf16.msra.mxu0 %v390
  %402 = vmatpush.bf16.msra.mxu0 %v389
  %403 = vmatpush.bf16.msra.mxu0 %v388
  %404 = vmatpush.bf16.msra.mxu0 %v387
  %405 = vmatpush.bf16.msra.mxu0 %v386
  %406 = vmatpush.bf16.msra.mxu0 %v385
  %407 = vmatpush.bf16.msra.mxu0 %v384
  %408 = vmatmul.bf16.gmra.mxu0 %v336
  %v409 = vpop.f32.mrf.mxu0
  %v410 = vadd.f32 0.0, %v409
  %v411 = vpop.f32.mrf.mxu0
  %v412 = vadd.f32 0.0, %v411
  %413 = vmatmul.bf16.gmra.mxu0 %v337
  %v414 = vpop.f32.mrf.mxu0
  %v415 = vadd.f32 0.0, %v414
  %v416 = vpop.f32.mrf.mxu0
  %v417 = vadd.f32 0.0, %v416
  %418 = vmatmul.bf16.gmra.mxu0 %v338
  %v419 = vpop.f32.mrf.mxu0
  %v420 = vadd.f32 0.0, %v419
  %v421 = vpop.f32.mrf.mxu0
  %v422 = vadd.f32 0.0, %v421
  %423 = vmatmul.bf16.gmra.mxu0 %v339
  %v424 = vpop.f32.mrf.mxu0
  %v425 = vadd.f32 0.0, %v424
  %v426 = vpop.f32.mrf.mxu0
  %v427 = vadd.f32 0.0, %v426
  %428 = vmatmul.bf16.gmra.mxu0 %v340
  %v429 = vpop.f32.mrf.mxu0
  %v430 = vadd.f32 0.0, %v429
  %v431 = vpop.f32.mrf.mxu0
  %v432 = vadd.f32 0.0, %v431
  %433 = vmatmul.bf16.gmra.mxu0 %v341
  %v434 = vpop.f32.mrf.mxu0
  %v435 = vadd.f32 0.0, %v434
  %v436 = vpop.f32.mrf.mxu0
  %v437 = vadd.f32 0.0, %v436
  %438 = vmatmul.bf16.gmra.mxu0 %v342
  %v439 = vpop.f32.mrf.mxu0
  %v440 = vadd.f32 0.0, %v439
  %v441 = vpop.f32.mrf.mxu0
  %v442 = vadd.f32 0.0, %v441
  %443 = vmatmul.bf16.gmra.mxu0 %v343
  %v444 = vpop.f32.mrf.mxu0
  %v445 = vadd.f32 0.0, %v444
  %v446 = vpop.f32.mrf.mxu0
  %v447 = vadd.f32 0.0, %v446
  %448 = vdwg.mxu0
  %s449 = scalar_lea.vmem %s4, 128
  %450 = vst [vmem:[%s449] sm:$0xff] %v410
  %451 = vst [vmem:[%s449 + $0x8] sm:$0xff] %v412
  %452 = vst [vmem:[%s449 + $0x10] sm:$0xff] %v415
  %453 = vst [vmem:[%s449 + $0x18] sm:$0xff] %v417
  %454 = vst [vmem:[%s449 + $0x20] sm:$0xff] %v420
  %455 = vst [vmem:[%s449 + $0x28] sm:$0xff] %v422
  %456 = vst [vmem:[%s449 + $0x30] sm:$0xff] %v425
  %457 = vst [vmem:[%s449 + $0x38] sm:$0xff] %v427
  %458 = vst [vmem:[%s449 + $0x40] sm:$0xff] %v430
  %459 = vst [vmem:[%s449 + $0x48] sm:$0xff] %v432
  %460 = vst [vmem:[%s449 + $0x50] sm:$0xff] %v435
  %461 = vst [vmem:[%s449 + $0x58] sm:$0xff] %v437
  %462 = vst [vmem:[%s449 + $0x60] sm:$0xff] %v440
  %463 = vst [vmem:[%s449 + $0x68] sm:$0xff] %v442
  %464 = vst [vmem:[%s449 + $0x70] sm:$0xff] %v445
  %465 = vst [vmem:[%s449 + $0x78] sm:$0xff] %v447
  %v466 = vadd.f32 %v410, %v412
  %v467 = vadd.f32 %v466, %v415
  %v468 = vadd.f32 %v467, %v417
  %v469 = vadd.f32 %v468, %v420
  %v470 = vadd.f32 %v469, %v422
  %v471 = vadd.f32 %v470, %v425
  %v472 = vadd.f32 %v471, %v427
  %v473 = vadd.f32 %v472, %v430
  %v474 = vadd.f32 %v473, %v432
  %v475 = vadd.f32 %v474, %v435
  %v476 = vadd.f32 %v475, %v437
  %v477 = vadd.f32 %v476, %v440
  %v478 = vadd.f32 %v477, %v442
  %v479 = vadd.f32 %v478, %v445
  %v480 = vadd.f32 %v479, %v447
  %v481 = vrot.slane %v480, 4
  %v482 = vadd.f32 %v480, %v481
  %v483 = vrot.slane %v482, 2
  %v484 = vadd.f32 %v482, %v483
  %v485 = vrot.slane %v484, 1
  %v486 = vadd.f32 %v484, %v485
  %v487 = vadd.f32 %v231, %v486
  %v488 = vmul.f32 %v410, %v410
  %v489 = vmul.f32 %v412, %v412
  %v490 = vmul.f32 %v415, %v415
  %v491 = vmul.f32 %v417, %v417
  %v492 = vmul.f32 %v420, %v420
  %v493 = vmul.f32 %v422, %v422
  %v494 = vmul.f32 %v425, %v425
  %v495 = vmul.f32 %v427, %v427
  %v496 = vmul.f32 %v430, %v430
  %v497 = vmul.f32 %v432, %v432
  %v498 = vmul.f32 %v435, %v435
  %v499 = vmul.f32 %v437, %v437
  %v500 = vmul.f32 %v440, %v440
  %v501 = vmul.f32 %v442, %v442
  %v502 = vmul.f32 %v445, %v445
  %v503 = vmul.f32 %v447, %v447
  %v504 = vadd.f32 %v488, %v489
  %v505 = vadd.f32 %v504, %v490
  %v506 = vadd.f32 %v505, %v491
  %v507 = vadd.f32 %v506, %v492
  %v508 = vadd.f32 %v507, %v493
  %v509 = vadd.f32 %v508, %v494
  %v510 = vadd.f32 %v509, %v495
  %v511 = vadd.f32 %v510, %v496
  %v512 = vadd.f32 %v511, %v497
  %v513 = vadd.f32 %v512, %v498
  %v514 = vadd.f32 %v513, %v499
  %v515 = vadd.f32 %v514, %v500
  %v516 = vadd.f32 %v515, %v501
  %v517 = vadd.f32 %v516, %v502
  %v518 = vadd.f32 %v517, %v503
  %v519 = vrot.slane %v518, 4
  %v520 = vadd.f32 %v518, %v519
  %v521 = vrot.slane %v520, 2
  %v522 = vadd.f32 %v520, %v521
  %v523 = vrot.slane %v522, 1
  %v524 = vadd.f32 %v522, %v523
  %v525 = vadd.f32 %v269, %v524
  %s526 = scalar_lea.vmem %s0, 128
  %v527 = vld [vmem:[%s526] sm:$0xf]
  %v528 = vld [vmem:[%s526 + $0x4] sm:$0xf]
  %v529 = vld [vmem:[%s526 + $0x8] sm:$0xf]
  %v530 = vld [vmem:[%s526 + $0xc] sm:$0xf]
  %v531 = vld [vmem:[%s526 + $0x10] sm:$0xf]
  %v532 = vld [vmem:[%s526 + $0x14] sm:$0xf]
  %v533 = vld [vmem:[%s526 + $0x18] sm:$0xf]
  %v534 = vld [vmem:[%s526 + $0x1c] sm:$0xf]
  %v535 = vld [vmem:[%s526 + $0x20] sm:$0xf]
  %v536 = vld [vmem:[%s526 + $0x24] sm:$0xf]
  %v537 = vld [vmem:[%s526 + $0x28] sm:$0xf]
  %v538 = vld [vmem:[%s526 + $0x2c] sm:$0xf]
  %v539 = vld [vmem:[%s526 + $0x30] sm:$0xf]
  %v540 = vld [vmem:[%s526 + $0x34] sm:$0xf]
  %v541 = vld [vmem:[%s526 + $0x38] sm:$0xf]
  %v542 = vld [vmem:[%s526 + $0x3c] sm:$0xf]
  %s543 = scalar_lea.vmem %s1, 128
  %v544 = vld [vmem:[%s543] sm:$0xf]
  %v545 = vld [vmem:[%s543 + $0x4] sm:$0xf]
  %v546 = vld [vmem:[%s543 + $0x8] sm:$0xf]
  %v547 = vld [vmem:[%s543 + $0xc] sm:$0xf]
  %v548 = vld [vmem:[%s543 + $0x10] sm:$0xf]
  %v549 = vld [vmem:[%s543 + $0x14] sm:$0xf]
  %v550 = vld [vmem:[%s543 + $0x18] sm:$0xf]
  %v551 = vld [vmem:[%s543 + $0x1c] sm:$0xf]
  %v552 = vld [vmem:[%s543 + $0x20] sm:$0xf]
  %v553 = vld [vmem:[%s543 + $0x24] sm:$0xf]
  %v554 = vld [vmem:[%s543 + $0x28] sm:$0xf]
  %v555 = vld [vmem:[%s543 + $0x2c] sm:$0xf]
  %v556 = vld [vmem:[%s543 + $0x30] sm:$0xf]
  %v557 = vld [vmem:[%s543 + $0x34] sm:$0xf]
  %v558 = vld [vmem:[%s543 + $0x38] sm:$0xf]
  %v559 = vld [vmem:[%s543 + $0x3c] sm:$0xf]
  %v576 = vunpack.c.l.b16 %v527
  %v577 = vunpack.c.l.b16 %v528
  %v578 = vunpack.c.l.b16 %v529
  %v579 = vunpack.c.l.b16 %v530
  %v580 = vunpack.c.l.b16 %v531
  %v581 = vunpack.c.l.b16 %v532
  %v582 = vunpack.c.l.b16 %v533
  %v583 = vunpack.c.l.b16 %v534
  %v584 = vunpack.c.l.b16 %v535
  %v585 = vunpack.c.l.b16 %v536
  %v586 = vunpack.c.l.b16 %v537
  %v587 = vunpack.c.l.b16 %v538
  %v588 = vunpack.c.l.b16 %v539
  %v589 = vunpack.c.l.b16 %v540
  %v590 = vunpack.c.l.b16 %v541
  %v591 = vunpack.c.l.b16 %v542
  %v592 = vpack.c.b16 %v577, %v576
  %v593 = vpack.c.b16 %v579, %v578
  %v594 = vpack.c.b16 %v581, %v580
  %v595 = vpack.c.b16 %v583, %v582
  %v596 = vpack.c.b16 %v585, %v584
  %v597 = vpack.c.b16 %v587, %v586
  %v598 = vpack.c.b16 %v589, %v588
  %v599 = vpack.c.b16 %v591, %v590
  %v624 = vunpack.c.l.b16 %v544
  %v625 = vunpack.c.l.b16 %v545
  %v626 = vunpack.c.l.b16 %v546
  %v627 = vunpack.c.l.b16 %v547
  %v628 = vunpack.c.l.b16 %v548
  %v629 = vunpack.c.l.b16 %v549
  %v630 = vunpack.c.l.b16 %v550
  %v631 = vunpack.c.l.b16 %v551
  %v632 = vunpack.c.l.b16 %v552
  %v633 = vunpack.c.l.b16 %v553
  %v634 = vunpack.c.l.b16 %v554
  %v635 = vunpack.c.l.b16 %v555
  %v636 = vunpack.c.l.b16 %v556
  %v637 = vunpack.c.l.b16 %v557
  %v638 = vunpack.c.l.b16 %v558
  %v639 = vunpack.c.l.b16 %v559
  %v640 = vpack.c.b16 %v625, %v624
  %v641 = vpack.c.b16 %v627, %v626
  %v642 = vpack.c.b16 %v629, %v628
  %v643 = vpack.c.b16 %v631, %v630
  %v644 = vpack.c.b16 %v633, %v632
  %v645 = vpack.c.b16 %v635, %v634
  %v646 = vpack.c.b16 %v637, %v636
  %v647 = vpack.c.b16 %v639, %v638
  %656 = vmatpush.bf16.msra.mxu0 %v647
  %657 = vmatpush.bf16.msra.mxu0 %v646
  %658 = vmatpush.bf16.msra.mxu0 %v645
  %659 = vmatpush.bf16.msra.mxu0 %v644
  %660 = vmatpush.bf16.msra.mxu0 %v643
  %661 = vmatpush.bf16.msra.mxu0 %v642
  %662 = vmatpush.bf16.msra.mxu0 %v641
  %663 = vmatpush.bf16.msra.mxu0 %v640
  %664 = vmatmul.bf16.gmra.mxu0 %v592
  %v665 = vpop.f32.mrf.mxu0
  %v666 = vadd.f32 0.0, %v665
  %v667 = vpop.f32.mrf.mxu0
  %v668 = vadd.f32 0.0, %v667
  %669 = vmatmul.bf16.gmra.mxu0 %v593
  %v670 = vpop.f32.mrf.mxu0
  %v671 = vadd.f32 0.0, %v670
  %v672 = vpop.f32.mrf.mxu0
  %v673 = vadd.f32 0.0, %v672
  %674 = vmatmul.bf16.gmra.mxu0 %v594
  %v675 = vpop.f32.mrf.mxu0
  %v676 = vadd.f32 0.0, %v675
  %v677 = vpop.f32.mrf.mxu0
  %v678 = vadd.f32 0.0, %v677
  %679 = vmatmul.bf16.gmra.mxu0 %v595
  %v680 = vpop.f32.mrf.mxu0
  %v681 = vadd.f32 0.0, %v680
  %v682 = vpop.f32.mrf.mxu0
  %v683 = vadd.f32 0.0, %v682
  %684 = vmatmul.bf16.gmra.mxu0 %v596
  %v685 = vpop.f32.mrf.mxu0
  %v686 = vadd.f32 0.0, %v685
  %v687 = vpop.f32.mrf.mxu0
  %v688 = vadd.f32 0.0, %v687
  %689 = vmatmul.bf16.gmra.mxu0 %v597
  %v690 = vpop.f32.mrf.mxu0
  %v691 = vadd.f32 0.0, %v690
  %v692 = vpop.f32.mrf.mxu0
  %v693 = vadd.f32 0.0, %v692
  %694 = vmatmul.bf16.gmra.mxu0 %v598
  %v695 = vpop.f32.mrf.mxu0
  %v696 = vadd.f32 0.0, %v695
  %v697 = vpop.f32.mrf.mxu0
  %v698 = vadd.f32 0.0, %v697
  %699 = vmatmul.bf16.gmra.mxu0 %v599
  %v700 = vpop.f32.mrf.mxu0
  %v701 = vadd.f32 0.0, %v700
  %v702 = vpop.f32.mrf.mxu0
  %v703 = vadd.f32 0.0, %v702
  %704 = vdwg.mxu0
  %s705 = scalar_lea.vmem %s4, 256
  %706 = vst [vmem:[%s705] sm:$0xff] %v666
  %707 = vst [vmem:[%s705 + $0x8] sm:$0xff] %v668
  %708 = vst [vmem:[%s705 + $0x10] sm:$0xff] %v671
  %709 = vst [vmem:[%s705 + $0x18] sm:$0xff] %v673
  %710 = vst [vmem:[%s705 + $0x20] sm:$0xff] %v676
  %711 = vst [vmem:[%s705 + $0x28] sm:$0xff] %v678
  %712 = vst [vmem:[%s705 + $0x30] sm:$0xff] %v681
  %713 = vst [vmem:[%s705 + $0x38] sm:$0xff] %v683
  %714 = vst [vmem:[%s705 + $0x40] sm:$0xff] %v686
  %715 = vst [vmem:[%s705 + $0x48] sm:$0xff] %v688
  %716 = vst [vmem:[%s705 + $0x50] sm:$0xff] %v691
  %717 = vst [vmem:[%s705 + $0x58] sm:$0xff] %v693
  %718 = vst [vmem:[%s705 + $0x60] sm:$0xff] %v696
  %719 = vst [vmem:[%s705 + $0x68] sm:$0xff] %v698
  %720 = vst [vmem:[%s705 + $0x70] sm:$0xff] %v701
  %721 = vst [vmem:[%s705 + $0x78] sm:$0xff] %v703
  %v722 = vadd.f32 %v666, %v668
  %v723 = vadd.f32 %v722, %v671
  %v724 = vadd.f32 %v723, %v673
  %v725 = vadd.f32 %v724, %v676
  %v726 = vadd.f32 %v725, %v678
  %v727 = vadd.f32 %v726, %v681
  %v728 = vadd.f32 %v727, %v683
  %v729 = vadd.f32 %v728, %v686
  %v730 = vadd.f32 %v729, %v688
  %v731 = vadd.f32 %v730, %v691
  %v732 = vadd.f32 %v731, %v693
  %v733 = vadd.f32 %v732, %v696
  %v734 = vadd.f32 %v733, %v698
  %v735 = vadd.f32 %v734, %v701
  %v736 = vadd.f32 %v735, %v703
  %v737 = vrot.slane %v736, 4
  %v738 = vadd.f32 %v736, %v737
  %v739 = vrot.slane %v738, 2
  %v740 = vadd.f32 %v738, %v739
  %v741 = vrot.slane %v740, 1
  %v742 = vadd.f32 %v740, %v741
  %v743 = vadd.f32 %v487, %v742
  %v744 = vmul.f32 %v666, %v666
  %v745 = vmul.f32 %v668, %v668
  %v746 = vmul.f32 %v671, %v671
  %v747 = vmul.f32 %v673, %v673
  %v748 = vmul.f32 %v676, %v676
  %v749 = vmul.f32 %v678, %v678
  %v750 = vmul.f32 %v681, %v681
  %v751 = vmul.f32 %v683, %v683
  %v752 = vmul.f32 %v686, %v686
  %v753 = vmul.f32 %v688, %v688
  %v754 = vmul.f32 %v691, %v691
  %v755 = vmul.f32 %v693, %v693
  %v756 = vmul.f32 %v696, %v696
  %v757 = vmul.f32 %v698, %v698
  %v758 = vmul.f32 %v701, %v701
  %v759 = vmul.f32 %v703, %v703
  %v760 = vadd.f32 %v744, %v745
  %v761 = vadd.f32 %v760, %v746
  %v762 = vadd.f32 %v761, %v747
  %v763 = vadd.f32 %v762, %v748
  %v764 = vadd.f32 %v763, %v749
  %v765 = vadd.f32 %v764, %v750
  %v766 = vadd.f32 %v765, %v751
  %v767 = vadd.f32 %v766, %v752
  %v768 = vadd.f32 %v767, %v753
  %v769 = vadd.f32 %v768, %v754
  %v770 = vadd.f32 %v769, %v755
  %v771 = vadd.f32 %v770, %v756
  %v772 = vadd.f32 %v771, %v757
  %v773 = vadd.f32 %v772, %v758
  %v774 = vadd.f32 %v773, %v759
  %v775 = vrot.slane %v774, 4
  %v776 = vadd.f32 %v774, %v775
  %v777 = vrot.slane %v776, 2
  %v778 = vadd.f32 %v776, %v777
  %v779 = vrot.slane %v778, 1
  %v780 = vadd.f32 %v778, %v779
  %v781 = vadd.f32 %v525, %v780
  %s782 = scalar_lea.vmem %s0, 192
  %v783 = vld [vmem:[%s782] sm:$0xf]
  %v784 = vld [vmem:[%s782 + $0x4] sm:$0xf]
  %v785 = vld [vmem:[%s782 + $0x8] sm:$0xf]
  %v786 = vld [vmem:[%s782 + $0xc] sm:$0xf]
  %v787 = vld [vmem:[%s782 + $0x10] sm:$0xf]
  %v788 = vld [vmem:[%s782 + $0x14] sm:$0xf]
  %v789 = vld [vmem:[%s782 + $0x18] sm:$0xf]
  %v790 = vld [vmem:[%s782 + $0x1c] sm:$0xf]
  %v791 = vld [vmem:[%s782 + $0x20] sm:$0xf]
  %v792 = vld [vmem:[%s782 + $0x24] sm:$0xf]
  %v793 = vld [vmem:[%s782 + $0x28] sm:$0xf]
  %v794 = vld [vmem:[%s782 + $0x2c] sm:$0xf]
  %v795 = vld [vmem:[%s782 + $0x30] sm:$0xf]
  %v796 = vld [vmem:[%s782 + $0x34] sm:$0xf]
  %v797 = vld [vmem:[%s782 + $0x38] sm:$0xf]
  %v798 = vld [vmem:[%s782 + $0x3c] sm:$0xf]
  %s799 = scalar_lea.vmem %s1, 192
  %v800 = vld [vmem:[%s799] sm:$0xf]
  %v801 = vld [vmem:[%s799 + $0x4] sm:$0xf]
  %v802 = vld [vmem:[%s799 + $0x8] sm:$0xf]
  %v803 = vld [vmem:[%s799 + $0xc] sm:$0xf]
  %v804 = vld [vmem:[%s799 + $0x10] sm:$0xf]
  %v805 = vld [vmem:[%s799 + $0x14] sm:$0xf]
  %v806 = vld [vmem:[%s799 + $0x18] sm:$0xf]
  %v807 = vld [vmem:[%s799 + $0x1c] sm:$0xf]
  %v808 = vld [vmem:[%s799 + $0x20] sm:$0xf]
  %v809 = vld [vmem:[%s799 + $0x24] sm:$0xf]
  %v810 = vld [vmem:[%s799 + $0x28] sm:$0xf]
  %v811 = vld [vmem:[%s799 + $0x2c] sm:$0xf]
  %v812 = vld [vmem:[%s799 + $0x30] sm:$0xf]
  %v813 = vld [vmem:[%s799 + $0x34] sm:$0xf]
  %v814 = vld [vmem:[%s799 + $0x38] sm:$0xf]
  %v815 = vld [vmem:[%s799 + $0x3c] sm:$0xf]
  %v832 = vunpack.c.l.b16 %v783
  %v833 = vunpack.c.l.b16 %v784
  %v834 = vunpack.c.l.b16 %v785
  %v835 = vunpack.c.l.b16 %v786
  %v836 = vunpack.c.l.b16 %v787
  %v837 = vunpack.c.l.b16 %v788
  %v838 = vunpack.c.l.b16 %v789
  %v839 = vunpack.c.l.b16 %v790
  %v840 = vunpack.c.l.b16 %v791
  %v841 = vunpack.c.l.b16 %v792
  %v842 = vunpack.c.l.b16 %v793
  %v843 = vunpack.c.l.b16 %v794
  %v844 = vunpack.c.l.b16 %v795
  %v845 = vunpack.c.l.b16 %v796
  %v846 = vunpack.c.l.b16 %v797
  %v847 = vunpack.c.l.b16 %v798
  %v848 = vpack.c.b16 %v833, %v832
  %v849 = vpack.c.b16 %v835, %v834
  %v850 = vpack.c.b16 %v837, %v836
  %v851 = vpack.c.b16 %v839, %v838
  %v852 = vpack.c.b16 %v841, %v840
  %v853 = vpack.c.b16 %v843, %v842
  %v854 = vpack.c.b16 %v845, %v844
  %v855 = vpack.c.b16 %v847, %v846
  %v880 = vunpack.c.l.b16 %v800
  %v881 = vunpack.c.l.b16 %v801
  %v882 = vunpack.c.l.b16 %v802
  %v883 = vunpack.c.l.b16 %v803
  %v884 = vunpack.c.l.b16 %v804
  %v885 = vunpack.c.l.b16 %v805
  %v886 = vunpack.c.l.b16 %v806
  %v887 = vunpack.c.l.b16 %v807
  %v888 = vunpack.c.l.b16 %v808
  %v889 = vunpack.c.l.b16 %v809
  %v890 = vunpack.c.l.b16 %v810
  %v891 = vunpack.c.l.b16 %v811
  %v892 = vunpack.c.l.b16 %v812
  %v893 = vunpack.c.l.b16 %v813
  %v894 = vunpack.c.l.b16 %v814
  %v895 = vunpack.c.l.b16 %v815
  %v896 = vpack.c.b16 %v881, %v880
  %v897 = vpack.c.b16 %v883, %v882
  %v898 = vpack.c.b16 %v885, %v884
  %v899 = vpack.c.b16 %v887, %v886
  %v900 = vpack.c.b16 %v889, %v888
  %v901 = vpack.c.b16 %v891, %v890
  %v902 = vpack.c.b16 %v893, %v892
  %v903 = vpack.c.b16 %v895, %v894
  %912 = vmatpush.bf16.msra.mxu0 %v903
  %913 = vmatpush.bf16.msra.mxu0 %v902
  %914 = vmatpush.bf16.msra.mxu0 %v901
  %915 = vmatpush.bf16.msra.mxu0 %v900
  %916 = vmatpush.bf16.msra.mxu0 %v899
  %917 = vmatpush.bf16.msra.mxu0 %v898
  %918 = vmatpush.bf16.msra.mxu0 %v897
  %919 = vmatpush.bf16.msra.mxu0 %v896
  %920 = vmatmul.bf16.gmra.mxu0 %v848
  %v921 = vpop.f32.mrf.mxu0
  %v922 = vadd.f32 0.0, %v921
  %v923 = vpop.f32.mrf.mxu0
  %v924 = vadd.f32 0.0, %v923
  %925 = vmatmul.bf16.gmra.mxu0 %v849
  %v926 = vpop.f32.mrf.mxu0
  %v927 = vadd.f32 0.0, %v926
  %v928 = vpop.f32.mrf.mxu0
  %v929 = vadd.f32 0.0, %v928
  %930 = vmatmul.bf16.gmra.mxu0 %v850
  %v931 = vpop.f32.mrf.mxu0
  %v932 = vadd.f32 0.0, %v931
  %v933 = vpop.f32.mrf.mxu0
  %v934 = vadd.f32 0.0, %v933
  %935 = vmatmul.bf16.gmra.mxu0 %v851
  %v936 = vpop.f32.mrf.mxu0
  %v937 = vadd.f32 0.0, %v936
  %v938 = vpop.f32.mrf.mxu0
  %v939 = vadd.f32 0.0, %v938
  %940 = vmatmul.bf16.gmra.mxu0 %v852
  %v941 = vpop.f32.mrf.mxu0
  %v942 = vadd.f32 0.0, %v941
  %v943 = vpop.f32.mrf.mxu0
  %v944 = vadd.f32 0.0, %v943
  %945 = vmatmul.bf16.gmra.mxu0 %v853
  %v946 = vpop.f32.mrf.mxu0
  %v947 = vadd.f32 0.0, %v946
  %v948 = vpop.f32.mrf.mxu0
  %v949 = vadd.f32 0.0, %v948
  %950 = vmatmul.bf16.gmra.mxu0 %v854
  %v951 = vpop.f32.mrf.mxu0
  %v952 = vadd.f32 0.0, %v951
  %v953 = vpop.f32.mrf.mxu0
  %v954 = vadd.f32 0.0, %v953
  %955 = vmatmul.bf16.gmra.mxu0 %v855
  %v956 = vpop.f32.mrf.mxu0
  %v957 = vadd.f32 0.0, %v956
  %v958 = vpop.f32.mrf.mxu0
  %v959 = vadd.f32 0.0, %v958
  %960 = vdwg.mxu0
  %s961 = scalar_lea.vmem %s4, 384
  %962 = vst [vmem:[%s961] sm:$0xff] %v922
  %963 = vst [vmem:[%s961 + $0x8] sm:$0xff] %v924
  %964 = vst [vmem:[%s961 + $0x10] sm:$0xff] %v927
  %965 = vst [vmem:[%s961 + $0x18] sm:$0xff] %v929
  %966 = vst [vmem:[%s961 + $0x20] sm:$0xff] %v932
  %967 = vst [vmem:[%s961 + $0x28] sm:$0xff] %v934
  %968 = vst [vmem:[%s961 + $0x30] sm:$0xff] %v937
  %969 = vst [vmem:[%s961 + $0x38] sm:$0xff] %v939
  %970 = vst [vmem:[%s961 + $0x40] sm:$0xff] %v942
  %971 = vst [vmem:[%s961 + $0x48] sm:$0xff] %v944
  %972 = vst [vmem:[%s961 + $0x50] sm:$0xff] %v947
  %973 = vst [vmem:[%s961 + $0x58] sm:$0xff] %v949
  %974 = vst [vmem:[%s961 + $0x60] sm:$0xff] %v952
  %975 = vst [vmem:[%s961 + $0x68] sm:$0xff] %v954
  %976 = vst [vmem:[%s961 + $0x70] sm:$0xff] %v957
  %977 = vst [vmem:[%s961 + $0x78] sm:$0xff] %v959
  %v978 = vadd.f32 %v922, %v924
  %v979 = vadd.f32 %v978, %v927
  %v980 = vadd.f32 %v979, %v929
  %v981 = vadd.f32 %v980, %v932
  %v982 = vadd.f32 %v981, %v934
  %v983 = vadd.f32 %v982, %v937
  %v984 = vadd.f32 %v983, %v939
  %v985 = vadd.f32 %v984, %v942
  %v986 = vadd.f32 %v985, %v944
  %v987 = vadd.f32 %v986, %v947
  %v988 = vadd.f32 %v987, %v949
  %v989 = vadd.f32 %v988, %v952
  %v990 = vadd.f32 %v989, %v954
  %v991 = vadd.f32 %v990, %v957
  %v992 = vadd.f32 %v991, %v959
  %v993 = vrot.slane %v992, 4
  %v994 = vadd.f32 %v992, %v993
  %v995 = vrot.slane %v994, 2
  %v996 = vadd.f32 %v994, %v995
  %v997 = vrot.slane %v996, 1
  %v998 = vadd.f32 %v996, %v997
  %v999 = vadd.f32 %v743, %v998
  %v1000 = vmul.f32 %v922, %v922
  %v1001 = vmul.f32 %v924, %v924
  %v1002 = vmul.f32 %v927, %v927
  %v1003 = vmul.f32 %v929, %v929
  %v1004 = vmul.f32 %v932, %v932
  %v1005 = vmul.f32 %v934, %v934
  %v1006 = vmul.f32 %v937, %v937
  %v1007 = vmul.f32 %v939, %v939
  %v1008 = vmul.f32 %v942, %v942
  %v1009 = vmul.f32 %v944, %v944
  %v1010 = vmul.f32 %v947, %v947
  %v1011 = vmul.f32 %v949, %v949
  %v1012 = vmul.f32 %v952, %v952
  %v1013 = vmul.f32 %v954, %v954
  %v1014 = vmul.f32 %v957, %v957
  %v1015 = vmul.f32 %v959, %v959
  %v1016 = vadd.f32 %v1000, %v1001
  %v1017 = vadd.f32 %v1016, %v1002
  %v1018 = vadd.f32 %v1017, %v1003
  %v1019 = vadd.f32 %v1018, %v1004
  %v1020 = vadd.f32 %v1019, %v1005
  %v1021 = vadd.f32 %v1020, %v1006
  %v1022 = vadd.f32 %v1021, %v1007
  %v1023 = vadd.f32 %v1022, %v1008
  %v1024 = vadd.f32 %v1023, %v1009
  %v1025 = vadd.f32 %v1024, %v1010
  %v1026 = vadd.f32 %v1025, %v1011
  %v1027 = vadd.f32 %v1026, %v1012
  %v1028 = vadd.f32 %v1027, %v1013
  %v1029 = vadd.f32 %v1028, %v1014
  %v1030 = vadd.f32 %v1029, %v1015
  %v1031 = vrot.slane %v1030, 4
  %v1032 = vadd.f32 %v1030, %v1031
  %v1033 = vrot.slane %v1032, 2
  %v1034 = vadd.f32 %v1032, %v1033
  %v1035 = vrot.slane %v1034, 1
  %v1036 = vadd.f32 %v1034, %v1035
  %v1037 = vadd.f32 %v781, %v1036
  %v1038 = vmul.f32 %v999, 0.001953125
  %v1039 = vmul.f32 %v1037, 0.001953125
  %v1040 = vmul.f32 %v1038, %v1038
  %v1041 = vsub.f32 %v1039, %v1040
  %v1042 = vmax.f32 %v1041, 0.0
  %v1043 = vld [vmem:[%s2] sm:$0x1]
  %v1044 = vadd.f32 %v1042, 1e-05
  %v1045 = vrsqrt.pop %v1044
  %v1046 = vmul.f32 %v1045, %v1044
  %v1047 = vmul.f32 %v1046, %v1045
  %v1048 = vmul.f32 0.5, %v1047
  %v1049 = vsub.f32 1.5, %v1048
  %v1050 = vmul.f32 %v1045, %v1049
  %vm1051 = vweird.f32 %v1044
  %vm1052 = vweird.f32 %v1045
  %vm1053 = vmor %vm1051, %vm1052
  %v1054 = vsel %vm1053, %v1045, %v1050
  %v1055 = vmul.f32 %v1043, %v1054
  %v1056 = vld [vmem:[%s3] sm:$0x1]
  %v1057 = vmul.f32 %v1038, %v1055
  %v1058 = vsub.f32 %v1056, %v1057
  %v1059 = vld [vmem:[%s4] sm:$0xff]
  %v1060 = vld [vmem:[%s4 + $0x8] sm:$0xff]
  %v1061 = vld [vmem:[%s4 + $0x10] sm:$0xff]
  %v1062 = vld [vmem:[%s4 + $0x18] sm:$0xff]
  %v1063 = vld [vmem:[%s4 + $0x20] sm:$0xff]
  %v1064 = vld [vmem:[%s4 + $0x28] sm:$0xff]
  %v1065 = vld [vmem:[%s4 + $0x30] sm:$0xff]
  %v1066 = vld [vmem:[%s4 + $0x38] sm:$0xff]
  %v1067 = vld [vmem:[%s4 + $0x40] sm:$0xff]
  %v1068 = vld [vmem:[%s4 + $0x48] sm:$0xff]
  %v1069 = vld [vmem:[%s4 + $0x50] sm:$0xff]
  %v1070 = vld [vmem:[%s4 + $0x58] sm:$0xff]
  %v1071 = vld [vmem:[%s4 + $0x60] sm:$0xff]
  %v1072 = vld [vmem:[%s4 + $0x68] sm:$0xff]
  %v1073 = vld [vmem:[%s4 + $0x70] sm:$0xff]
  %v1074 = vld [vmem:[%s4 + $0x78] sm:$0xff]
  %v1076 = vperm.slane %v1055, 0
  %v1078 = vmul.f32 %v1059, %v1076
  %v1079 = vmul.f32 %v1060, %v1076
  %v1080 = vmul.f32 %v1061, %v1076
  %v1081 = vmul.f32 %v1062, %v1076
  %v1082 = vmul.f32 %v1063, %v1076
  %v1083 = vmul.f32 %v1064, %v1076
  %v1084 = vmul.f32 %v1065, %v1076
  %v1085 = vmul.f32 %v1066, %v1076
  %v1086 = vmul.f32 %v1067, %v1076
  %v1087 = vmul.f32 %v1068, %v1076
  %v1088 = vmul.f32 %v1069, %v1076
  %v1089 = vmul.f32 %v1070, %v1076
  %v1090 = vmul.f32 %v1071, %v1076
  %v1091 = vmul.f32 %v1072, %v1076
  %v1092 = vmul.f32 %v1073, %v1076
  %v1093 = vmul.f32 %v1074, %v1076
  %v1095 = vperm.slane %v1058, 0
  %v1097 = vadd.f32 %v1078, %v1095
  %v1098 = vadd.f32 %v1079, %v1095
  %v1099 = vadd.f32 %v1080, %v1095
  %v1100 = vadd.f32 %v1081, %v1095
  %v1101 = vadd.f32 %v1082, %v1095
  %v1102 = vadd.f32 %v1083, %v1095
  %v1103 = vadd.f32 %v1084, %v1095
  %v1104 = vadd.f32 %v1085, %v1095
  %v1105 = vadd.f32 %v1086, %v1095
  %v1106 = vadd.f32 %v1087, %v1095
  %v1107 = vadd.f32 %v1088, %v1095
  %v1108 = vadd.f32 %v1089, %v1095
  %v1109 = vadd.f32 %v1090, %v1095
  %v1110 = vadd.f32 %v1091, %v1095
  %v1111 = vadd.f32 %v1092, %v1095
  %v1112 = vadd.f32 %v1093, %v1095
  %v1113 = vmax.f32 %v1097, 0.0
  %v1114 = vmax.f32 %v1098, 0.0
  %v1115 = vmax.f32 %v1099, 0.0
  %v1116 = vmax.f32 %v1100, 0.0
  %v1117 = vmax.f32 %v1101, 0.0
  %v1118 = vmax.f32 %v1102, 0.0
  %v1119 = vmax.f32 %v1103, 0.0
  %v1120 = vmax.f32 %v1104, 0.0
  %v1121 = vmax.f32 %v1105, 0.0
  %v1122 = vmax.f32 %v1106, 0.0
  %v1123 = vmax.f32 %v1107, 0.0
  %v1124 = vmax.f32 %v1108, 0.0
  %v1125 = vmax.f32 %v1109, 0.0
  %v1126 = vmax.f32 %v1110, 0.0
  %v1127 = vmax.f32 %v1111, 0.0
  %v1128 = vmax.f32 %v1112, 0.0
  %1129 = vst [vmem:[%s4] sm:$0xff] %v1113
  %1130 = vst [vmem:[%s4 + $0x8] sm:$0xff] %v1114
  %1131 = vst [vmem:[%s4 + $0x10] sm:$0xff] %v1115
  %1132 = vst [vmem:[%s4 + $0x18] sm:$0xff] %v1116
  %1133 = vst [vmem:[%s4 + $0x20] sm:$0xff] %v1117
  %1134 = vst [vmem:[%s4 + $0x28] sm:$0xff] %v1118
  %1135 = vst [vmem:[%s4 + $0x30] sm:$0xff] %v1119
  %1136 = vst [vmem:[%s4 + $0x38] sm:$0xff] %v1120
  %1137 = vst [vmem:[%s4 + $0x40] sm:$0xff] %v1121
  %1138 = vst [vmem:[%s4 + $0x48] sm:$0xff] %v1122
  %1139 = vst [vmem:[%s4 + $0x50] sm:$0xff] %v1123
  %1140 = vst [vmem:[%s4 + $0x58] sm:$0xff] %v1124
  %1141 = vst [vmem:[%s4 + $0x60] sm:$0xff] %v1125
  %1142 = vst [vmem:[%s4 + $0x68] sm:$0xff] %v1126
  %1143 = vst [vmem:[%s4 + $0x70] sm:$0xff] %v1127
  %1144 = vst [vmem:[%s4 + $0x78] sm:$0xff] %v1128
  %v1145 = vld [vmem:[%s449] sm:$0xff]
  %v1146 = vld [vmem:[%s449 + $0x8] sm:$0xff]
  %v1147 = vld [vmem:[%s449 + $0x10] sm:$0xff]
  %v1148 = vld [vmem:[%s449 + $0x18] sm:$0xff]
  %v1149 = vld [vmem:[%s449 + $0x20] sm:$0xff]
  %v1150 = vld [vmem:[%s449 + $0x28] sm:$0xff]
  %v1151 = vld [vmem:[%s449 + $0x30] sm:$0xff]
  %v1152 = vld [vmem:[%s449 + $0x38] sm:$0xff]
  %v1153 = vld [vmem:[%s449 + $0x40] sm:$0xff]
  %v1154 = vld [vmem:[%s449 + $0x48] sm:$0xff]
  %v1155 = vld [vmem:[%s449 + $0x50] sm:$0xff]
  %v1156 = vld [vmem:[%s449 + $0x58] sm:$0xff]
  %v1157 = vld [vmem:[%s449 + $0x60] sm:$0xff]
  %v1158 = vld [vmem:[%s449 + $0x68] sm:$0xff]
  %v1159 = vld [vmem:[%s449 + $0x70] sm:$0xff]
  %v1160 = vld [vmem:[%s449 + $0x78] sm:$0xff]
  %v1161 = vmul.f32 %v1145, %v1076
  %v1162 = vmul.f32 %v1146, %v1076
  %v1163 = vmul.f32 %v1147, %v1076
  %v1164 = vmul.f32 %v1148, %v1076
  %v1165 = vmul.f32 %v1149, %v1076
  %v1166 = vmul.f32 %v1150, %v1076
  %v1167 = vmul.f32 %v1151, %v1076
  %v1168 = vmul.f32 %v1152, %v1076
  %v1169 = vmul.f32 %v1153, %v1076
  %v1170 = vmul.f32 %v1154, %v1076
  %v1171 = vmul.f32 %v1155, %v1076
  %v1172 = vmul.f32 %v1156, %v1076
  %v1173 = vmul.f32 %v1157, %v1076
  %v1174 = vmul.f32 %v1158, %v1076
  %v1175 = vmul.f32 %v1159, %v1076
  %v1176 = vmul.f32 %v1160, %v1076
  %v1177 = vadd.f32 %v1161, %v1095
  %v1178 = vadd.f32 %v1162, %v1095
  %v1179 = vadd.f32 %v1163, %v1095
  %v1180 = vadd.f32 %v1164, %v1095
  %v1181 = vadd.f32 %v1165, %v1095
  %v1182 = vadd.f32 %v1166, %v1095
  %v1183 = vadd.f32 %v1167, %v1095
  %v1184 = vadd.f32 %v1168, %v1095
  %v1185 = vadd.f32 %v1169, %v1095
  %v1186 = vadd.f32 %v1170, %v1095
  %v1187 = vadd.f32 %v1171, %v1095
  %v1188 = vadd.f32 %v1172, %v1095
  %v1189 = vadd.f32 %v1173, %v1095
  %v1190 = vadd.f32 %v1174, %v1095
  %v1191 = vadd.f32 %v1175, %v1095
  %v1192 = vadd.f32 %v1176, %v1095
  %v1193 = vmax.f32 %v1177, 0.0
  %v1194 = vmax.f32 %v1178, 0.0
  %v1195 = vmax.f32 %v1179, 0.0
  %v1196 = vmax.f32 %v1180, 0.0
  %v1197 = vmax.f32 %v1181, 0.0
  %v1198 = vmax.f32 %v1182, 0.0
  %v1199 = vmax.f32 %v1183, 0.0
  %v1200 = vmax.f32 %v1184, 0.0
  %v1201 = vmax.f32 %v1185, 0.0
  %v1202 = vmax.f32 %v1186, 0.0
  %v1203 = vmax.f32 %v1187, 0.0
  %v1204 = vmax.f32 %v1188, 0.0
  %v1205 = vmax.f32 %v1189, 0.0
  %v1206 = vmax.f32 %v1190, 0.0
  %v1207 = vmax.f32 %v1191, 0.0
  %v1208 = vmax.f32 %v1192, 0.0
  %1209 = vst [vmem:[%s449] sm:$0xff] %v1193
  %1210 = vst [vmem:[%s449 + $0x8] sm:$0xff] %v1194
  %1211 = vst [vmem:[%s449 + $0x10] sm:$0xff] %v1195
  %1212 = vst [vmem:[%s449 + $0x18] sm:$0xff] %v1196
  %1213 = vst [vmem:[%s449 + $0x20] sm:$0xff] %v1197
  %1214 = vst [vmem:[%s449 + $0x28] sm:$0xff] %v1198
  %1215 = vst [vmem:[%s449 + $0x30] sm:$0xff] %v1199
  %1216 = vst [vmem:[%s449 + $0x38] sm:$0xff] %v1200
  %1217 = vst [vmem:[%s449 + $0x40] sm:$0xff] %v1201
  %1218 = vst [vmem:[%s449 + $0x48] sm:$0xff] %v1202
  %1219 = vst [vmem:[%s449 + $0x50] sm:$0xff] %v1203
  %1220 = vst [vmem:[%s449 + $0x58] sm:$0xff] %v1204
  %1221 = vst [vmem:[%s449 + $0x60] sm:$0xff] %v1205
  %1222 = vst [vmem:[%s449 + $0x68] sm:$0xff] %v1206
  %1223 = vst [vmem:[%s449 + $0x70] sm:$0xff] %v1207
  %1224 = vst [vmem:[%s449 + $0x78] sm:$0xff] %v1208
  %v1225 = vld [vmem:[%s705] sm:$0xff]
  %v1226 = vld [vmem:[%s705 + $0x8] sm:$0xff]
  %v1227 = vld [vmem:[%s705 + $0x10] sm:$0xff]
  %v1228 = vld [vmem:[%s705 + $0x18] sm:$0xff]
  %v1229 = vld [vmem:[%s705 + $0x20] sm:$0xff]
  %v1230 = vld [vmem:[%s705 + $0x28] sm:$0xff]
  %v1231 = vld [vmem:[%s705 + $0x30] sm:$0xff]
  %v1232 = vld [vmem:[%s705 + $0x38] sm:$0xff]
  %v1233 = vld [vmem:[%s705 + $0x40] sm:$0xff]
  %v1234 = vld [vmem:[%s705 + $0x48] sm:$0xff]
  %v1235 = vld [vmem:[%s705 + $0x50] sm:$0xff]
  %v1236 = vld [vmem:[%s705 + $0x58] sm:$0xff]
  %v1237 = vld [vmem:[%s705 + $0x60] sm:$0xff]
  %v1238 = vld [vmem:[%s705 + $0x68] sm:$0xff]
  %v1239 = vld [vmem:[%s705 + $0x70] sm:$0xff]
  %v1240 = vld [vmem:[%s705 + $0x78] sm:$0xff]
  %v1241 = vmul.f32 %v1225, %v1076
  %v1242 = vmul.f32 %v1226, %v1076
  %v1243 = vmul.f32 %v1227, %v1076
  %v1244 = vmul.f32 %v1228, %v1076
  %v1245 = vmul.f32 %v1229, %v1076
  %v1246 = vmul.f32 %v1230, %v1076
  %v1247 = vmul.f32 %v1231, %v1076
  %v1248 = vmul.f32 %v1232, %v1076
  %v1249 = vmul.f32 %v1233, %v1076
  %v1250 = vmul.f32 %v1234, %v1076
  %v1251 = vmul.f32 %v1235, %v1076
  %v1252 = vmul.f32 %v1236, %v1076
  %v1253 = vmul.f32 %v1237, %v1076
  %v1254 = vmul.f32 %v1238, %v1076
  %v1255 = vmul.f32 %v1239, %v1076
  %v1256 = vmul.f32 %v1240, %v1076
  %v1257 = vadd.f32 %v1241, %v1095
  %v1258 = vadd.f32 %v1242, %v1095
  %v1259 = vadd.f32 %v1243, %v1095
  %v1260 = vadd.f32 %v1244, %v1095
  %v1261 = vadd.f32 %v1245, %v1095
  %v1262 = vadd.f32 %v1246, %v1095
  %v1263 = vadd.f32 %v1247, %v1095
  %v1264 = vadd.f32 %v1248, %v1095
  %v1265 = vadd.f32 %v1249, %v1095
  %v1266 = vadd.f32 %v1250, %v1095
  %v1267 = vadd.f32 %v1251, %v1095
  %v1268 = vadd.f32 %v1252, %v1095
  %v1269 = vadd.f32 %v1253, %v1095
  %v1270 = vadd.f32 %v1254, %v1095
  %v1271 = vadd.f32 %v1255, %v1095
  %v1272 = vadd.f32 %v1256, %v1095
  %v1273 = vmax.f32 %v1257, 0.0
  %v1274 = vmax.f32 %v1258, 0.0
  %v1275 = vmax.f32 %v1259, 0.0
  %v1276 = vmax.f32 %v1260, 0.0
  %v1277 = vmax.f32 %v1261, 0.0
  %v1278 = vmax.f32 %v1262, 0.0
  %v1279 = vmax.f32 %v1263, 0.0
  %v1280 = vmax.f32 %v1264, 0.0
  %v1281 = vmax.f32 %v1265, 0.0
  %v1282 = vmax.f32 %v1266, 0.0
  %v1283 = vmax.f32 %v1267, 0.0
  %v1284 = vmax.f32 %v1268, 0.0
  %v1285 = vmax.f32 %v1269, 0.0
  %v1286 = vmax.f32 %v1270, 0.0
  %v1287 = vmax.f32 %v1271, 0.0
  %v1288 = vmax.f32 %v1272, 0.0
  %1289 = vst [vmem:[%s705] sm:$0xff] %v1273
  %1290 = vst [vmem:[%s705 + $0x8] sm:$0xff] %v1274
  %1291 = vst [vmem:[%s705 + $0x10] sm:$0xff] %v1275
  %1292 = vst [vmem:[%s705 + $0x18] sm:$0xff] %v1276
  %1293 = vst [vmem:[%s705 + $0x20] sm:$0xff] %v1277
  %1294 = vst [vmem:[%s705 + $0x28] sm:$0xff] %v1278
  %1295 = vst [vmem:[%s705 + $0x30] sm:$0xff] %v1279
  %1296 = vst [vmem:[%s705 + $0x38] sm:$0xff] %v1280
  %1297 = vst [vmem:[%s705 + $0x40] sm:$0xff] %v1281
  %1298 = vst [vmem:[%s705 + $0x48] sm:$0xff] %v1282
  %1299 = vst [vmem:[%s705 + $0x50] sm:$0xff] %v1283
  %1300 = vst [vmem:[%s705 + $0x58] sm:$0xff] %v1284
  %1301 = vst [vmem:[%s705 + $0x60] sm:$0xff] %v1285
  %1302 = vst [vmem:[%s705 + $0x68] sm:$0xff] %v1286
  %1303 = vst [vmem:[%s705 + $0x70] sm:$0xff] %v1287
  %1304 = vst [vmem:[%s705 + $0x78] sm:$0xff] %v1288
  %v1305 = vld [vmem:[%s961] sm:$0xff]
  %v1306 = vld [vmem:[%s961 + $0x8] sm:$0xff]
  %v1307 = vld [vmem:[%s961 + $0x10] sm:$0xff]
  %v1308 = vld [vmem:[%s961 + $0x18] sm:$0xff]
  %v1309 = vld [vmem:[%s961 + $0x20] sm:$0xff]
  %v1310 = vld [vmem:[%s961 + $0x28] sm:$0xff]
  %v1311 = vld [vmem:[%s961 + $0x30] sm:$0xff]
  %v1312 = vld [vmem:[%s961 + $0x38] sm:$0xff]
  %v1313 = vld [vmem:[%s961 + $0x40] sm:$0xff]
  %v1314 = vld [vmem:[%s961 + $0x48] sm:$0xff]
  %v1315 = vld [vmem:[%s961 + $0x50] sm:$0xff]
  %v1316 = vld [vmem:[%s961 + $0x58] sm:$0xff]
  %v1317 = vld [vmem:[%s961 + $0x60] sm:$0xff]
  %v1318 = vld [vmem:[%s961 + $0x68] sm:$0xff]
  %v1319 = vld [vmem:[%s961 + $0x70] sm:$0xff]
  %v1320 = vld [vmem:[%s961 + $0x78] sm:$0xff]
  %v1321 = vmul.f32 %v1305, %v1076
  %v1322 = vmul.f32 %v1306, %v1076
  %v1323 = vmul.f32 %v1307, %v1076
  %v1324 = vmul.f32 %v1308, %v1076
  %v1325 = vmul.f32 %v1309, %v1076
  %v1326 = vmul.f32 %v1310, %v1076
  %v1327 = vmul.f32 %v1311, %v1076
  %v1328 = vmul.f32 %v1312, %v1076
  %v1329 = vmul.f32 %v1313, %v1076
  %v1330 = vmul.f32 %v1314, %v1076
  %v1331 = vmul.f32 %v1315, %v1076
  %v1332 = vmul.f32 %v1316, %v1076
  %v1333 = vmul.f32 %v1317, %v1076
  %v1334 = vmul.f32 %v1318, %v1076
  %v1335 = vmul.f32 %v1319, %v1076
  %v1336 = vmul.f32 %v1320, %v1076
  %v1337 = vadd.f32 %v1321, %v1095
  %v1338 = vadd.f32 %v1322, %v1095
  %v1339 = vadd.f32 %v1323, %v1095
  %v1340 = vadd.f32 %v1324, %v1095
  %v1341 = vadd.f32 %v1325, %v1095
  %v1342 = vadd.f32 %v1326, %v1095
  %v1343 = vadd.f32 %v1327, %v1095
  %v1344 = vadd.f32 %v1328, %v1095
  %v1345 = vadd.f32 %v1329, %v1095
  %v1346 = vadd.f32 %v1330, %v1095
  %v1347 = vadd.f32 %v1331, %v1095
  %v1348 = vadd.f32 %v1332, %v1095
  %v1349 = vadd.f32 %v1333, %v1095
  %v1350 = vadd.f32 %v1334, %v1095
  %v1351 = vadd.f32 %v1335, %v1095
  %v1352 = vadd.f32 %v1336, %v1095
  %v1353 = vmax.f32 %v1337, 0.0
  %v1354 = vmax.f32 %v1338, 0.0
  %v1355 = vmax.f32 %v1339, 0.0
  %v1356 = vmax.f32 %v1340, 0.0
  %v1357 = vmax.f32 %v1341, 0.0
  %v1358 = vmax.f32 %v1342, 0.0
  %v1359 = vmax.f32 %v1343, 0.0
  %v1360 = vmax.f32 %v1344, 0.0
  %v1361 = vmax.f32 %v1345, 0.0
  %v1362 = vmax.f32 %v1346, 0.0
  %v1363 = vmax.f32 %v1347, 0.0
  %v1364 = vmax.f32 %v1348, 0.0
  %v1365 = vmax.f32 %v1349, 0.0
  %v1366 = vmax.f32 %v1350, 0.0
  %v1367 = vmax.f32 %v1351, 0.0
  %v1368 = vmax.f32 %v1352, 0.0
  %1369 = vst [vmem:[%s961] sm:$0xff] %v1353
  %1370 = vst [vmem:[%s961 + $0x8] sm:$0xff] %v1354
  %1371 = vst [vmem:[%s961 + $0x10] sm:$0xff] %v1355
  %1372 = vst [vmem:[%s961 + $0x18] sm:$0xff] %v1356
  %1373 = vst [vmem:[%s961 + $0x20] sm:$0xff] %v1357
  %1374 = vst [vmem:[%s961 + $0x28] sm:$0xff] %v1358
  %1375 = vst [vmem:[%s961 + $0x30] sm:$0xff] %v1359
  %1376 = vst [vmem:[%s961 + $0x38] sm:$0xff] %v1360
  %1377 = vst [vmem:[%s961 + $0x40] sm:$0xff] %v1361
  %1378 = vst [vmem:[%s961 + $0x48] sm:$0xff] %v1362
  %1379 = vst [vmem:[%s961 + $0x50] sm:$0xff] %v1363
  %1380 = vst [vmem:[%s961 + $0x58] sm:$0xff] %v1364
  %1381 = vst [vmem:[%s961 + $0x60] sm:$0xff] %v1365
  %1382 = vst [vmem:[%s961 + $0x68] sm:$0xff] %v1366
  %1383 = vst [vmem:[%s961 + $0x70] sm:$0xff] %v1367
  %1384 = vst [vmem:[%s961 + $0x78] sm:$0xff] %v1368
  // Predicated region
  $region18: #{dc_generator_forward.6} parent=0 // pred_check
    _
  $region19: #{dc_generator_forward.6} parent=0 // pred_check_branch
    %1386 = sbr.rel (0) target = $region21
  $region20: #{dc_generator_forward.6} parent=0 // pred_region
    _
  $region21: #{dc_generator_forward.6} parent=0 // pred_fallthru
    _
  // Predicated region
  $region22: #{dc_generator_forward.6} parent=0 // pred_check
    _
  $region23: #{dc_generator_forward.6} parent=0 // pred_check_branch
    %1388 = sbr.rel (0) target = $region25
  $region24: #{dc_generator_forward.6} parent=0 // pred_region
    _
  $region25: #{dc_generator_forward.6} parent=0 // pred_fallthru
    _

// kernel: dc_generator_forward.7
$region0: #{dc_generator_forward.7}
  #allocation0 [shape = 'u32[]', space=smem, size = 0x4, offset = 0x4, fixed_abs, tag = 'smem constant byte address 0x4 - core index']
  #allocation1 [shape = 'u32[72,128]{1,0:T(1,128)}', space=vmem, size = 0x9000, scoped, tag = 'internal scratch']
  %s0 = inlined_call_operand.vmem [shape: bf16[4,512,64], index: 0, kind: input, shape index: {}]
  %s1 = inlined_call_operand.vmem [shape: bf16[4,64,128], index: 1, kind: input, shape index: {}]
  %s2 = inlined_call_operand.vmem [shape: f32[4,512,128], index: 2, kind: output, shape index: {}]
  %s3 = sld [smem:[#allocation0]]
  $region41: #{dc_generator_forward.7} parent=0
    _
  %s5 = ssub.s32 1, %s3
  %s6 = scalar_select 0, %s5, %s3
  loop: start=0, step=1, limit=6
  $region2: #{dc_generator_forward.7} parent=0 // loop_pre_header
    _
  $region3: #{dc_generator_forward.7} parent=0 // loop_header
    %s8 = sphi 0, %s12
    %p9 = scmp.ge.s32.totalorder %s8, 6
    %s18 = sphi 0, %s20
    %s21 = sphi 0, %s18
    %s22 = sphi 0, %s21
    %s38 = sphi 0, %s22
    %s44 = sphi 0, %s46
    %s47 = sphi 0, %s44
    %s48 = sphi 0, %s47
    %s64 = sphi 0, %s48
    %s70 = sphi 0, %s72
    %s73 = sphi 0, %s70
    %s74 = sphi 0, %s73
    %s90 = sphi 0, %s74
  $region4: #{dc_generator_forward.7} parent=0 // loop_header_branch
    %11 = sbr.rel (%p9) target = $region8
  $region5: #{dc_generator_forward.7} parent=0 // loop_body
    %s13 = ssub.s32 %s8, 1
    %s14 = ssub.s32 %s8, 2
    %s15 = sadd.s32 %s8, 1
    %s16 = ssub.s32 %s8, %s15
    %p17 = scmp.eq.s32.totalorder %s16, 0
    %s19 = sadd.s32 %s18, 1
    %s20 = scalar_select %p17, %s18, %s19
    %p23 = pneg %p17
    %p24 = scmp.eq.s32.totalorder %s8, 3
    %p25 = por %p23, %p24
    %p26 = scmp.ne.s32.totalorder %s18, %s21
    %p27 = scmp.eq.s32.totalorder %s8, 0
    %p28 = por %p26, %p27
    %p29 = scmp.ne.s32.totalorder %s18, %s21
    %p30 = scmp.eq.s32.totalorder %s13, 3
    %p31 = por %p29, %p30
    %p32 = scmp.ne.s32.totalorder %s21, %s22
    %p33 = scmp.eq.s32.totalorder %s13, 0
    %p34 = por %p32, %p33
    %p35 = scmp.ne.s32.totalorder %s21, %s22
    %p36 = scmp.eq.s32.totalorder %s14, 3
    %p37 = por %p35, %p36
    %p39 = scmp.ne.s32.totalorder %s22, %s38
    %p40 = scmp.eq.s32.totalorder %s14, 0
    %p41 = por %p39, %p40
    %s42 = ssub.s32 %s8, %s15
    %p43 = scmp.eq.s32.totalorder %s42, 0
    %s45 = sadd.s32 %s44, 1
    %s46 = scalar_select %p43, %s44, %s45
    %p49 = pneg %p43
    %p50 = scmp.eq.s32.totalorder %s8, 3
    %p51 = por %p49, %p50
    %p52 = scmp.ne.s32.totalorder %s44, %s47
    %p53 = scmp.eq.s32.totalorder %s8, 0
    %p54 = por %p52, %p53
    %p55 = scmp.ne.s32.totalorder %s44, %s47
    %p56 = scmp.eq.s32.totalorder %s13, 3
    %p57 = por %p55, %p56
    %p58 = scmp.ne.s32.totalorder %s47, %s48
    %p59 = scmp.eq.s32.totalorder %s13, 0
    %p60 = por %p58, %p59
    %p61 = scmp.ne.s32.totalorder %s47, %s48
    %p62 = scmp.eq.s32.totalorder %s14, 3
    %p63 = por %p61, %p62
    %p65 = scmp.ne.s32.totalorder %s48, %s64
    %p66 = scmp.eq.s32.totalorder %s14, 0
    %p67 = por %p65, %p66
    %s68 = ssub.s32 %s8, %s15
    %p69 = scmp.eq.s32.totalorder %s68, 0
    %s71 = sadd.s32 %s70, 1
    %s72 = scalar_select %p69, %s70, %s71
    %p75 = pneg %p69
    %p76 = scmp.eq.s32.totalorder %s8, 3
    %p77 = por %p75, %p76
    %p78 = scmp.ne.s32.totalorder %s70, %s73
    %p79 = scmp.eq.s32.totalorder %s8, 0
    %p80 = por %p78, %p79
    %p81 = scmp.ne.s32.totalorder %s70, %s73
    %p82 = scmp.eq.s32.totalorder %s13, 3
    %p83 = por %p81, %p82
    %p84 = scmp.ne.s32.totalorder %s73, %s74
    %p85 = scmp.eq.s32.totalorder %s13, 0
    %p86 = por %p84, %p85
    %p87 = scmp.ne.s32.totalorder %s73, %s74
    %p88 = scmp.eq.s32.totalorder %s14, 3
    %p89 = por %p87, %p88
    %p91 = scmp.ne.s32.totalorder %s74, %s90
    %p92 = scmp.eq.s32.totalorder %s14, 0
    %p93 = por %p91, %p92
    %p94 = scmp.le.s32.totalorder 1, %s8
    %p95 = scmp.lt.s32.totalorder %s8, 5
    %p96 = pnand %p94, %p95
    %p97 = pneg %p96
    // Predicated region
    $region9: #{dc_generator_forward.7} parent=5 // pred_check
      _
    $region10: #{dc_generator_forward.7} parent=5 // pred_check_branch
      %99 = sbr.rel (%p96) target = $region12
    $region11: #{dc_generator_forward.7} parent=5 // pred_region
      %s100 = ssub.s32 %s8, 1
    $region12: #{dc_generator_forward.7} parent=5 // pred_fallthru
      _
    %p101 = scmp.lt.s32.totalorder %s8, 4
    // Predicated region
    $region13: #{dc_generator_forward.7} parent=5 // pred_check
      %p102 = pneg %p101
    $region14: #{dc_generator_forward.7} parent=5 // pred_check_branch
      %104 = sbr.rel (%p102) target = $region16
    $region15: #{dc_generator_forward.7} parent=5 // pred_region
      // Predicated region
      $region17: #{dc_generator_forward.7} parent=15 // pred_check
        %p105 = pneg %p28
      $region18: #{dc_generator_forward.7} parent=15 // pred_check_branch
        %107 = sbr.rel (%p105) target = $region20
      $region19: #{dc_generator_forward.7} parent=15 // pred_region
        %p108 = scmp.lt.s32.totalorder %s8, 3
        %s109 = scalar_select %p108, %s8, 3
        %s110 = smul.addr %s109, 64
        %s111 = smul.addr %s110, 4
        %s112 = scalar_lea.vmem %s0, %s111
      $region20: #{dc_generator_forward.7} parent=15 // pred_fallthru
        _
      // Predicated region
      $region21: #{dc_generator_forward.7} parent=15 // pred_check
        %p113 = pneg %p54
      $region22: #{dc_generator_forward.7} parent=15 // pred_check_branch
        %115 = sbr.rel (%p113) target = $region24
      $region23: #{dc_generator_forward.7} parent=15 // pred_region
        %p116 = scmp.lt.s32.totalorder %s8, 3
        %s117 = scalar_select %p116, %s8, 3
        %s118 = smul.addr %s117, 8
        %s119 = smul.addr %s118, 4
        %s120 = scalar_lea.vmem %s1, %s119
      $region24: #{dc_generator_forward.7} parent=15 // pred_fallthru
        _
    $region16: #{dc_generator_forward.7} parent=5 // pred_fallthru
      _
    %p121 = scmp.le.s32.totalorder 1, %s8
    %p122 = scmp.lt.s32.totalorder %s8, 5
    %p123 = pnand %p121, %p122
    %p124 = pneg %p123
    // Predicated region
    $region25: #{dc_generator_forward.7} parent=5 // pred_check
      _
    $region26: #{dc_generator_forward.7} parent=5 // pred_check_branch
      %126 = sbr.rel (%p123) target = $region28
    $region27: #{dc_generator_forward.7} parent=5 // pred_region
      %s127 = ssub.s32 %s8, 1
      %p128 = scmp.lt.s32.totalorder %s13, 3
      %s129 = scalar_select %p128, %s13, 3
      %s130 = smul.addr %s129, 64
      %s131 = smul.addr %s130, 4
      %s132 = scalar_lea.vmem %s0, %s131
      %p133 = pneg %p34
      %p134 = pneg %p31
      %p135 = scmp.lt.s32.totalorder %s13, 3
      %s136 = scalar_select %p135, %s13, 3
      %s137 = smul.addr %s136, 8
      %s138 = smul.addr %s137, 4
      %s139 = scalar_lea.vmem %s1, %s138
      %p140 = pneg %p60
      %p141 = pneg %p57
      %p142 = pneg %p86
      %p143 = pneg %p83
      %p144 = scmp.lt.s32.totalorder %s13, 3
      %s145 = scalar_select %p144, %s13, 3
      %s146 = smul.addr %s145, 64
      %s147 = smul.addr %s146, 8
      %s148 = scalar_lea.vmem %s2, %s147
      %p149 = scmp.lt.s32.totalorder %s13, 3
      %s150 = scalar_select %p149, %s13, 3
      %s151 = smul.addr %s150, 64
      %s152 = smul.addr %s151, 4
      %s153 = scalar_lea.vmem %s0, %s152
      %p154 = scmp.lt.s32.totalorder %s13, 3
      %s155 = scalar_select %p154, %s13, 3
      %s156 = smul.addr %s155, 8
      %s157 = smul.addr %s156, 4
      %s158 = scalar_lea.vmem %s1, %s157
      %p159 = scmp.lt.s32.totalorder %s13, 3
      %s160 = scalar_select %p159, %s13, 3
      %s161 = smul.addr %s160, 64
      %s162 = smul.addr %s161, 8
      %s163 = scalar_lea.vmem %s2, %s162
      %v165 = vld [vmem:[%s153] sm:$0xf]
      %v166 = vld [vmem:[%s153 + $0x4] sm:$0xf]
      %v167 = vld [vmem:[%s153 + $0x8] sm:$0xf]
      %v168 = vld [vmem:[%s153 + $0xc] sm:$0xf]
      %v169 = vld [vmem:[%s153 + $0x10] sm:$0xf]
      %v170 = vld [vmem:[%s153 + $0x14] sm:$0xf]
      %v171 = vld [vmem:[%s153 + $0x18] sm:$0xf]
      %v172 = vld [vmem:[%s153 + $0x1c] sm:$0xf]
      %v173 = vld [vmem:[%s153 + $0x20] sm:$0xf]
      %v174 = vld [vmem:[%s153 + $0x24] sm:$0xf]
      %v175 = vld [vmem:[%s153 + $0x28] sm:$0xf]
      %v176 = vld [vmem:[%s153 + $0x2c] sm:$0xf]
      %v177 = vld [vmem:[%s153 + $0x30] sm:$0xf]
      %v178 = vld [vmem:[%s153 + $0x34] sm:$0xf]
      %v179 = vld [vmem:[%s153 + $0x38] sm:$0xf]
      %v180 = vld [vmem:[%s153 + $0x3c] sm:$0xf]
      %v181 = vld [vmem:[%s153 + $0x40] sm:$0xf]
      %v182 = vld [vmem:[%s153 + $0x44] sm:$0xf]
      %v183 = vld [vmem:[%s153 + $0x48] sm:$0xf]
      %v184 = vld [vmem:[%s153 + $0x4c] sm:$0xf]
      %v185 = vld [vmem:[%s153 + $0x50] sm:$0xf]
      %v186 = vld [vmem:[%s153 + $0x54] sm:$0xf]
      %v187 = vld [vmem:[%s153 + $0x58] sm:$0xf]
      %v188 = vld [vmem:[%s153 + $0x5c] sm:$0xf]
      %v189 = vld [vmem:[%s153 + $0x60] sm:$0xf]
      %v190 = vld [vmem:[%s153 + $0x64] sm:$0xf]
      %v191 = vld [vmem:[%s153 + $0x68] sm:$0xf]
      %v192 = vld [vmem:[%s153 + $0x6c] sm:$0xf]
      %v193 = vld [vmem:[%s153 + $0x70] sm:$0xf]
      %v194 = vld [vmem:[%s153 + $0x74] sm:$0xf]
      %v195 = vld [vmem:[%s153 + $0x78] sm:$0xf]
      %v196 = vld [vmem:[%s153 + $0x7c] sm:$0xf]
      %v197 = vld [vmem:[%s153 + $0x80] sm:$0xf]
      %v198 = vld [vmem:[%s153 + $0x84] sm:$0xf]
      %v199 = vld [vmem:[%s153 + $0x88] sm:$0xf]
      %v200 = vld [vmem:[%s153 + $0x8c] sm:$0xf]
      %v201 = vld [vmem:[%s153 + $0x90] sm:$0xf]
      %v202 = vld [vmem:[%s153 + $0x94] sm:$0xf]
      %v203 = vld [vmem:[%s153 + $0x98] sm:$0xf]
      %v204 = vld [vmem:[%s153 + $0x9c] sm:$0xf]
      %v205 = vld [vmem:[%s153 + $0xa0] sm:$0xf]
      %v206 = vld [vmem:[%s153 + $0xa4] sm:$0xf]
      %v207 = vld [vmem:[%s153 + $0xa8] sm:$0xf]
      %v208 = vld [vmem:[%s153 + $0xac] sm:$0xf]
      %v209 = vld [vmem:[%s153 + $0xb0] sm:$0xf]
      %v210 = vld [vmem:[%s153 + $0xb4] sm:$0xf]
      %v211 = vld [vmem:[%s153 + $0xb8] sm:$0xf]
      %v212 = vld [vmem:[%s153 + $0xbc] sm:$0xf]
      %v213 = vld [vmem:[%s153 + $0xc0] sm:$0xf]
      %v214 = vld [vmem:[%s153 + $0xc4] sm:$0xf]
      %v215 = vld [vmem:[%s153 + $0xc8] sm:$0xf]
      %v216 = vld [vmem:[%s153 + $0xcc] sm:$0xf]
      %v217 = vld [vmem:[%s153 + $0xd0] sm:$0xf]
      %v218 = vld [vmem:[%s153 + $0xd4] sm:$0xf]
      %v219 = vld [vmem:[%s153 + $0xd8] sm:$0xf]
      %v220 = vld [vmem:[%s153 + $0xdc] sm:$0xf]
      %v221 = vld [vmem:[%s153 + $0xe0] sm:$0xf]
      %v222 = vld [vmem:[%s153 + $0xe4] sm:$0xf]
      %v223 = vld [vmem:[%s153 + $0xe8] sm:$0xf]
      %v224 = vld [vmem:[%s153 + $0xec] sm:$0xf]
      %v225 = vld [vmem:[%s153 + $0xf0] sm:$0xf]
      %v226 = vld [vmem:[%s153 + $0xf4] sm:$0xf]
      %v227 = vld [vmem:[%s153 + $0xf8] sm:$0xf]
      %v228 = vld [vmem:[%s153 + $0xfc] sm:$0xf]
      %v229 = vld [vmem:[%s158] sm:$0xf]
      %v230 = vld [vmem:[%s158 + $0x4] sm:$0xf]
      %v231 = vld [vmem:[%s158 + $0x8] sm:$0xf]
      %v232 = vld [vmem:[%s158 + $0xc] sm:$0xf]
      %v233 = vld [vmem:[%s158 + $0x10] sm:$0xf]
      %v234 = vld [vmem:[%s158 + $0x14] sm:$0xf]
      %v235 = vld [vmem:[%s158 + $0x18] sm:$0xf]
      %v236 = vld [vmem:[%s158 + $0x1c] sm:$0xf]
      %v301 = vunpack.c.l.b16 %v165
      %v302 = vunpack.c.l.b16 %v166
      %v303 = vunpack.c.l.b16 %v167
      %v304 = vunpack.c.l.b16 %v168
      %v305 = vunpack.c.l.b16 %v169
      %v306 = vunpack.c.l.b16 %v170
      %v307 = vunpack.c.l.b16 %v171
      %v308 = vunpack.c.l.b16 %v172
      %v309 = vunpack.c.l.b16 %v173
      %v310 = vunpack.c.l.b16 %v174
      %v311 = vunpack.c.l.b16 %v175
      %v312 = vunpack.c.l.b16 %v176
      %v313 = vunpack.c.l.b16 %v177
      %v314 = vunpack.c.l.b16 %v178
      %v315 = vunpack.c.l.b16 %v179
      %v316 = vunpack.c.l.b16 %v180
      %v317 = vunpack.c.l.b16 %v181
      %v318 = vunpack.c.l.b16 %v182
      %v319 = vunpack.c.l.b16 %v183
      %v320 = vunpack.c.l.b16 %v184
      %v321 = vunpack.c.l.b16 %v185
      %v322 = vunpack.c.l.b16 %v186
      %v323 = vunpack.c.l.b16 %v187
      %v324 = vunpack.c.l.b16 %v188
      %v325 = vunpack.c.l.b16 %v189
      %v326 = vunpack.c.l.b16 %v190
      %v327 = vunpack.c.l.b16 %v191
      %v328 = vunpack.c.l.b16 %v192
      %v329 = vunpack.c.l.b16 %v193
      %v330 = vunpack.c.l.b16 %v194
      %v331 = vunpack.c.l.b16 %v195
      %v332 = vunpack.c.l.b16 %v196
      %v333 = vunpack.c.l.b16 %v197
      %v334 = vunpack.c.l.b16 %v198
      %v335 = vunpack.c.l.b16 %v199
      %v336 = vunpack.c.l.b16 %v200
      %v337 = vunpack.c.l.b16 %v201
      %v338 = vunpack.c.l.b16 %v202
      %v339 = vunpack.c.l.b16 %v203
      %v340 = vunpack.c.l.b16 %v204
      %v341 = vunpack.c.l.b16 %v205
      %v342 = vunpack.c.l.b16 %v206
      %v343 = vunpack.c.l.b16 %v207
      %v344 = vunpack.c.l.b16 %v208
      %v345 = vunpack.c.l.b16 %v209
      %v346 = vunpack.c.l.b16 %v210
      %v347 = vunpack.c.l.b16 %v211
      %v348 = vunpack.c.l.b16 %v212
      %v349 = vunpack.c.l.b16 %v213
      %v350 = vunpack.c.l.b16 %v214
      %v351 = vunpack.c.l.b16 %v215
      %v352 = vunpack.c.l.b16 %v216
      %v353 = vunpack.c.l.b16 %v217
      %v354 = vunpack.c.l.b16 %v218
      %v355 = vunpack.c.l.b16 %v219
      %v356 = vunpack.c.l.b16 %v220
      %v357 = vunpack.c.l.b16 %v221
      %v358 = vunpack.c.l.b16 %v222
      %v359 = vunpack.c.l.b16 %v223
      %v360 = vunpack.c.l.b16 %v224
      %v361 = vunpack.c.l.b16 %v225
      %v362 = vunpack.c.l.b16 %v226
      %v363 = vunpack.c.l.b16 %v227
      %v364 = vunpack.c.l.b16 %v228
      %v365 = vpack.c.b16 %v302, %v301
      %v366 = vpack.c.b16 %v304, %v303
      %v367 = vpack.c.b16 %v306, %v305
      %v368 = vpack.c.b16 %v308, %v307
      %v369 = vpack.c.b16 %v310, %v309
      %v370 = vpack.c.b16 %v312, %v311
      %v371 = vpack.c.b16 %v314, %v313
      %v372 = vpack.c.b16 %v316, %v315
      %v373 = vpack.c.b16 %v318, %v317
      %v374 = vpack.c.b16 %v320, %v319
      %v375 = vpack.c.b16 %v322, %v321
      %v376 = vpack.c.b16 %v324, %v323
      %v377 = vpack.c.b16 %v326, %v325
      %v378 = vpack.c.b16 %v328, %v327
      %v379 = vpack.c.b16 %v330, %v329
      %v380 = vpack.c.b16 %v332, %v331
      %v381 = vpack.c.b16 %v334, %v333
      %v382 = vpack.c.b16 %v336, %v335
      %v383 = vpack.c.b16 %v338, %v337
      %v384 = vpack.c.b16 %v340, %v339
      %v385 = vpack.c.b16 %v342, %v341
      %v386 = vpack.c.b16 %v344, %v343
      %v387 = vpack.c.b16 %v346, %v345
      %v388 = vpack.c.b16 %v348, %v347
      %v389 = vpack.c.b16 %v350, %v349
      %v390 = vpack.c.b16 %v352, %v351
      %v391 = vpack.c.b16 %v354, %v353
      %v392 = vpack.c.b16 %v356, %v355
      %v393 = vpack.c.b16 %v358, %v357
      %v394 = vpack.c.b16 %v360, %v359
      %v395 = vpack.c.b16 %v362, %v361
      %v396 = vpack.c.b16 %v364, %v363
      %v405 = vunpack.c.l.b16 %v229
      %v406 = vunpack.c.l.b16 %v230
      %v407 = vunpack.c.l.b16 %v231
      %v408 = vunpack.c.l.b16 %v232
      %v409 = vunpack.c.l.b16 %v233
      %v410 = vunpack.c.l.b16 %v234
      %v411 = vunpack.c.l.b16 %v235
      %v412 = vunpack.c.l.b16 %v236
      %v413 = vpack.c.b16 %v406, %v405
      %v414 = vpack.c.b16 %v408, %v407
      %v415 = vpack.c.b16 %v410, %v409
      %v416 = vpack.c.b16 %v412, %v411
      %vm421 = vcmask 523264
      %v423 = vsel %vm421, %v365, 0
      %v426 = vsel %vm421, %v366, 0
      %v429 = vsel %vm421, %v367, 0
      %v432 = vsel %vm421, %v368, 0
      %v435 = vsel %vm421, %v369, 0
      %v438 = vsel %vm421, %v370, 0
      %v441 = vsel %vm421, %v371, 0
      %v444 = vsel %vm421, %v372, 0
      %v447 = vsel %vm421, %v373, 0
      %v450 = vsel %vm421, %v374, 0
      %v453 = vsel %vm421, %v375, 0
      %v456 = vsel %vm421, %v376, 0
      %v459 = vsel %vm421, %v377, 0
      %v462 = vsel %vm421, %v378, 0
      %v465 = vsel %vm421, %v379, 0
      %v468 = vsel %vm421, %v380, 0
      %v471 = vsel %vm421, %v381, 0
      %v474 = vsel %vm421, %v382, 0
      %v477 = vsel %vm421, %v383, 0
      %v480 = vsel %vm421, %v384, 0
      %v483 = vsel %vm421, %v385, 0
      %v486 = vsel %vm421, %v386, 0
      %v489 = vsel %vm421, %v387, 0
      %v492 = vsel %vm421, %v388, 0
      %v495 = vsel %vm421, %v389, 0
      %v498 = vsel %vm421, %v390, 0
      %v501 = vsel %vm421, %v391, 0
      %v504 = vsel %vm421, %v392, 0
      %v507 = vsel %vm421, %v393, 0
      %v510 = vsel %vm421, %v394, 0
      %v513 = vsel %vm421, %v395, 0
      %v516 = vsel %vm421, %v396, 0
      %518 = vmatpush.bf16.msra.mxu0 0
      %519 = vmatpush.bf16.msra.mxu0 0
      %520 = vmatpush.bf16.msra.mxu0 0
      %521 = vmatpush.bf16.msra.mxu0 0
      %522 = vmatpush.bf16.msra.mxu0 %v416
      %523 = vmatpush.bf16.msra.mxu0 %v415
      %524 = vmatpush.bf16.msra.mxu0 %v414
      %525 = vmatpush.bf16.msra.mxu0 %v413
      %526 = vmatmul.bf16.gmra.mxu0 %v423
      %v527 = vpop.f32.mrf.mxu0
      %v528 = vadd.f32 0.0, %v527
      %v529 = vpop.f32.mrf.mxu0
      %v530 = vadd.f32 0.0, %v529
      %531 = vmatmul.bf16.gmra.mxu0 %v426
      %v532 = vpop.f32.mrf.mxu0
      %v533 = vadd.f32 0.0, %v532
      %v534 = vpop.f32.mrf.mxu0
      %v535 = vadd.f32 0.0, %v534
      %536 = vmatmul.bf16.gmra.mxu0 %v429
      %v537 = vpop.f32.mrf.mxu0
      %v538 = vadd.f32 0.0, %v537
      %v539 = vpop.f32.mrf.mxu0
      %v540 = vadd.f32 0.0, %v539
      %541 = vmatmul.bf16.gmra.mxu0 %v432
      %v542 = vpop.f32.mrf.mxu0
      %v543 = vadd.f32 0.0, %v542
      %v544 = vpop.f32.mrf.mxu0
      %v545 = vadd.f32 0.0, %v544
      %546 = vmatmul.bf16.gmra.mxu0 %v435
      %v547 = vpop.f32.mrf.mxu0
      %v548 = vadd.f32 0.0, %v547
      %v549 = vpop.f32.mrf.mxu0
      %v550 = vadd.f32 0.0, %v549
      %551 = vmatmul.bf16.gmra.mxu0 %v438
      %v552 = vpop.f32.mrf.mxu0
      %v553 = vadd.f32 0.0, %v552
      %v554 = vpop.f32.mrf.mxu0
      %v555 = vadd.f32 0.0, %v554
      %556 = vmatmul.bf16.gmra.mxu0 %v441
      %v557 = vpop.f32.mrf.mxu0
      %v558 = vadd.f32 0.0, %v557
      %v559 = vpop.f32.mrf.mxu0
      %v560 = vadd.f32 0.0, %v559
      %561 = vmatmul.bf16.gmra.mxu0 %v444
      %v562 = vpop.f32.mrf.mxu0
      %v563 = vadd.f32 0.0, %v562
      %v564 = vpop.f32.mrf.mxu0
      %v565 = vadd.f32 0.0, %v564
      %566 = vmatmul.bf16.gmra.mxu0 %v447
      %v567 = vpop.f32.mrf.mxu0
      %v568 = vadd.f32 0.0, %v567
      %v569 = vpop.f32.mrf.mxu0
      %v570 = vadd.f32 0.0, %v569
      %571 = vmatmul.bf16.gmra.mxu0 %v450
      %v572 = vpop.f32.mrf.mxu0
      %v573 = vadd.f32 0.0, %v572
      %v574 = vpop.f32.mrf.mxu0
      %v575 = vadd.f32 0.0, %v574
      %576 = vmatmul.bf16.gmra.mxu0 %v453
      %v577 = vpop.f32.mrf.mxu0
      %v578 = vadd.f32 0.0, %v577
      %v579 = vpop.f32.mrf.mxu0
      %v580 = vadd.f32 0.0, %v579
      %581 = vmatmul.bf16.gmra.mxu0 %v456
      %v582 = vpop.f32.mrf.mxu0
      %v583 = vadd.f32 0.0, %v582
      %v584 = vpop.f32.mrf.mxu0
      %v585 = vadd.f32 0.0, %v584
      %586 = vmatmul.bf16.gmra.mxu0 %v459
      %v587 = vpop.f32.mrf.mxu0
      %v588 = vadd.f32 0.0, %v587
      %v589 = vpop.f32.mrf.mxu0
      %v590 = vadd.f32 0.0, %v589
      %591 = vmatmul.bf16.gmra.mxu0 %v462
      %v592 = vpop.f32.mrf.mxu0
      %v593 = vadd.f32 0.0, %v592
      %v594 = vpop.f32.mrf.mxu0
      %v595 = vadd.f32 0.0, %v594
      %596 = vmatmul.bf16.gmra.mxu0 %v465
      %v597 = vpop.f32.mrf.mxu0
      %v598 = vadd.f32 0.0, %v597
      %v599 = vpop.f32.mrf.mxu0
      %v600 = vadd.f32 0.0, %v599
      %601 = vmatmul.bf16.gmra.mxu0 %v468
      %v602 = vpop.f32.mrf.mxu0
      %v603 = vadd.f32 0.0, %v602
      %v604 = vpop.f32.mrf.mxu0
      %v605 = vadd.f32 0.0, %v604
      %606 = vmatmul.bf16.gmra.mxu0 %v471
      %v607 = vpop.f32.mrf.mxu0
      %v608 = vadd.f32 0.0, %v607
      %v609 = vpop.f32.mrf.mxu0
      %v610 = vadd.f32 0.0, %v609
      %611 = vmatmul.bf16.gmra.mxu0 %v474
      %v612 = vpop.f32.mrf.mxu0
      %v613 = vadd.f32 0.0, %v612
      %v614 = vpop.f32.mrf.mxu0
      %v615 = vadd.f32 0.0, %v614
      %616 = vmatmul.bf16.gmra.mxu0 %v477
      %v617 = vpop.f32.mrf.mxu0
      %v618 = vadd.f32 0.0, %v617
      %v619 = vpop.f32.mrf.mxu0
      %v620 = vadd.f32 0.0, %v619
      %621 = vmatmul.bf16.gmra.mxu0 %v480
      %v622 = vpop.f32.mrf.mxu0
      %v623 = vadd.f32 0.0, %v622
      %v624 = vpop.f32.mrf.mxu0
      %v625 = vadd.f32 0.0, %v624
      %626 = vmatmul.bf16.gmra.mxu0 %v483
      %v627 = vpop.f32.mrf.mxu0
      %v628 = vadd.f32 0.0, %v627
      %v629 = vpop.f32.mrf.mxu0
      %v630 = vadd.f32 0.0, %v629
      %631 = vmatmul.bf16.gmra.mxu0 %v486
      %v632 = vpop.f32.mrf.mxu0
      %v633 = vadd.f32 0.0, %v632
      %v634 = vpop.f32.mrf.mxu0
      %v635 = vadd.f32 0.0, %v634
      %636 = vmatmul.bf16.gmra.mxu0 %v489
      %v637 = vpop.f32.mrf.mxu0
      %v638 = vadd.f32 0.0, %v637
      %v639 = vpop.f32.mrf.mxu0
      %v640 = vadd.f32 0.0, %v639
      %641 = vmatmul.bf16.gmra.mxu0 %v492
      %v642 = vpop.f32.mrf.mxu0
      %v643 = vadd.f32 0.0, %v642
      %v644 = vpop.f32.mrf.mxu0
      %v645 = vadd.f32 0.0, %v644
      %646 = vmatmul.bf16.gmra.mxu0 %v495
      %v647 = vpop.f32.mrf.mxu0
      %v648 = vadd.f32 0.0, %v647
      %v649 = vpop.f32.mrf.mxu0
      %v650 = vadd.f32 0.0, %v649
      %651 = vmatmul.bf16.gmra.mxu0 %v498
      %v652 = vpop.f32.mrf.mxu0
      %v653 = vadd.f32 0.0, %v652
      %v654 = vpop.f32.mrf.mxu0
      %v655 = vadd.f32 0.0, %v654
      %656 = vmatmul.bf16.gmra.mxu0 %v501
      %v657 = vpop.f32.mrf.mxu0
      %v658 = vadd.f32 0.0, %v657
      %v659 = vpop.f32.mrf.mxu0
      %v660 = vadd.f32 0.0, %v659
      %661 = vmatmul.bf16.gmra.mxu0 %v504
      %v662 = vpop.f32.mrf.mxu0
      %v663 = vadd.f32 0.0, %v662
      %v664 = vpop.f32.mrf.mxu0
      %v665 = vadd.f32 0.0, %v664
      %666 = vmatmul.bf16.gmra.mxu0 %v507
      %v667 = vpop.f32.mrf.mxu0
      %v668 = vadd.f32 0.0, %v667
      %v669 = vpop.f32.mrf.mxu0
      %v670 = vadd.f32 0.0, %v669
      %671 = vmatmul.bf16.gmra.mxu0 %v510
      %v672 = vpop.f32.mrf.mxu0
      %v673 = vadd.f32 0.0, %v672
      %v674 = vpop.f32.mrf.mxu0
      %v675 = vadd.f32 0.0, %v674
      %676 = vmatmul.bf16.gmra.mxu0 %v513
      %v677 = vpop.f32.mrf.mxu0
      %v678 = vadd.f32 0.0, %v677
      %v679 = vpop.f32.mrf.mxu0
      %v680 = vadd.f32 0.0, %v679
      %681 = vmatmul.bf16.gmra.mxu0 %v516
      %v682 = vpop.f32.mrf.mxu0
      %v683 = vadd.f32 0.0, %v682
      %v684 = vpop.f32.mrf.mxu0
      %v685 = vadd.f32 0.0, %v684
      %686 = vdwg.mxu0
      %v687 = vtanh.pop %v528
      %v688 = vtanh.pop %v530
      %v689 = vtanh.pop %v533
      %v690 = vtanh.pop %v535
      %v691 = vtanh.pop %v538
      %v692 = vtanh.pop %v540
      %v693 = vtanh.pop %v543
      %v694 = vtanh.pop %v545
      %v695 = vtanh.pop %v548
      %v696 = vtanh.pop %v550
      %v697 = vtanh.pop %v553
      %v698 = vtanh.pop %v555
      %v699 = vtanh.pop %v558
      %v700 = vtanh.pop %v560
      %v701 = vtanh.pop %v563
      %v702 = vtanh.pop %v565
      %v703 = vtanh.pop %v568
      %v704 = vtanh.pop %v570
      %v705 = vtanh.pop %v573
      %v706 = vtanh.pop %v575
      %v707 = vtanh.pop %v578
      %v708 = vtanh.pop %v580
      %v709 = vtanh.pop %v583
      %v710 = vtanh.pop %v585
      %v711 = vtanh.pop %v588
      %v712 = vtanh.pop %v590
      %v713 = vtanh.pop %v593
      %v714 = vtanh.pop %v595
      %v715 = vtanh.pop %v598
      %v716 = vtanh.pop %v600
      %v717 = vtanh.pop %v603
      %v718 = vtanh.pop %v605
      %v719 = vtanh.pop %v608
      %v720 = vtanh.pop %v610
      %v721 = vtanh.pop %v613
      %v722 = vtanh.pop %v615
      %v723 = vtanh.pop %v618
      %v724 = vtanh.pop %v620
      %v725 = vtanh.pop %v623
      %v726 = vtanh.pop %v625
      %v727 = vtanh.pop %v628
      %v728 = vtanh.pop %v630
      %v729 = vtanh.pop %v633
      %v730 = vtanh.pop %v635
      %v731 = vtanh.pop %v638
      %v732 = vtanh.pop %v640
      %v733 = vtanh.pop %v643
      %v734 = vtanh.pop %v645
      %v735 = vtanh.pop %v648
      %v736 = vtanh.pop %v650
      %v737 = vtanh.pop %v653
      %v738 = vtanh.pop %v655
      %v739 = vtanh.pop %v658
      %v740 = vtanh.pop %v660
      %v741 = vtanh.pop %v663
      %v742 = vtanh.pop %v665
      %v743 = vtanh.pop %v668
      %v744 = vtanh.pop %v670
      %v745 = vtanh.pop %v673
      %v746 = vtanh.pop %v675
      %v747 = vtanh.pop %v678
      %v748 = vtanh.pop %v680
      %v749 = vtanh.pop %v683
      %v750 = vtanh.pop %v685
      %751 = vst [vmem:[%s163] sm:$0xff] %v687
      %752 = vst [vmem:[%s163 + $0x8] sm:$0xff] %v688
      %753 = vst [vmem:[%s163 + $0x10] sm:$0xff] %v689
      %754 = vst [vmem:[%s163 + $0x18] sm:$0xff] %v690
      %755 = vst [vmem:[%s163 + $0x20] sm:$0xff] %v691
      %756 = vst [vmem:[%s163 + $0x28] sm:$0xff] %v692
      %757 = vst [vmem:[%s163 + $0x30] sm:$0xff] %v693
      %758 = vst [vmem:[%s163 + $0x38] sm:$0xff] %v694
      %759 = vst [vmem:[%s163 + $0x40] sm:$0xff] %v695
      %760 = vst [vmem:[%s163 + $0x48] sm:$0xff] %v696
      %761 = vst [vmem:[%s163 + $0x50] sm:$0xff] %v697
      %762 = vst [vmem:[%s163 + $0x58] sm:$0xff] %v698
      %763 = vst [vmem:[%s163 + $0x60] sm:$0xff] %v699
      %764 = vst [vmem:[%s163 + $0x68] sm:$0xff] %v700
      %765 = vst [vmem:[%s163 + $0x70] sm:$0xff] %v701
      %766 = vst [vmem:[%s163 + $0x78] sm:$0xff] %v702
      %767 = vst [vmem:[%s163 + $0x80] sm:$0xff] %v703
      %768 = vst [vmem:[%s163 + $0x88] sm:$0xff] %v704
      %769 = vst [vmem:[%s163 + $0x90] sm:$0xff] %v705
      %770 = vst [vmem:[%s163 + $0x98] sm:$0xff] %v706
      %771 = vst [vmem:[%s163 + $0xa0] sm:$0xff] %v707
      %772 = vst [vmem:[%s163 + $0xa8] sm:$0xff] %v708
      %773 = vst [vmem:[%s163 + $0xb0] sm:$0xff] %v709
      %774 = vst [vmem:[%s163 + $0xb8] sm:$0xff] %v710
      %775 = vst [vmem:[%s163 + $0xc0] sm:$0xff] %v711
      %776 = vst [vmem:[%s163 + $0xc8] sm:$0xff] %v712
      %777 = vst [vmem:[%s163 + $0xd0] sm:$0xff] %v713
      %778 = vst [vmem:[%s163 + $0xd8] sm:$0xff] %v714
      %779 = vst [vmem:[%s163 + $0xe0] sm:$0xff] %v715
      %780 = vst [vmem:[%s163 + $0xe8] sm:$0xff] %v716
      %781 = vst [vmem:[%s163 + $0xf0] sm:$0xff] %v717
      %782 = vst [vmem:[%s163 + $0xf8] sm:$0xff] %v718
      %783 = vst [vmem:[%s163 + $0x100] sm:$0xff] %v719
      %784 = vst [vmem:[%s163 + $0x108] sm:$0xff] %v720
      %785 = vst [vmem:[%s163 + $0x110] sm:$0xff] %v721
      %786 = vst [vmem:[%s163 + $0x118] sm:$0xff] %v722
      %787 = vst [vmem:[%s163 + $0x120] sm:$0xff] %v723
      %788 = vst [vmem:[%s163 + $0x128] sm:$0xff] %v724
      %789 = vst [vmem:[%s163 + $0x130] sm:$0xff] %v725
      %790 = vst [vmem:[%s163 + $0x138] sm:$0xff] %v726
      %791 = vst [vmem:[%s163 + $0x140] sm:$0xff] %v727
      %792 = vst [vmem:[%s163 + $0x148] sm:$0xff] %v728
      %793 = vst [vmem:[%s163 + $0x150] sm:$0xff] %v729
      %794 = vst [vmem:[%s163 + $0x158] sm:$0xff] %v730
      %795 = vst [vmem:[%s163 + $0x160] sm:$0xff] %v731
      %796 = vst [vmem:[%s163 + $0x168] sm:$0xff] %v732
      %797 = vst [vmem:[%s163 + $0x170] sm:$0xff] %v733
      %798 = vst [vmem:[%s163 + $0x178] sm:$0xff] %v734
      %799 = vst [vmem:[%s163 + $0x180] sm:$0xff] %v735
      %800 = vst [vmem:[%s163 + $0x188] sm:$0xff] %v736
      %801 = vst [vmem:[%s163 + $0x190] sm:$0xff] %v737
      %802 = vst [vmem:[%s163 + $0x198] sm:$0xff] %v738
      %803 = vst [vmem:[%s163 + $0x1a0] sm:$0xff] %v739
      %804 = vst [vmem:[%s163 + $0x1a8] sm:$0xff] %v740
      %805 = vst [vmem:[%s163 + $0x1b0] sm:$0xff] %v741
      %806 = vst [vmem:[%s163 + $0x1b8] sm:$0xff] %v742
      %807 = vst [vmem:[%s163 + $0x1c0] sm:$0xff] %v743
      %808 = vst [vmem:[%s163 + $0x1c8] sm:$0xff] %v744
      %809 = vst [vmem:[%s163 + $0x1d0] sm:$0xff] %v745
      %810 = vst [vmem:[%s163 + $0x1d8] sm:$0xff] %v746
      %811 = vst [vmem:[%s163 + $0x1e0] sm:$0xff] %v747
      %812 = vst [vmem:[%s163 + $0x1e8] sm:$0xff] %v748
      %813 = vst [vmem:[%s163 + $0x1f0] sm:$0xff] %v749
      %814 = vst [vmem:[%s163 + $0x1f8] sm:$0xff] %v750
      %p815 = scmp.lt.s32.totalorder %s13, 3
      %s816 = scalar_select %p815, %s13, 3
      %s817 = smul.addr %s816, 64
      %s818 = smul.addr %s817, 8
      %s819 = scalar_lea.vmem %s2, %s818
      // Predicated region
      $region29: #{dc_generator_forward.7} parent=27 // pred_check
        %p820 = pneg %p83
      $region30: #{dc_generator_forward.7} parent=27 // pred_check_branch
        %822 = sbr.rel (%p820) target = $region32
      $region31: #{dc_generator_forward.7} parent=27 // pred_region
        _
      $region32: #{dc_generator_forward.7} parent=27 // pred_fallthru
        _
    $region28: #{dc_generator_forward.7} parent=5 // pred_fallthru
      _
    %p823 = scmp.le.s32.totalorder 2, %s8
    // Predicated region
    $region33: #{dc_generator_forward.7} parent=5 // pred_check
      %p824 = pneg %p823
    $region34: #{dc_generator_forward.7} parent=5 // pred_check_branch
      %826 = sbr.rel (%p824) target = $region36
    $region35: #{dc_generator_forward.7} parent=5 // pred_region
      %s827 = ssub.s32 %s8, 2
      // Predicated region
      $region37: #{dc_generator_forward.7} parent=35 // pred_check
        %p828 = pneg %p89
      $region38: #{dc_generator_forward.7} parent=35 // pred_check_branch
        %830 = sbr.rel (%p828) target = $region40
      $region39: #{dc_generator_forward.7} parent=35 // pred_region
        %p831 = scmp.lt.s32.totalorder %s14, 3
        %s832 = scalar_select %p831, %s14, 3
        %s833 = smul.addr %s832, 64
        %s834 = smul.addr %s833, 8
        %s835 = scalar_lea.vmem %s2, %s834
      $region40: #{dc_generator_forward.7} parent=35 // pred_fallthru
        _
    $region36: #{dc_generator_forward.7} parent=5 // pred_fallthru
      _
  $region6: #{dc_generator_forward.7} parent=0 // loop_footer
    %s12 = sadd.s32 1, %s8
  $region7: #{dc_generator_forward.7} parent=0 // loop_footer_branch
    %7 = sbr.rel target = $region3
  $region8: #{dc_generator_forward.7} parent=0 // loop_exit
    _

</llo_original>
